<compile_context>
chip_gen: v7x
topology: tpu7x:2x2x1
jax: 0.10.0
libtpu: 0.0.40
codegen_flags: <defaults>
</compile_context>

<pallas_src>
import functools

import jax
import jax.numpy as jnp
from jax import lax
from jax.experimental import pallas as pl
from jax.experimental.pallas import tpu as pltpu


def _wm_transformer_rnn_kernel(
    # inputs
    src_ref,          # (TT, BN*S, E)  bf16   time-block of src, batch-major rows
    wm0_ref,          # (BN*W, E)      f32    initial working memory (this batch block)
    w_self_qkv_ref,   # (E, 3E)        bf16   [Wq*1/sqrt(E) | Wk | Wv]
    w_self_o_ref,     # (E, E)         bf16
    w_cross_q_ref,    # (E, E)         bf16   Wq*1/sqrt(E)
    w_cross_kv_ref,   # (E, 2E)        bf16   [Wk | Wv]
    w_cross_o_ref,    # (E, E)         bf16
    ffn_w1_ref,       # (E, F)         bf16
    ffn_b1_ref,       # (1, F)         f32
    ffn_w2_ref,       # (F, E)         bf16
    ffn_b2_ref,       # (1, E)         f32
    ln_g_ref,         # (3, 1, E)      f32
    ln_b_ref,         # (3, 1, E)      f32
    # outputs
    out_ref,          # (TT, BN, W*E) if pack_out else (TT, BN*W, E)   out_dtype
    # scratch
    wm_carry,         # (BN*W, E)      f32    recurrent state, persists across grid steps
    *,
    bn, n_wm, n_src, emb, tt_steps, unroll, pack_out,
):
    # Correctness of the recurrence relies on (a) the time axis being the innermost,
    # sequentially-iterated grid axis per batch block and (b) the carry being re-seeded
    # at time-block 0 for every batch block.
    @pl.when(pl.program_id(1) == 0)
    def _init():
        wm_carry[...] = wm0_ref[...]

    inv_e = 1.0 / float(emb)

    def mm(x, w):
        # bf16 operands, f32 accumulation on the MXU (astype is a no-op if already bf16).
        return jnp.dot(x.astype(jnp.bfloat16), w, preferred_element_type=jnp.float32)

    def layernorm(x, idx):
        # E[x^2] - E[x]^2 form: the two cross-lane reductions are independent, so the
        # XLUs can overlap them instead of serializing mean -> centered -> var.
        s1 = jnp.sum(x, axis=-1, keepdims=True)
        s2 = jnp.sum(x * x, axis=-1, keepdims=True)
        mu = s1 * inv_e
        var = jnp.maximum(s2 * inv_e - mu * mu, 0.0)
        return (x - mu) * lax.rsqrt(var + 1e-5) * ln_g_ref[idx] + ln_b_ref[idx]

    def sdpa(q3, k3, v3):
        # q3: (BN, W, E) bf16, k3/v3: (BN, L, E) bf16.  1/sqrt(E) already folded into Wq.
        s3 = jnp.einsum("bqe,bke->bqk", q3, k3, preferred_element_type=jnp.float32)
        s3 = s3 - jnp.max(s3, axis=-1, keepdims=True)
        p3 = jnp.exp(s3)
        p3 = p3 * pl.reciprocal(jnp.sum(p3, axis=-1, keepdims=True), approx=True)
        o3 = jnp.einsum("bqk,bke->bqe", p3.astype(jnp.bfloat16), v3,
                        preferred_element_type=jnp.float32)
        return o3.reshape(bn * n_wm, emb)

    def one_step(t, wm):
        src_t = src_ref[t]                                         # (BN*S, E) bf16
        # 1) working-memory self-attention (fused QKV projection) + residual + LN
        wm_b = wm.astype(jnp.bfloat16)
        qkv = mm(wm_b, w_self_qkv_ref[...])                        # (BN*W, 3E) f32
        q3 = qkv[:, :emb].reshape(bn, n_wm, emb).astype(jnp.bfloat16)
        k3 = qkv[:, emb:2 * emb].reshape(bn, n_wm, emb).astype(jnp.bfloat16)
        v3 = qkv[:, 2 * emb:].reshape(bn, n_wm, emb).astype(jnp.bfloat16)
        wm = layernorm(wm + mm(sdpa(q3, k3, v3), w_self_o_ref[...]), 0)
        # 2) cross-attention: wm queries attend to src[t] (fused KV) + residual + LN
        wm_b = wm.astype(jnp.bfloat16)
        q3 = mm(wm_b, w_cross_q_ref[...]).reshape(bn, n_wm, emb).astype(jnp.bfloat16)
        kv = mm(src_t, w_cross_kv_ref[...])                        # (BN*S, 2E) f32
        k3 = kv[:, :emb].reshape(bn, n_src, emb).astype(jnp.bfloat16)
        v3 = kv[:, emb:].reshape(bn, n_src, emb).astype(jnp.bfloat16)
        wm = layernorm(wm + mm(sdpa(q3, k3, v3), w_cross_o_ref[...]), 1)
        # 3) feed-forward + residual + LN
        h = jnp.maximum(mm(wm, ffn_w1_ref[...]) + ffn_b1_ref[...], 0.0)
        wm = layernorm(wm + (mm(h, ffn_w2_ref[...]) + ffn_b2_ref[...]), 2)
        # 4) store this timestep's working memory
        if pack_out:
            # Lane-dense (bn, W*E) out block: the output VMEM tile and its HBM writeback
            # DMA are fully dense.  The per-slot vreg->VMEM stores below remain E-lane
            # masked stores; switch to a single lane-concat store if profiling warrants.
            wm3 = wm.reshape(bn, n_wm, emb)
            for w in range(n_wm):
                out_ref[t, :, w * emb:(w + 1) * emb] = wm3[:, w, :].astype(out_ref.dtype)
        else:
            out_ref[t] = wm.astype(out_ref.dtype)
        return wm

    def body(i, wm):
        for j in range(unroll):          # manual x`unroll`: bounded live ranges + overlap
            wm = one_step(i * unroll + j, wm)
        return wm

    wm_carry[...] = lax.fori_loop(0, tt_steps // unroll, body, wm_carry[...])


def _tpu_vmem_bytes_and_cores():
    """Best-effort per-TensorCore VMEM bytes and TensorCores-per-chip query."""
    try:
        kind = jax.devices()[0].device_kind.lower()
    except Exception:
        kind = ""
    n_tc = 2 if "v7" in kind else 1          # v7x: 2 TCs/chip share the "parallel" axis
    vmem = None
    try:
        vmem = int(pltpu.get_tpu_info().vmem_capacity_bytes)
    except Exception:
        vmem = None
    if vmem is None:
        vmem = 64 * 2**20 if "v7" in kind else 128 * 2**20
    if "v7" in kind:
        vmem = min(vmem, 64 * 2**20)         # per-TC VMEM on v7x is 64 MiB
    return vmem, n_tc


def _prepare_params(params, emb):
    """Fold 1/sqrt(E) into Wq, fuse QKV / KV projection weights, cast MXU operands to bf16."""
    attn_w, ffn_w1, ffn_b1, ffn_w2, ffn_b2, ln_g, ln_b = params
    attn_w = attn_w.astype(jnp.float32)
    scale = 1.0 / float(emb) ** 0.5
    bf = lambda x: x.astype(jnp.bfloat16)
    w_self_qkv = bf(jnp.concatenate(
        [attn_w[0, 0] * scale, attn_w[0, 1], attn_w[0, 2]], axis=1))      # (E, 3E)
    w_self_o = bf(attn_w[0, 3])
    w_cross_q = bf(attn_w[1, 0] * scale)
    w_cross_kv = bf(jnp.concatenate([attn_w[1, 1], attn_w[1, 2]], axis=1))  # (E, 2E)
    w_cross_o = bf(attn_w[1, 3])
    return (
        w_self_qkv, w_self_o, w_cross_q, w_cross_kv, w_cross_o,
        bf(ffn_w1),
        ffn_b1.reshape(1, -1).astype(jnp.float32),
        bf(ffn_w2),
        ffn_b2.reshape(1, -1).astype(jnp.float32),
        ln_g.reshape(3, 1, -1).astype(jnp.float32),
        ln_b.reshape(3, 1, -1).astype(jnp.float32),
    )


def transformer_rnn_forward(src, initial_working_memory, params, *, batch_first=False,
                            time_block=None, batch_block=None, out_dtype=jnp.bfloat16):
    """Matches TransformerRNN.forward semantics (unmasked path).

    src: (T, S, N, E)  [or (N, T, S, E) if batch_first]
    initial_working_memory: (W, N, E)  [or (N, W, E) if batch_first]
    returns: (T, W, N, E)  [or (N, T, W, E) if batch_first], dtype = out_dtype
    """
    if batch_first:
        src = jnp.transpose(src, (1, 2, 0, 3))                                    # (T,S,N,E)
        initial_working_memory = jnp.transpose(initial_working_memory, (1, 0, 2))   # (W,N,E)

    T, S, N, E = src.shape
    W = initial_working_memory.shape[0]
    weights = _prepare_params(params, E)

    # --- device-derived budgets ----------------------------------------------
    vmem_bytes, n_tc = _tpu_vmem_bytes_and_cores()
    vmem_limit = int(min(100 * 2**20, (vmem_bytes * 3) // 4))   # v7x ~48 MiB, 128-MiB chips ~96 MiB

    # --- batch block: one block per TensorCore --------------------------------
    if batch_block is not None:
        bn = int(batch_block)
    elif n_tc > 1 and N % n_tc == 0:
        bn = N // n_tc                      # v7x: shard the "parallel" batch axis over TCs
    else:
        bn = N                              # v5e/v6e: keep the matmul M dim maximal
    if N % bn != 0:
        bn = N
    # bf16 sublane packing is 16: avoid sublane relayout of the attention operands.
    if bn != N and ((bn * W) % 16 != 0 or (bn * S) % 16 != 0):
        bn = N

    # --- lane-dense packed output layout when E is lane-sparse ----------------
    pack_out = (E % 128 != 0) and ((W * E) % 128 == 0)
    if pack_out and not (bn == N or bn % 8 == 0):
        bn = N                              # keep the packed out block tile-legal

    # --- time block: amortize grid-step overhead within the VMEM budget -------
    out_itemsize = jnp.dtype(out_dtype).itemsize
    if time_block is None:
        per_step = bn * S * E * 2 + bn * W * E * out_itemsize   # bf16 src + out per step
        tt = int(max(1, min(T, (vmem_limit // 4) // max(per_step, 1), 64)))
    else:
        tt = max(1, min(int(time_block), T))
    unroll = 2 if (tt % 2 == 0 and tt >= 2) else 1
    t_pad = int(pl.cdiv(T, tt)) * tt
    # NOTE: padded timesteps (t_pad > T) run with zero src and are sliced off below;
    # they advance the carry harmlessly but burn compute.

    # --- kernel layouts --------------------------------------------------------
    # src: (T_pad, N*S, E) bf16, batch-major rows; wm0: (N*W, E) f32.
    src_k = jnp.transpose(src, (0, 2, 1, 3)).reshape(T, N * S, E).astype(jnp.bfloat16)
    if t_pad != T:
        src_k = jnp.pad(src_k, ((0, t_pad - T), (0, 0), (0, 0)))
    wm0_k = jnp.transpose(initial_working_memory, (1, 0, 2)).reshape(N * W, E)
    wm0_k = wm0_k.astype(jnp.float32)

    kernel = functools.partial(
        _wm_transformer_rnn_kernel, bn=bn, n_wm=W, n_src=S, emb=E,
        tt_steps=tt, unroll=unroll, pack_out=pack_out)

    # grid-invariant params: whole-array VMEM residents (no pipeline double-buffering)
    vmem_resident = pl.BlockSpec(memory_space=pltpu.MemorySpace.VMEM)
    in_specs = [
        pl.BlockSpec((tt, bn * S, E), lambda nb, tb: (tb, nb, 0)),   # src (pipelined)
        pl.BlockSpec((bn * W, E), lambda nb, tb: (nb, 0)),           # wm0
    ] + [vmem_resident] * 11                                         # fused weights / LN params

    if pack_out:
        out_shape = jax.ShapeDtypeStruct((t_pad, N, W * E), out_dtype)
        out_spec = pl.BlockSpec((tt, bn, W * E), lambda nb, tb: (tb, nb, 0))
    else:
        out_shape = jax.ShapeDtypeStruct((t_pad, N * W, E), out_dtype)
        out_spec = pl.BlockSpec((tt, bn * W, E), lambda nb, tb: (tb, nb, 0))

    out = pl.pallas_call(
        kernel,
        out_shape=out_shape,
        # Time MUST stay the last (innermost, "arbitrary") grid axis for the carry.
        grid=(N // bn, t_pad // tt),
        in_specs=in_specs,
        out_specs=out_spec,
        scratch_shapes=[pltpu.VMEM((bn * W, E), jnp.float32)],
        compiler_params=pltpu.CompilerParams(
            dimension_semantics=("parallel", "arbitrary"),
            vmem_limit_bytes=vmem_limit,
        ),
    )(src_k, wm0_k, *weights)

    # Both layouts reshape to (T, N, W, E): unpacked rows are (n, w)-major,
    # packed rows are n with W*E lanes.
    out = out[:T].reshape(T, N, W, E).transpose(0, 2, 1, 3)          # (T, W, N, E)
    if batch_first:
        out = jnp.transpose(out, (2, 0, 1, 3))                       # (N, T, W, E)
    return out


def _reference_forward(src, wm0, params):
    """Pure-JAX reference with the same numerics policy (bf16 MXU operands, f32 math)."""
    T, S, N, E = src.shape
    attn_w, w1, b1, w2, b2, ln_g, ln_b = params
    attn_w = attn_w.astype(jnp.float32)
    scale = 1.0 / float(E) ** 0.5

    bf = lambda x: x.astype(jnp.bfloat16)

    def mm(x, w):
        return jnp.dot(bf(x), bf(w), preferred_element_type=jnp.float32)

    def ln(x, i):
        mu = x.mean(-1, keepdims=True)
        var = ((x - mu) ** 2).mean(-1, keepdims=True)
        return (x - mu) * lax.rsqrt(var + 1e-5) * ln_g[i] + ln_b[i]

    def attn(x, kv, li):
        q = mm(x, attn_w[li, 0] * scale)
        k = mm(kv, attn_w[li, 1])
        v = mm(kv, attn_w[li, 2])
        s = jnp.einsum("nqe,nke->nqk", bf(q), bf(k), preferred_element_type=jnp.float32)
        p = jax.nn.softmax(s, axis=-1)
        o = jnp.einsum("nqk,nke->nqe", bf(p), bf(v), preferred_element_type=jnp.float32)
        return mm(o, attn_w[li, 3])

    def step(wm, s_t):                             # wm: (N,W,E) f32, s_t: (S,N,E) f32
        s_t = jnp.transpose(s_t, (1, 0, 2))        # (N, S, E)
        wm = ln(wm + attn(wm, wm, 0), 0)
        wm = ln(wm + attn(wm, s_t, 1), 1)
        h = jnp.maximum(mm(wm, w1) + b1[0], 0.0)
        wm = ln(wm + (mm(h, w2) + b2[0]), 2)
        return wm, wm

    wm0_k = jnp.transpose(wm0, (1, 0, 2)).astype(jnp.float32)       # (N, W, E)
    _, outs = lax.scan(step, wm0_k, src.astype(jnp.float32))        # (T, N, W, E)
    return jnp.transpose(outs, (0, 2, 1, 3))                        # (T, W, N, E)


def _init_params(key, E, F):
    ks = jax.random.split(key, 6)
    attn_w = jax.random.normal(ks[0], (2, 4, E, E), jnp.float32) * (E ** -0.5)
    ffn_w1 = jax.random.normal(ks[1], (E, F), jnp.float32) * (E ** -0.5)
    ffn_b1 = jax.random.normal(ks[2], (1, F), jnp.float32) * 0.1
    ffn_w2 = jax.random.normal(ks[3], (F, E), jnp.float32) * (F ** -0.5)
    ffn_b2 = jax.random.normal(ks[4], (1, E), jnp.float32) * 0.1
    ln_g = jnp.ones((3, E), jnp.float32)
    ln_b = jax.random.normal(ks[5], (3, E), jnp.float32) * 0.1
    return (attn_w, ffn_w1, ffn_b1, ffn_w2, ffn_b2, ln_g, ln_b)


if __name__ == "__main__":
    # Small shapes: T=8 timesteps, S=16 src tokens, N=2 batch, W=8 wm slots, E=32, F=64.
    # W*E = 256 -> the lane-dense packed output layout is exercised.
    T, S, N, W, E, F = 8, 16, 2, 8, 32, 64
    key = jax.random.PRNGKey(0)
    k_src, k_wm, k_par = jax.random.split(key, 3)

    src = jax.random.normal(k_src, (T, S, N, E), jnp.float32)   # (T, S, N, E)
    wm0 = jax.random.normal(k_wm, (W, N, E), jnp.float32)       # (W, N, E)
    params = _init_params(k_par, E, F)

    # time_block=4 -> 2 grid steps along time (exercises the cross-grid-step VMEM carry)
    # and a fori_loop of 2 iterations x unroll 2 inside each grid step.
    out = transformer_rnn_forward(src, wm0, params, batch_first=False, time_block=4)
    out = jax.block_until_ready(out)
    assert out.shape == (T, W, N, E), out.shape

    ref = jax.block_until_ready(_reference_forward(src, wm0, params))
    out32 = out.astype(jnp.float32)
    max_err = float(jnp.max(jnp.abs(out32 - ref)))
    mean_err = float(jnp.mean(jnp.abs(out32 - ref)))
    # The f32 carry stays internal, so the only deltas vs. the reference are the bf16
    # rounding of the final output store (dominant, ~2^-9 relative), the EUP approx
    # reciprocal in softmax, and the LayerNorm variance formulation.
    assert max_err < 4e-2 and mean_err < 8e-3, (max_err, mean_err)

    print("KERNEL_OK")
</pallas_src>

<mosaic_0001>
module attributes {stable_mosaic.version = 11 : i64} {
  func.func @_wm_transformer_rnn_kernel(%arg0: i32, %arg1: i32, %arg2: memref<4x32x32xbf16, #tpu.memory_space<vmem>>, %arg3: memref<16x32xf32, #tpu.memory_space<vmem>>, %arg4: memref<32x96xbf16, #tpu.memory_space<vmem>>, %arg5: memref<32x32xbf16, #tpu.memory_space<vmem>>, %arg6: memref<32x32xbf16, #tpu.memory_space<vmem>>, %arg7: memref<32x64xbf16, #tpu.memory_space<vmem>>, %arg8: memref<32x32xbf16, #tpu.memory_space<vmem>>, %arg9: memref<32x64xbf16, #tpu.memory_space<vmem>>, %arg10: memref<1x64xf32, #tpu.memory_space<vmem>>, %arg11: memref<64x32xbf16, #tpu.memory_space<vmem>>, %arg12: memref<1x32xf32, #tpu.memory_space<vmem>>, %arg13: memref<3x1x32xf32, #tpu.memory_space<vmem>>, %arg14: memref<3x1x32xf32, #tpu.memory_space<vmem>>, %arg15: memref<4x2x256xbf16, #tpu.memory_space<vmem>>, %arg16: memref<16x32xf32, #tpu.memory_space<vmem>>) attributes {dimension_semantics = [#tpu.dimension_semantics<parallel>, #tpu.dimension_semantics<arbitrary>], iteration_bounds = array<i64: 1, 2>, scalar_prefetch = 0 : i64, scratch_operands = 1 : i64, tpu.core_type = #tpu.core_type<tc>, window_params = [{transform_indices = @transform_0, window_bounds = array<i64: 4, 32, 32>}, {transform_indices = @transform_1, window_bounds = array<i64: 16, 32>}, {pipeline_mode = #tpu.pipeline_mode<synchronous>, transform_indices = @transform_2, window_bounds = array<i64: 32, 96>}, {pipeline_mode = #tpu.pipeline_mode<synchronous>, transform_indices = @transform_3, window_bounds = array<i64: 32, 32>}, {pipeline_mode = #tpu.pipeline_mode<synchronous>, transform_indices = @transform_4, window_bounds = array<i64: 32, 32>}, {pipeline_mode = #tpu.pipeline_mode<synchronous>, transform_indices = @transform_5, window_bounds = array<i64: 32, 64>}, {pipeline_mode = #tpu.pipeline_mode<synchronous>, transform_indices = @transform_6, window_bounds = array<i64: 32, 32>}, {pipeline_mode = #tpu.pipeline_mode<synchronous>, transform_indices = @transform_7, window_bounds = array<i64: 32, 64>}, {pipeline_mode = #tpu.pipeline_mode<synchronous>, transform_indices = @transform_8, window_bounds = array<i64: 1, 64>}, {pipeline_mode = #tpu.pipeline_mode<synchronous>, transform_indices = @transform_9, window_bounds = array<i64: 64, 32>}, {pipeline_mode = #tpu.pipeline_mode<synchronous>, transform_indices = @transform_10, window_bounds = array<i64: 1, 32>}, {pipeline_mode = #tpu.pipeline_mode<synchronous>, transform_indices = @transform_11, window_bounds = array<i64: 3, 1, 32>}, {pipeline_mode = #tpu.pipeline_mode<synchronous>, transform_indices = @transform_12, window_bounds = array<i64: 3, 1, 32>}, {transform_indices = @transform_13, window_bounds = array<i64: 4, 2, 256>}]} {
    %c0_i32 = arith.constant 0 : i32
    %0 = arith.cmpi eq, %arg1, %c0_i32 : i32
    %1 = arith.extui %0 : i1 to i32
    %c0_i32_0 = arith.constant 0 : i32
    %2 = arith.cmpi ne, %1, %c0_i32_0 : i32
    scf.if %2 {
      %c0_6 = arith.constant 0 : index
      %c0_7 = arith.constant 0 : index
      %7 = vector.load %arg3[%c0_6, %c0_7] : memref<16x32xf32, #tpu.memory_space<vmem>>, vector<16x32xf32>
      %c0_8 = arith.constant 0 : index
      %c0_9 = arith.constant 0 : index
      %8 = vector.load %arg16[%c0_8, %c0_9] : memref<16x32xf32, #tpu.memory_space<vmem>>, vector<16x32xf32>
      tpu.vector_store %arg16[%c0_8, %c0_9], %7 {strides = array<i32>} : memref<16x32xf32, #tpu.memory_space<vmem>>, vector<16x32xf32>,
    } else {
    }
    %c0 = arith.constant 0 : index
    %c0_1 = arith.constant 0 : index
    %3 = vector.load %arg16[%c0, %c0_1] : memref<16x32xf32, #tpu.memory_space<vmem>>, vector<16x32xf32>
    %c0_i32_2 = arith.constant 0 : i32
    %c2_i32 = arith.constant 2 : i32
    %4 = arith.addi %c0_i32_2, %c2_i32 : i32
    %c1_i32 = arith.constant 1 : i32
    %5 = scf.for %arg17 = %c0_i32_2 to %4 step %c1_i32 iter_args(%arg18 = %3) -> (vector<16x32xf32>)  : i32 {
      %c2_i32_6 = arith.constant 2 : i32
      %7 = arith.muli %arg17, %c2_i32_6 : i32
      %c0_i32_7 = arith.constant 0 : i32
      %8 = arith.addi %7, %c0_i32_7 : i32
      %9 = arith.index_cast %8 : i32 to index
      %c0_8 = arith.constant 0 : index
      %c0_9 = arith.constant 0 : index
      %10 = vector.load %arg2[%9, %c0_8, %c0_9] : memref<4x32x32xbf16, #tpu.memory_space<vmem>>, vector<1x32x32xbf16>
      %11 = vector.shape_cast %10 : vector<1x32x32xbf16> to vector<32x32xbf16>
      %12 = arith.truncf %arg18 : vector<16x32xf32> to vector<16x32xbf16>
      %c0_10 = arith.constant 0 : index
      %c0_11 = arith.constant 0 : index
      %13 = vector.load %arg4[%c0_10, %c0_11] : memref<32x96xbf16, #tpu.memory_space<vmem>>, vector<32x96xbf16>
      %cst = arith.constant dense<0.000000e+00> : vector<16x96xf32>
      %14 = tpu.matmul %12, %13, %cst {dimension_numbers = #tpu.dot_dimension_numbers<[1], [0], [0], [1], [0, 0, 1, 1], [], []>} : vector<16x32xbf16>, vector<32x96xbf16>, vector<16x96xf32> -> vector<16x96xf32>
      %15 = vector.extract_strided_slice %14 {offsets = [0, 0], sizes = [16, 32], strides = [1, 1]} : vector<16x96xf32> to vector<16x32xf32>
      %16 = vector.shape_cast %15 : vector<16x32xf32> to vector<2x8x32xf32>
      %17 = arith.truncf %16 : vector<2x8x32xf32> to vector<2x8x32xbf16>
      %18 = vector.extract_strided_slice %14 {offsets = [0, 32], sizes = [16, 32], strides = [1, 1]} : vector<16x96xf32> to vector<16x32xf32>
      %19 = vector.shape_cast %18 : vector<16x32xf32> to vector<2x8x32xf32>
      %20 = arith.truncf %19 : vector<2x8x32xf32> to vector<2x8x32xbf16>
      %21 = vector.extract_strided_slice %14 {offsets = [0, 64], sizes = [16, 32], strides = [1, 1]} : vector<16x96xf32> to vector<16x32xf32>
      %22 = vector.shape_cast %21 : vector<16x32xf32> to vector<2x8x32xf32>
      %23 = arith.truncf %22 : vector<2x8x32xf32> to vector<2x8x32xbf16>
      "tpu.trace_start"() <{level = 10 : i32, message = "bqe,bke->bqk"}> : () -> ()
      %cst_12 = arith.constant dense<0.000000e+00> : vector<2x8x8xf32>
      %24 = tpu.matmul %17, %20, %cst_12 {dimension_numbers = #tpu.dot_dimension_numbers<[2], [2], [1], [1], [0, 0, 0, 1, 1, 1], [0], [0]>} : vector<2x8x32xbf16>, vector<2x8x32xbf16>, vector<2x8x8xf32> -> vector<2x8x8xf32>
      "tpu.trace_stop"() : () -> ()
      %cst_13 = arith.constant dense<0xFF800000> : vector<2x8xf32>
      %25 = vector.multi_reduction <maximumf>, %24, %cst_13 [2] : vector<2x8x8xf32> to vector<2x8xf32>
      %26 = vector.shape_cast %25 : vector<2x8xf32> to vector<2x8x1xf32>
      %27 = vector.broadcast %26 : vector<2x8x1xf32> to vector<2x8x8xf32>
      %28 = arith.subf %24, %27 : vector<2x8x8xf32>
      %29 = math.exp %28 : vector<2x8x8xf32>
      %cst_14 = arith.constant dense<0.000000e+00> : vector<2x8xf32>
      %30 = vector.multi_reduction <add>, %29, %cst_14 [2] : vector<2x8x8xf32> to vector<2x8xf32>
      %31 = vector.shape_cast %30 : vector<2x8xf32> to vector<2x8x1xf32>
      %32 = tpu.reciprocal %31 {approx = true} : vector<2x8x1xf32> -> vector<2x8x1xf32>
      %33 = vector.broadcast %32 : vector<2x8x1xf32> to vector<2x8x8xf32>
      %34 = arith.mulf %29, %33 : vector<2x8x8xf32>
      %35 = arith.truncf %34 : vector<2x8x8xf32> to vector<2x8x8xbf16>
      "tpu.trace_start"() <{level = 10 : i32, message = "bqk,bke->bqe"}> : () -> ()
      %cst_15 = arith.constant dense<0.000000e+00> : vector<2x8x32xf32>
      %36 = tpu.matmul %35, %23, %cst_15 {dimension_numbers = #tpu.dot_dimension_numbers<[2], [1], [1], [2], [0, 0, 0, 1, 1, 2], [0], [0]>} : vector<2x8x8xbf16>, vector<2x8x32xbf16>, vector<2x8x32xf32> -> vector<2x8x32xf32>
      "tpu.trace_stop"() : () -> ()
      %37 = vector.shape_cast %36 : vector<2x8x32xf32> to vector<16x32xf32>
      %c0_16 = arith.constant 0 : index
      %c0_17 = arith.constant 0 : index
      %38 = vector.load %arg5[%c0_16, %c0_17] : memref<32x32xbf16, #tpu.memory_space<vmem>>, vector<32x32xbf16>
      %39 = arith.truncf %37 : vector<16x32xf32> to vector<16x32xbf16>
      %cst_18 = arith.constant dense<0.000000e+00> : vector<16x32xf32>
      %40 = tpu.matmul %39, %38, %cst_18 {dimension_numbers = #tpu.dot_dimension_numbers<[1], [0], [0], [1], [0, 0, 1, 1], [], []>} : vector<16x32xbf16>, vector<32x32xbf16>, vector<16x32xf32> -> vector<16x32xf32>
      %41 = arith.addf %arg18, %40 : vector<16x32xf32>
      %cst_19 = arith.constant dense<0.000000e+00> : vector<16xf32>
      %42 = vector.multi_reduction <add>, %41, %cst_19 [1] : vector<16x32xf32> to vector<16xf32>
      %43 = vector.shape_cast %42 : vector<16xf32> to vector<16x1xf32>
      %44 = arith.mulf %41, %41 : vector<16x32xf32>
      %cst_20 = arith.constant dense<0.000000e+00> : vector<16xf32>
      %45 = vector.multi_reduction <add>, %44, %cst_20 [1] : vector<16x32xf32> to vector<16xf32>
      %46 = vector.shape_cast %45 : vector<16xf32> to vector<16x1xf32>
      %cst_21 = arith.constant 3.125000e-02 : f32
      %47 = vector.broadcast %cst_21 : f32 to vector<16x1xf32>
      %48 = arith.mulf %43, %47 : vector<16x1xf32>
      %cst_22 = arith.constant 3.125000e-02 : f32
      %49 = vector.broadcast %cst_22 : f32 to vector<16x1xf32>
      %50 = arith.mulf %46, %49 : vector<16x1xf32>
      %51 = arith.mulf %48, %48 : vector<16x1xf32>
      %52 = arith.subf %50, %51 : vector<16x1xf32>
      %cst_23 = arith.constant 0.000000e+00 : f32
      %53 = vector.broadcast %cst_23 : f32 to vector<16x1xf32>
      %54 = arith.maximumf %52, %53 : vector<16x1xf32>
      %55 = vector.broadcast %48 : vector<16x1xf32> to vector<16x32xf32>
      %56 = arith.subf %41, %55 : vector<16x32xf32>
      %cst_24 = arith.constant 9.99999974E-6 : f32
      %57 = vector.broadcast %cst_24 : f32 to vector<16x1xf32>
      %58 = arith.addf %54, %57 : vector<16x1xf32>
      %59 = math.rsqrt %58 : vector<16x1xf32>
      %60 = vector.broadcast %59 : vector<16x1xf32> to vector<16x32xf32>
      %61 = arith.mulf %56, %60 : vector<16x32xf32>
      %c0_25 = arith.constant 0 : index
      %c0_26 = arith.constant 0 : index
      %c0_27 = arith.constant 0 : index
      %62 = vector.load %arg13[%c0_25, %c0_26, %c0_27] : memref<3x1x32xf32, #tpu.memory_space<vmem>>, vector<1x1x32xf32>
      %63 = vector.shape_cast %62 : vector<1x1x32xf32> to vector<1x32xf32>
      %64 = vector.broadcast %63 : vector<1x32xf32> to vector<16x32xf32>
      %65 = arith.mulf %61, %64 : vector<16x32xf32>
      %c0_28 = arith.constant 0 : index
      %c0_29 = arith.constant 0 : index
      %c0_30 = arith.constant 0 : index
      %66 = vector.load %arg14[%c0_28, %c0_29, %c0_30] : memref<3x1x32xf32, #tpu.memory_space<vmem>>, vector<1x1x32xf32>
      %67 = vector.shape_cast %66 : vector<1x1x32xf32> to vector<1x32xf32>
      %68 = vector.broadcast %67 : vector<1x32xf32> to vector<16x32xf32>
      %69 = arith.addf %65, %68 : vector<16x32xf32>
      %70 = arith.truncf %69 : vector<16x32xf32> to vector<16x32xbf16>
      %c0_31 = arith.constant 0 : index
      %c0_32 = arith.constant 0 : index
      %71 = vector.load %arg6[%c0_31, %c0_32] : memref<32x32xbf16, #tpu.memory_space<vmem>>, vector<32x32xbf16>
      %cst_33 = arith.constant dense<0.000000e+00> : vector<16x32xf32>
      %72 = tpu.matmul %70, %71, %cst_33 {dimension_numbers = #tpu.dot_dimension_numbers<[1], [0], [0], [1], [0, 0, 1, 1], [], []>} : vector<16x32xbf16>, vector<32x32xbf16>, vector<16x32xf32> -> vector<16x32xf32>
      %73 = vector.shape_cast %72 : vector<16x32xf32> to vector<2x8x32xf32>
      %74 = arith.truncf %73 : vector<2x8x32xf32> to vector<2x8x32xbf16>
      %c0_34 = arith.constant 0 : index
      %c0_35 = arith.constant 0 : index
      %75 = vector.load %arg7[%c0_34, %c0_35] : memref<32x64xbf16, #tpu.memory_space<vmem>>, vector<32x64xbf16>
      %cst_36 = arith.constant dense<0.000000e+00> : vector<32x64xf32>
      %76 = tpu.matmul %11, %75, %cst_36 {dimension_numbers = #tpu.dot_dimension_numbers<[1], [0], [0], [1], [0, 0, 1, 1], [], []>} : vector<32x32xbf16>, vector<32x64xbf16>, vector<32x64xf32> -> vector<32x64xf32>
      %77 = vector.extract_strided_slice %76 {offsets = [0, 0], sizes = [32, 32], strides = [1, 1]} : vector<32x64xf32> to vector<32x32xf32>
      %78 = vector.shape_cast %77 : vector<32x32xf32> to vector<2x16x32xf32>
      %79 = arith.truncf %78 : vector<2x16x32xf32> to vector<2x16x32xbf16>
      %80 = vector.extract_strided_slice %76 {offsets = [0, 32], sizes = [32, 32], strides = [1, 1]} : vector<32x64xf32> to vector<32x32xf32>
      %81 = vector.shape_cast %80 : vector<32x32xf32> to vector<2x16x32xf32>
      %82 = arith.truncf %81 : vector<2x16x32xf32> to vector<2x16x32xbf16>
      "tpu.trace_start"() <{level = 10 : i32, message = "bqe,bke->bqk"}> : () -> ()
      %cst_37 = arith.constant dense<0.000000e+00> : vector<2x8x16xf32>
      %83 = tpu.matmul %74, %79, %cst_37 {dimension_numbers = #tpu.dot_dimension_numbers<[2], [2], [1], [1], [0, 0, 0, 1, 1, 1], [0], [0]>} : vector<2x8x32xbf16>, vector<2x16x32xbf16>, vector<2x8x16xf32> -> vector<2x8x16xf32>
      "tpu.trace_stop"() : () -> ()
      %cst_38 = arith.constant dense<0xFF800000> : vector<2x8xf32>
      %84 = vector.multi_reduction <maximumf>, %83, %cst_38 [2] : vector<2x8x16xf32> to vector<2x8xf32>
      %85 = vector.shape_cast %84 : vector<2x8xf32> to vector<2x8x1xf32>
      %86 = vector.broadcast %85 : vector<2x8x1xf32> to vector<2x8x16xf32>
      %87 = arith.subf %83, %86 : vector<2x8x16xf32>
      %88 = math.exp %87 : vector<2x8x16xf32>
      %cst_39 = arith.constant dense<0.000000e+00> : vector<2x8xf32>
      %89 = vector.multi_reduction <add>, %88, %cst_39 [2] : vector<2x8x16xf32> to vector<2x8xf32>
      %90 = vector.shape_cast %89 : vector<2x8xf32> to vector<2x8x1xf32>
      %91 = tpu.reciprocal %90 {approx = true} : vector<2x8x1xf32> -> vector<2x8x1xf32>
      %92 = vector.broadcast %91 : vector<2x8x1xf32> to vector<2x8x16xf32>
      %93 = arith.mulf %88, %92 : vector<2x8x16xf32>
      %94 = arith.truncf %93 : vector<2x8x16xf32> to vector<2x8x16xbf16>
      "tpu.trace_start"() <{level = 10 : i32, message = "bqk,bke->bqe"}> : () -> ()
      %cst_40 = arith.constant dense<0.000000e+00> : vector<2x8x32xf32>
      %95 = tpu.matmul %94, %82, %cst_40 {dimension_numbers = #tpu.dot_dimension_numbers<[2], [1], [1], [2], [0, 0, 0, 1, 1, 2], [0], [0]>} : vector<2x8x16xbf16>, vector<2x16x32xbf16>, vector<2x8x32xf32> -> vector<2x8x32xf32>
      "tpu.trace_stop"() : () -> ()
      %96 = vector.shape_cast %95 : vector<2x8x32xf32> to vector<16x32xf32>
      %c0_41 = arith.constant 0 : index
      %c0_42 = arith.constant 0 : index
      %97 = vector.load %arg8[%c0_41, %c0_42] : memref<32x32xbf16, #tpu.memory_space<vmem>>, vector<32x32xbf16>
      %98 = arith.truncf %96 : vector<16x32xf32> to vector<16x32xbf16>
      %cst_43 = arith.constant dense<0.000000e+00> : vector<16x32xf32>
      %99 = tpu.matmul %98, %97, %cst_43 {dimension_numbers = #tpu.dot_dimension_numbers<[1], [0], [0], [1], [0, 0, 1, 1], [], []>} : vector<16x32xbf16>, vector<32x32xbf16>, vector<16x32xf32> -> vector<16x32xf32>
      %100 = arith.addf %69, %99 : vector<16x32xf32>
      %cst_44 = arith.constant dense<0.000000e+00> : vector<16xf32>
      %101 = vector.multi_reduction <add>, %100, %cst_44 [1] : vector<16x32xf32> to vector<16xf32>
      %102 = vector.shape_cast %101 : vector<16xf32> to vector<16x1xf32>
      %103 = arith.mulf %100, %100 : vector<16x32xf32>
      %cst_45 = arith.constant dense<0.000000e+00> : vector<16xf32>
      %104 = vector.multi_reduction <add>, %103, %cst_45 [1] : vector<16x32xf32> to vector<16xf32>
      %105 = vector.shape_cast %104 : vector<16xf32> to vector<16x1xf32>
      %cst_46 = arith.constant 3.125000e-02 : f32
      %106 = vector.broadcast %cst_46 : f32 to vector<16x1xf32>
      %107 = arith.mulf %102, %106 : vector<16x1xf32>
      %cst_47 = arith.constant 3.125000e-02 : f32
      %108 = vector.broadcast %cst_47 : f32 to vector<16x1xf32>
      %109 = arith.mulf %105, %108 : vector<16x1xf32>
      %110 = arith.mulf %107, %107 : vector<16x1xf32>
      %111 = arith.subf %109, %110 : vector<16x1xf32>
      %cst_48 = arith.constant 0.000000e+00 : f32
      %112 = vector.broadcast %cst_48 : f32 to vector<16x1xf32>
      %113 = arith.maximumf %111, %112 : vector<16x1xf32>
      %114 = vector.broadcast %107 : vector<16x1xf32> to vector<16x32xf32>
      %115 = arith.subf %100, %114 : vector<16x32xf32>
      %cst_49 = arith.constant 9.99999974E-6 : f32
      %116 = vector.broadcast %cst_49 : f32 to vector<16x1xf32>
      %117 = arith.addf %113, %116 : vector<16x1xf32>
      %118 = math.rsqrt %117 : vector<16x1xf32>
      %119 = vector.broadcast %118 : vector<16x1xf32> to vector<16x32xf32>
      %120 = arith.mulf %115, %119 : vector<16x32xf32>
      %c1 = arith.constant 1 : index
      %c0_50 = arith.constant 0 : index
      %c0_51 = arith.constant 0 : index
      %121 = vector.load %arg13[%c1, %c0_50, %c0_51] : memref<3x1x32xf32, #tpu.memory_space<vmem>>, vector<1x1x32xf32>
      %122 = vector.shape_cast %121 : vector<1x1x32xf32> to vector<1x32xf32>
      %123 = vector.broadcast %122 : vector<1x32xf32> to vector<16x32xf32>
      %124 = arith.mulf %120, %123 : vector<16x32xf32>
      %c1_52 = arith.constant 1 : index
      %c0_53 = arith.constant 0 : index
      %c0_54 = arith.constant 0 : index
      %125 = vector.load %arg14[%c1_52, %c0_53, %c0_54] : memref<3x1x32xf32, #tpu.memory_space<vmem>>, vector<1x1x32xf32>
      %126 = vector.shape_cast %125 : vector<1x1x32xf32> to vector<1x32xf32>
      %127 = vector.broadcast %126 : vector<1x32xf32> to vector<16x32xf32>
      %128 = arith.addf %124, %127 : vector<16x32xf32>
      %c0_55 = arith.constant 0 : index
      %c0_56 = arith.constant 0 : index
      %129 = vector.load %arg9[%c0_55, %c0_56] : memref<32x64xbf16, #tpu.memory_space<vmem>>, vector<32x64xbf16>
      %130 = arith.truncf %128 : vector<16x32xf32> to vector<16x32xbf16>
      %cst_57 = arith.constant dense<0.000000e+00> : vector<16x64xf32>
      %131 = tpu.matmul %130, %129, %cst_57 {dimension_numbers = #tpu.dot_dimension_numbers<[1], [0], [0], [1], [0, 0, 1, 1], [], []>} : vector<16x32xbf16>, vector<32x64xbf16>, vector<16x64xf32> -> vector<16x64xf32>
      %c0_58 = arith.constant 0 : index
      %c0_59 = arith.constant 0 : index
      %132 = vector.load %arg10[%c0_58, %c0_59] : memref<1x64xf32, #tpu.memory_space<vmem>>, vector<1x64xf32>
      %133 = vector.broadcast %132 : vector<1x64xf32> to vector<16x64xf32>
      %134 = arith.addf %131, %133 : vector<16x64xf32>
      %cst_60 = arith.constant 0.000000e+00 : f32
      %135 = vector.broadcast %cst_60 : f32 to vector<16x64xf32>
      %136 = arith.maximumf %134, %135 : vector<16x64xf32>
      %c0_61 = arith.constant 0 : index
      %c0_62 = arith.constant 0 : index
      %137 = vector.load %arg11[%c0_61, %c0_62] : memref<64x32xbf16, #tpu.memory_space<vmem>>, vector<64x32xbf16>
      %138 = arith.truncf %136 : vector<16x64xf32> to vector<16x64xbf16>
      %cst_63 = arith.constant dense<0.000000e+00> : vector<16x32xf32>
      %139 = tpu.matmul %138, %137, %cst_63 {dimension_numbers = #tpu.dot_dimension_numbers<[1], [0], [0], [1], [0, 0, 1, 1], [], []>} : vector<16x64xbf16>, vector<64x32xbf16>, vector<16x32xf32> -> vector<16x32xf32>
      %c0_64 = arith.constant 0 : index
      %c0_65 = arith.constant 0 : index
      %140 = vector.load %arg12[%c0_64, %c0_65] : memref<1x32xf32, #tpu.memory_space<vmem>>, vector<1x32xf32>
      %141 = vector.broadcast %140 : vector<1x32xf32> to vector<16x32xf32>
      %142 = arith.addf %139, %141 : vector<16x32xf32>
      %143 = arith.addf %128, %142 : vector<16x32xf32>
      %cst_66 = arith.constant dense<0.000000e+00> : vector<16xf32>
      %144 = vector.multi_reduction <add>, %143, %cst_66 [1] : vector<16x32xf32> to vector<16xf32>
      %145 = vector.shape_cast %144 : vector<16xf32> to vector<16x1xf32>
      %146 = arith.mulf %143, %143 : vector<16x32xf32>
      %cst_67 = arith.constant dense<0.000000e+00> : vector<16xf32>
      %147 = vector.multi_reduction <add>, %146, %cst_67 [1] : vector<16x32xf32> to vector<16xf32>
      %148 = vector.shape_cast %147 : vector<16xf32> to vector<16x1xf32>
      %cst_68 = arith.constant 3.125000e-02 : f32
      %149 = vector.broadcast %cst_68 : f32 to vector<16x1xf32>
      %150 = arith.mulf %145, %149 : vector<16x1xf32>
      %cst_69 = arith.constant 3.125000e-02 : f32
      %151 = vector.broadcast %cst_69 : f32 to vector<16x1xf32>
      %152 = arith.mulf %148, %151 : vector<16x1xf32>
      %153 = arith.mulf %150, %150 : vector<16x1xf32>
      %154 = arith.subf %152, %153 : vector<16x1xf32>
      %cst_70 = arith.constant 0.000000e+00 : f32
      %155 = vector.broadcast %cst_70 : f32 to vector<16x1xf32>
      %156 = arith.maximumf %154, %155 : vector<16x1xf32>
      %157 = vector.broadcast %150 : vector<16x1xf32> to vector<16x32xf32>
      %158 = arith.subf %143, %157 : vector<16x32xf32>
      %cst_71 = arith.constant 9.99999974E-6 : f32
      %159 = vector.broadcast %cst_71 : f32 to vector<16x1xf32>
      %160 = arith.addf %156, %159 : vector<16x1xf32>
      %161 = math.rsqrt %160 : vector<16x1xf32>
      %162 = vector.broadcast %161 : vector<16x1xf32> to vector<16x32xf32>
      %163 = arith.mulf %158, %162 : vector<16x32xf32>
      %c2 = arith.constant 2 : index
      %c0_72 = arith.constant 0 : index
      %c0_73 = arith.constant 0 : index
      %164 = vector.load %arg13[%c2, %c0_72, %c0_73] : memref<3x1x32xf32, #tpu.memory_space<vmem>>, vector<1x1x32xf32>
      %165 = vector.shape_cast %164 : vector<1x1x32xf32> to vector<1x32xf32>
      %166 = vector.broadcast %165 : vector<1x32xf32> to vector<16x32xf32>
      %167 = arith.mulf %163, %166 : vector<16x32xf32>
      %c2_74 = arith.constant 2 : index
      %c0_75 = arith.constant 0 : index
      %c0_76 = arith.constant 0 : index
      %168 = vector.load %arg14[%c2_74, %c0_75, %c0_76] : memref<3x1x32xf32, #tpu.memory_space<vmem>>, vector<1x1x32xf32>
      %169 = vector.shape_cast %168 : vector<1x1x32xf32> to vector<1x32xf32>
      %170 = vector.broadcast %169 : vector<1x32xf32> to vector<16x32xf32>
      %171 = arith.addf %167, %170 : vector<16x32xf32>
      %172 = vector.shape_cast %171 : vector<16x32xf32> to vector<2x8x32xf32>
      %173 = vector.extract_strided_slice %172 {offsets = [0, 0, 0], sizes = [2, 1, 32], strides = [1, 1, 1]} : vector<2x8x32xf32> to vector<2x1x32xf32>
      %174 = vector.shape_cast %173 : vector<2x1x32xf32> to vector<2x32xf32>
      %175 = arith.truncf %174 : vector<2x32xf32> to vector<2x32xbf16>
      %176 = arith.index_cast %8 : i32 to index
      %c0_77 = arith.constant 0 : index
      %c0_78 = arith.constant 0 : index
      %177 = vector.load %arg15[%176, %c0_77, %c0_78] : memref<4x2x256xbf16, #tpu.memory_space<vmem>>, vector<1x2x32xbf16>
      %178 = vector.shape_cast %177 : vector<1x2x32xbf16> to vector<2x32xbf16>
      %179 = vector.shape_cast %175 : vector<2x32xbf16> to vector<1x2x32xbf16>
      tpu.vector_store %arg15[%176, %c0_77, %c0_78], %179 {strides = array<i32>} : memref<4x2x256xbf16, #tpu.memory_space<vmem>>, vector<1x2x32xbf16>,
      %180 = vector.extract_strided_slice %172 {offsets = [0, 1, 0], sizes = [2, 1, 32], strides = [1, 1, 1]} : vector<2x8x32xf32> to vector<2x1x32xf32>
      %181 = vector.shape_cast %180 : vector<2x1x32xf32> to vector<2x32xf32>
      %182 = arith.truncf %181 : vector<2x32xf32> to vector<2x32xbf16>
      %183 = arith.index_cast %8 : i32 to index
      %c0_79 = arith.constant 0 : index
      %c32 = arith.constant 32 : index
      %184 = vector.load %arg15[%183, %c0_79, %c32] : memref<4x2x256xbf16, #tpu.memory_space<vmem>>, vector<1x2x32xbf16>
      %185 = vector.shape_cast %184 : vector<1x2x32xbf16> to vector<2x32xbf16>
      %186 = vector.shape_cast %182 : vector<2x32xbf16> to vector<1x2x32xbf16>
      tpu.vector_store %arg15[%183, %c0_79, %c32], %186 {strides = array<i32>} : memref<4x2x256xbf16, #tpu.memory_space<vmem>>, vector<1x2x32xbf16>,
      %187 = vector.extract_strided_slice %172 {offsets = [0, 2, 0], sizes = [2, 1, 32], strides = [1, 1, 1]} : vector<2x8x32xf32> to vector<2x1x32xf32>
      %188 = vector.shape_cast %187 : vector<2x1x32xf32> to vector<2x32xf32>
      %189 = arith.truncf %188 : vector<2x32xf32> to vector<2x32xbf16>
      %190 = arith.index_cast %8 : i32 to index
      %c0_80 = arith.constant 0 : index
      %c64 = arith.constant 64 : index
      %191 = vector.load %arg15[%190, %c0_80, %c64] : memref<4x2x256xbf16, #tpu.memory_space<vmem>>, vector<1x2x32xbf16>
      %192 = vector.shape_cast %191 : vector<1x2x32xbf16> to vector<2x32xbf16>
      %193 = vector.shape_cast %189 : vector<2x32xbf16> to vector<1x2x32xbf16>
      tpu.vector_store %arg15[%190, %c0_80, %c64], %193 {strides = array<i32>} : memref<4x2x256xbf16, #tpu.memory_space<vmem>>, vector<1x2x32xbf16>,
      %194 = vector.extract_strided_slice %172 {offsets = [0, 3, 0], sizes = [2, 1, 32], strides = [1, 1, 1]} : vector<2x8x32xf32> to vector<2x1x32xf32>
      %195 = vector.shape_cast %194 : vector<2x1x32xf32> to vector<2x32xf32>
      %196 = arith.truncf %195 : vector<2x32xf32> to vector<2x32xbf16>
      %197 = arith.index_cast %8 : i32 to index
      %c0_81 = arith.constant 0 : index
      %c96 = arith.constant 96 : index
      %198 = vector.load %arg15[%197, %c0_81, %c96] : memref<4x2x256xbf16, #tpu.memory_space<vmem>>, vector<1x2x32xbf16>
      %199 = vector.shape_cast %198 : vector<1x2x32xbf16> to vector<2x32xbf16>
      %200 = vector.shape_cast %196 : vector<2x32xbf16> to vector<1x2x32xbf16>
      tpu.vector_store %arg15[%197, %c0_81, %c96], %200 {strides = array<i32>} : memref<4x2x256xbf16, #tpu.memory_space<vmem>>, vector<1x2x32xbf16>,
      %201 = vector.extract_strided_slice %172 {offsets = [0, 4, 0], sizes = [2, 1, 32], strides = [1, 1, 1]} : vector<2x8x32xf32> to vector<2x1x32xf32>
      %202 = vector.shape_cast %201 : vector<2x1x32xf32> to vector<2x32xf32>
      %203 = arith.truncf %202 : vector<2x32xf32> to vector<2x32xbf16>
      %204 = arith.index_cast %8 : i32 to index
      %c0_82 = arith.constant 0 : index
      %c128 = arith.constant 128 : index
      %205 = vector.load %arg15[%204, %c0_82, %c128] : memref<4x2x256xbf16, #tpu.memory_space<vmem>>, vector<1x2x32xbf16>
      %206 = vector.shape_cast %205 : vector<1x2x32xbf16> to vector<2x32xbf16>
      %207 = vector.shape_cast %203 : vector<2x32xbf16> to vector<1x2x32xbf16>
      tpu.vector_store %arg15[%204, %c0_82, %c128], %207 {strides = array<i32>} : memref<4x2x256xbf16, #tpu.memory_space<vmem>>, vector<1x2x32xbf16>,
      %208 = vector.extract_strided_slice %172 {offsets = [0, 5, 0], sizes = [2, 1, 32], strides = [1, 1, 1]} : vector<2x8x32xf32> to vector<2x1x32xf32>
      %209 = vector.shape_cast %208 : vector<2x1x32xf32> to vector<2x32xf32>
      %210 = arith.truncf %209 : vector<2x32xf32> to vector<2x32xbf16>
      %211 = arith.index_cast %8 : i32 to index
      %c0_83 = arith.constant 0 : index
      %c160 = arith.constant 160 : index
      %212 = vector.load %arg15[%211, %c0_83, %c160] : memref<4x2x256xbf16, #tpu.memory_space<vmem>>, vector<1x2x32xbf16>
      %213 = vector.shape_cast %212 : vector<1x2x32xbf16> to vector<2x32xbf16>
      %214 = vector.shape_cast %210 : vector<2x32xbf16> to vector<1x2x32xbf16>
      tpu.vector_store %arg15[%211, %c0_83, %c160], %214 {strides = array<i32>} : memref<4x2x256xbf16, #tpu.memory_space<vmem>>, vector<1x2x32xbf16>,
      %215 = vector.extract_strided_slice %172 {offsets = [0, 6, 0], sizes = [2, 1, 32], strides = [1, 1, 1]} : vector<2x8x32xf32> to vector<2x1x32xf32>
      %216 = vector.shape_cast %215 : vector<2x1x32xf32> to vector<2x32xf32>
      %217 = arith.truncf %216 : vector<2x32xf32> to vector<2x32xbf16>
      %218 = arith.index_cast %8 : i32 to index
      %c0_84 = arith.constant 0 : index
      %c192 = arith.constant 192 : index
      %219 = vector.load %arg15[%218, %c0_84, %c192] : memref<4x2x256xbf16, #tpu.memory_space<vmem>>, vector<1x2x32xbf16>
      %220 = vector.shape_cast %219 : vector<1x2x32xbf16> to vector<2x32xbf16>
      %221 = vector.shape_cast %217 : vector<2x32xbf16> to vector<1x2x32xbf16>
      tpu.vector_store %arg15[%218, %c0_84, %c192], %221 {strides = array<i32>} : memref<4x2x256xbf16, #tpu.memory_space<vmem>>, vector<1x2x32xbf16>,
      %222 = vector.extract_strided_slice %172 {offsets = [0, 7, 0], sizes = [2, 1, 32], strides = [1, 1, 1]} : vector<2x8x32xf32> to vector<2x1x32xf32>
      %223 = vector.shape_cast %222 : vector<2x1x32xf32> to vector<2x32xf32>
      %224 = arith.truncf %223 : vector<2x32xf32> to vector<2x32xbf16>
      %225 = arith.index_cast %8 : i32 to index
      %c0_85 = arith.constant 0 : index
      %c224 = arith.constant 224 : index
      %226 = vector.load %arg15[%225, %c0_85, %c224] : memref<4x2x256xbf16, #tpu.memory_space<vmem>>, vector<1x2x32xbf16>
      %227 = vector.shape_cast %226 : vector<1x2x32xbf16> to vector<2x32xbf16>
      %228 = vector.shape_cast %224 : vector<2x32xbf16> to vector<1x2x32xbf16>
      tpu.vector_store %arg15[%225, %c0_85, %c224], %228 {strides = array<i32>} : memref<4x2x256xbf16, #tpu.memory_space<vmem>>, vector<1x2x32xbf16>,
      %c2_i32_86 = arith.constant 2 : i32
      %229 = arith.muli %arg17, %c2_i32_86 : i32
      %c1_i32_87 = arith.constant 1 : i32
      %230 = arith.addi %229, %c1_i32_87 : i32
      %231 = arith.index_cast %230 : i32 to index
      %c0_88 = arith.constant 0 : index
      %c0_89 = arith.constant 0 : index
      %232 = vector.load %arg2[%231, %c0_88, %c0_89] : memref<4x32x32xbf16, #tpu.memory_space<vmem>>, vector<1x32x32xbf16>
      %233 = vector.shape_cast %232 : vector<1x32x32xbf16> to vector<32x32xbf16>
      %234 = arith.truncf %171 : vector<16x32xf32> to vector<16x32xbf16>
      %c0_90 = arith.constant 0 : index
      %c0_91 = arith.constant 0 : index
      %235 = vector.load %arg4[%c0_90, %c0_91] : memref<32x96xbf16, #tpu.memory_space<vmem>>, vector<32x96xbf16>
      %cst_92 = arith.constant dense<0.000000e+00> : vector<16x96xf32>
      %236 = tpu.matmul %234, %235, %cst_92 {dimension_numbers = #tpu.dot_dimension_numbers<[1], [0], [0], [1], [0, 0, 1, 1], [], []>} : vector<16x32xbf16>, vector<32x96xbf16>, vector<16x96xf32> -> vector<16x96xf32>
      %237 = vector.extract_strided_slice %236 {offsets = [0, 0], sizes = [16, 32], strides = [1, 1]} : vector<16x96xf32> to vector<16x32xf32>
      %238 = vector.shape_cast %237 : vector<16x32xf32> to vector<2x8x32xf32>
      %239 = arith.truncf %238 : vector<2x8x32xf32> to vector<2x8x32xbf16>
      %240 = vector.extract_strided_slice %236 {offsets = [0, 32], sizes = [16, 32], strides = [1, 1]} : vector<16x96xf32> to vector<16x32xf32>
      %241 = vector.shape_cast %240 : vector<16x32xf32> to vector<2x8x32xf32>
      %242 = arith.truncf %241 : vector<2x8x32xf32> to vector<2x8x32xbf16>
      %243 = vector.extract_strided_slice %236 {offsets = [0, 64], sizes = [16, 32], strides = [1, 1]} : vector<16x96xf32> to vector<16x32xf32>
      %244 = vector.shape_cast %243 : vector<16x32xf32> to vector<2x8x32xf32>
      %245 = arith.truncf %244 : vector<2x8x32xf32> to vector<2x8x32xbf16>
      "tpu.trace_start"() <{level = 10 : i32, message = "bqe,bke->bqk"}> : () -> ()
      %cst_93 = arith.constant dense<0.000000e+00> : vector<2x8x8xf32>
      %246 = tpu.matmul %239, %242, %cst_93 {dimension_numbers = #tpu.dot_dimension_numbers<[2], [2], [1], [1], [0, 0, 0, 1, 1, 1], [0], [0]>} : vector<2x8x32xbf16>, vector<2x8x32xbf16>, vector<2x8x8xf32> -> vector<2x8x8xf32>
      "tpu.trace_stop"() : () -> ()
      %cst_94 = arith.constant dense<0xFF800000> : vector<2x8xf32>
      %247 = vector.multi_reduction <maximumf>, %246, %cst_94 [2] : vector<2x8x8xf32> to vector<2x8xf32>
      %248 = vector.shape_cast %247 : vector<2x8xf32> to vector<2x8x1xf32>
      %249 = vector.broadcast %248 : vector<2x8x1xf32> to vector<2x8x8xf32>
      %250 = arith.subf %246, %249 : vector<2x8x8xf32>
      %251 = math.exp %250 : vector<2x8x8xf32>
      %cst_95 = arith.constant dense<0.000000e+00> : vector<2x8xf32>
      %252 = vector.multi_reduction <add>, %251, %cst_95 [2] : vector<2x8x8xf32> to vector<2x8xf32>
      %253 = vector.shape_cast %252 : vector<2x8xf32> to vector<2x8x1xf32>
      %254 = tpu.reciprocal %253 {approx = true} : vector<2x8x1xf32> -> vector<2x8x1xf32>
      %255 = vector.broadcast %254 : vector<2x8x1xf32> to vector<2x8x8xf32>
      %256 = arith.mulf %251, %255 : vector<2x8x8xf32>
      %257 = arith.truncf %256 : vector<2x8x8xf32> to vector<2x8x8xbf16>
      "tpu.trace_start"() <{level = 10 : i32, message = "bqk,bke->bqe"}> : () -> ()
      %cst_96 = arith.constant dense<0.000000e+00> : vector<2x8x32xf32>
      %258 = tpu.matmul %257, %245, %cst_96 {dimension_numbers = #tpu.dot_dimension_numbers<[2], [1], [1], [2], [0, 0, 0, 1, 1, 2], [0], [0]>} : vector<2x8x8xbf16>, vector<2x8x32xbf16>, vector<2x8x32xf32> -> vector<2x8x32xf32>
      "tpu.trace_stop"() : () -> ()
      %259 = vector.shape_cast %258 : vector<2x8x32xf32> to vector<16x32xf32>
      %c0_97 = arith.constant 0 : index
      %c0_98 = arith.constant 0 : index
      %260 = vector.load %arg5[%c0_97, %c0_98] : memref<32x32xbf16, #tpu.memory_space<vmem>>, vector<32x32xbf16>
      %261 = arith.truncf %259 : vector<16x32xf32> to vector<16x32xbf16>
      %cst_99 = arith.constant dense<0.000000e+00> : vector<16x32xf32>
      %262 = tpu.matmul %261, %260, %cst_99 {dimension_numbers = #tpu.dot_dimension_numbers<[1], [0], [0], [1], [0, 0, 1, 1], [], []>} : vector<16x32xbf16>, vector<32x32xbf16>, vector<16x32xf32> -> vector<16x32xf32>
      %263 = arith.addf %171, %262 : vector<16x32xf32>
      %cst_100 = arith.constant dense<0.000000e+00> : vector<16xf32>
      %264 = vector.multi_reduction <add>, %263, %cst_100 [1] : vector<16x32xf32> to vector<16xf32>
      %265 = vector.shape_cast %264 : vector<16xf32> to vector<16x1xf32>
      %266 = arith.mulf %263, %263 : vector<16x32xf32>
      %cst_101 = arith.constant dense<0.000000e+00> : vector<16xf32>
      %267 = vector.multi_reduction <add>, %266, %cst_101 [1] : vector<16x32xf32> to vector<16xf32>
      %268 = vector.shape_cast %267 : vector<16xf32> to vector<16x1xf32>
      %cst_102 = arith.constant 3.125000e-02 : f32
      %269 = vector.broadcast %cst_102 : f32 to vector<16x1xf32>
      %270 = arith.mulf %265, %269 : vector<16x1xf32>
      %cst_103 = arith.constant 3.125000e-02 : f32
      %271 = vector.broadcast %cst_103 : f32 to vector<16x1xf32>
      %272 = arith.mulf %268, %271 : vector<16x1xf32>
      %273 = arith.mulf %270, %270 : vector<16x1xf32>
      %274 = arith.subf %272, %273 : vector<16x1xf32>
      %cst_104 = arith.constant 0.000000e+00 : f32
      %275 = vector.broadcast %cst_104 : f32 to vector<16x1xf32>
      %276 = arith.maximumf %274, %275 : vector<16x1xf32>
      %277 = vector.broadcast %270 : vector<16x1xf32> to vector<16x32xf32>
      %278 = arith.subf %263, %277 : vector<16x32xf32>
      %cst_105 = arith.constant 9.99999974E-6 : f32
      %279 = vector.broadcast %cst_105 : f32 to vector<16x1xf32>
      %280 = arith.addf %276, %279 : vector<16x1xf32>
      %281 = math.rsqrt %280 : vector<16x1xf32>
      %282 = vector.broadcast %281 : vector<16x1xf32> to vector<16x32xf32>
      %283 = arith.mulf %278, %282 : vector<16x32xf32>
      %c0_106 = arith.constant 0 : index
      %c0_107 = arith.constant 0 : index
      %c0_108 = arith.constant 0 : index
      %284 = vector.load %arg13[%c0_106, %c0_107, %c0_108] : memref<3x1x32xf32, #tpu.memory_space<vmem>>, vector<1x1x32xf32>
      %285 = vector.shape_cast %284 : vector<1x1x32xf32> to vector<1x32xf32>
      %286 = vector.broadcast %285 : vector<1x32xf32> to vector<16x32xf32>
      %287 = arith.mulf %283, %286 : vector<16x32xf32>
      %c0_109 = arith.constant 0 : index
      %c0_110 = arith.constant 0 : index
      %c0_111 = arith.constant 0 : index
      %288 = vector.load %arg14[%c0_109, %c0_110, %c0_111] : memref<3x1x32xf32, #tpu.memory_space<vmem>>, vector<1x1x32xf32>
      %289 = vector.shape_cast %288 : vector<1x1x32xf32> to vector<1x32xf32>
      %290 = vector.broadcast %289 : vector<1x32xf32> to vector<16x32xf32>
      %291 = arith.addf %287, %290 : vector<16x32xf32>
      %292 = arith.truncf %291 : vector<16x32xf32> to vector<16x32xbf16>
      %c0_112 = arith.constant 0 : index
      %c0_113 = arith.constant 0 : index
      %293 = vector.load %arg6[%c0_112, %c0_113] : memref<32x32xbf16, #tpu.memory_space<vmem>>, vector<32x32xbf16>
      %cst_114 = arith.constant dense<0.000000e+00> : vector<16x32xf32>
      %294 = tpu.matmul %292, %293, %cst_114 {dimension_numbers = #tpu.dot_dimension_numbers<[1], [0], [0], [1], [0, 0, 1, 1], [], []>} : vector<16x32xbf16>, vector<32x32xbf16>, vector<16x32xf32> -> vector<16x32xf32>
      %295 = vector.shape_cast %294 : vector<16x32xf32> to vector<2x8x32xf32>
      %296 = arith.truncf %295 : vector<2x8x32xf32> to vector<2x8x32xbf16>
      %c0_115 = arith.constant 0 : index
      %c0_116 = arith.constant 0 : index
      %297 = vector.load %arg7[%c0_115, %c0_116] : memref<32x64xbf16, #tpu.memory_space<vmem>>, vector<32x64xbf16>
      %cst_117 = arith.constant dense<0.000000e+00> : vector<32x64xf32>
      %298 = tpu.matmul %233, %297, %cst_117 {dimension_numbers = #tpu.dot_dimension_numbers<[1], [0], [0], [1], [0, 0, 1, 1], [], []>} : vector<32x32xbf16>, vector<32x64xbf16>, vector<32x64xf32> -> vector<32x64xf32>
      %299 = vector.extract_strided_slice %298 {offsets = [0, 0], sizes = [32, 32], strides = [1, 1]} : vector<32x64xf32> to vector<32x32xf32>
      %300 = vector.shape_cast %299 : vector<32x32xf32> to vector<2x16x32xf32>
      %301 = arith.truncf %300 : vector<2x16x32xf32> to vector<2x16x32xbf16>
      %302 = vector.extract_strided_slice %298 {offsets = [0, 32], sizes = [32, 32], strides = [1, 1]} : vector<32x64xf32> to vector<32x32xf32>
      %303 = vector.shape_cast %302 : vector<32x32xf32> to vector<2x16x32xf32>
      %304 = arith.truncf %303 : vector<2x16x32xf32> to vector<2x16x32xbf16>
      "tpu.trace_start"() <{level = 10 : i32, message = "bqe,bke->bqk"}> : () -> ()
      %cst_118 = arith.constant dense<0.000000e+00> : vector<2x8x16xf32>
      %305 = tpu.matmul %296, %301, %cst_118 {dimension_numbers = #tpu.dot_dimension_numbers<[2], [2], [1], [1], [0, 0, 0, 1, 1, 1], [0], [0]>} : vector<2x8x32xbf16>, vector<2x16x32xbf16>, vector<2x8x16xf32> -> vector<2x8x16xf32>
      "tpu.trace_stop"() : () -> ()
      %cst_119 = arith.constant dense<0xFF800000> : vector<2x8xf32>
      %306 = vector.multi_reduction <maximumf>, %305, %cst_119 [2] : vector<2x8x16xf32> to vector<2x8xf32>
      %307 = vector.shape_cast %306 : vector<2x8xf32> to vector<2x8x1xf32>
      %308 = vector.broadcast %307 : vector<2x8x1xf32> to vector<2x8x16xf32>
      %309 = arith.subf %305, %308 : vector<2x8x16xf32>
      %310 = math.exp %309 : vector<2x8x16xf32>
      %cst_120 = arith.constant dense<0.000000e+00> : vector<2x8xf32>
      %311 = vector.multi_reduction <add>, %310, %cst_120 [2] : vector<2x8x16xf32> to vector<2x8xf32>
      %312 = vector.shape_cast %311 : vector<2x8xf32> to vector<2x8x1xf32>
      %313 = tpu.reciprocal %312 {approx = true} : vector<2x8x1xf32> -> vector<2x8x1xf32>
      %314 = vector.broadcast %313 : vector<2x8x1xf32> to vector<2x8x16xf32>
      %315 = arith.mulf %310, %314 : vector<2x8x16xf32>
      %316 = arith.truncf %315 : vector<2x8x16xf32> to vector<2x8x16xbf16>
      "tpu.trace_start"() <{level = 10 : i32, message = "bqk,bke->bqe"}> : () -> ()
      %cst_121 = arith.constant dense<0.000000e+00> : vector<2x8x32xf32>
      %317 = tpu.matmul %316, %304, %cst_121 {dimension_numbers = #tpu.dot_dimension_numbers<[2], [1], [1], [2], [0, 0, 0, 1, 1, 2], [0], [0]>} : vector<2x8x16xbf16>, vector<2x16x32xbf16>, vector<2x8x32xf32> -> vector<2x8x32xf32>
      "tpu.trace_stop"() : () -> ()
      %318 = vector.shape_cast %317 : vector<2x8x32xf32> to vector<16x32xf32>
      %c0_122 = arith.constant 0 : index
      %c0_123 = arith.constant 0 : index
      %319 = vector.load %arg8[%c0_122, %c0_123] : memref<32x32xbf16, #tpu.memory_space<vmem>>, vector<32x32xbf16>
      %320 = arith.truncf %318 : vector<16x32xf32> to vector<16x32xbf16>
      %cst_124 = arith.constant dense<0.000000e+00> : vector<16x32xf32>
      %321 = tpu.matmul %320, %319, %cst_124 {dimension_numbers = #tpu.dot_dimension_numbers<[1], [0], [0], [1], [0, 0, 1, 1], [], []>} : vector<16x32xbf16>, vector<32x32xbf16>, vector<16x32xf32> -> vector<16x32xf32>
      %322 = arith.addf %291, %321 : vector<16x32xf32>
      %cst_125 = arith.constant dense<0.000000e+00> : vector<16xf32>
      %323 = vector.multi_reduction <add>, %322, %cst_125 [1] : vector<16x32xf32> to vector<16xf32>
      %324 = vector.shape_cast %323 : vector<16xf32> to vector<16x1xf32>
      %325 = arith.mulf %322, %322 : vector<16x32xf32>
      %cst_126 = arith.constant dense<0.000000e+00> : vector<16xf32>
      %326 = vector.multi_reduction <add>, %325, %cst_126 [1] : vector<16x32xf32> to vector<16xf32>
      %327 = vector.shape_cast %326 : vector<16xf32> to vector<16x1xf32>
      %cst_127 = arith.constant 3.125000e-02 : f32
      %328 = vector.broadcast %cst_127 : f32 to vector<16x1xf32>
      %329 = arith.mulf %324, %328 : vector<16x1xf32>
      %cst_128 = arith.constant 3.125000e-02 : f32
      %330 = vector.broadcast %cst_128 : f32 to vector<16x1xf32>
      %331 = arith.mulf %327, %330 : vector<16x1xf32>
      %332 = arith.mulf %329, %329 : vector<16x1xf32>
      %333 = arith.subf %331, %332 : vector<16x1xf32>
      %cst_129 = arith.constant 0.000000e+00 : f32
      %334 = vector.broadcast %cst_129 : f32 to vector<16x1xf32>
      %335 = arith.maximumf %333, %334 : vector<16x1xf32>
      %336 = vector.broadcast %329 : vector<16x1xf32> to vector<16x32xf32>
      %337 = arith.subf %322, %336 : vector<16x32xf32>
      %cst_130 = arith.constant 9.99999974E-6 : f32
      %338 = vector.broadcast %cst_130 : f32 to vector<16x1xf32>
      %339 = arith.addf %335, %338 : vector<16x1xf32>
      %340 = math.rsqrt %339 : vector<16x1xf32>
      %341 = vector.broadcast %340 : vector<16x1xf32> to vector<16x32xf32>
      %342 = arith.mulf %337, %341 : vector<16x32xf32>
      %c1_131 = arith.constant 1 : index
      %c0_132 = arith.constant 0 : index
      %c0_133 = arith.constant 0 : index
      %343 = vector.load %arg13[%c1_131, %c0_132, %c0_133] : memref<3x1x32xf32, #tpu.memory_space<vmem>>, vector<1x1x32xf32>
      %344 = vector.shape_cast %343 : vector<1x1x32xf32> to vector<1x32xf32>
      %345 = vector.broadcast %344 : vector<1x32xf32> to vector<16x32xf32>
      %346 = arith.mulf %342, %345 : vector<16x32xf32>
      %c1_134 = arith.constant 1 : index
      %c0_135 = arith.constant 0 : index
      %c0_136 = arith.constant 0 : index
      %347 = vector.load %arg14[%c1_134, %c0_135, %c0_136] : memref<3x1x32xf32, #tpu.memory_space<vmem>>, vector<1x1x32xf32>
      %348 = vector.shape_cast %347 : vector<1x1x32xf32> to vector<1x32xf32>
      %349 = vector.broadcast %348 : vector<1x32xf32> to vector<16x32xf32>
      %350 = arith.addf %346, %349 : vector<16x32xf32>
      %c0_137 = arith.constant 0 : index
      %c0_138 = arith.constant 0 : index
      %351 = vector.load %arg9[%c0_137, %c0_138] : memref<32x64xbf16, #tpu.memory_space<vmem>>, vector<32x64xbf16>
      %352 = arith.truncf %350 : vector<16x32xf32> to vector<16x32xbf16>
      %cst_139 = arith.constant dense<0.000000e+00> : vector<16x64xf32>
      %353 = tpu.matmul %352, %351, %cst_139 {dimension_numbers = #tpu.dot_dimension_numbers<[1], [0], [0], [1], [0, 0, 1, 1], [], []>} : vector<16x32xbf16>, vector<32x64xbf16>, vector<16x64xf32> -> vector<16x64xf32>
      %c0_140 = arith.constant 0 : index
      %c0_141 = arith.constant 0 : index
      %354 = vector.load %arg10[%c0_140, %c0_141] : memref<1x64xf32, #tpu.memory_space<vmem>>, vector<1x64xf32>
      %355 = vector.broadcast %354 : vector<1x64xf32> to vector<16x64xf32>
      %356 = arith.addf %353, %355 : vector<16x64xf32>
      %cst_142 = arith.constant 0.000000e+00 : f32
      %357 = vector.broadcast %cst_142 : f32 to vector<16x64xf32>
      %358 = arith.maximumf %356, %357 : vector<16x64xf32>
      %c0_143 = arith.constant 0 : index
      %c0_144 = arith.constant 0 : index
      %359 = vector.load %arg11[%c0_143, %c0_144] : memref<64x32xbf16, #tpu.memory_space<vmem>>, vector<64x32xbf16>
      %360 = arith.truncf %358 : vector<16x64xf32> to vector<16x64xbf16>
      %cst_145 = arith.constant dense<0.000000e+00> : vector<16x32xf32>
      %361 = tpu.matmul %360, %359, %cst_145 {dimension_numbers = #tpu.dot_dimension_numbers<[1], [0], [0], [1], [0, 0, 1, 1], [], []>} : vector<16x64xbf16>, vector<64x32xbf16>, vector<16x32xf32> -> vector<16x32xf32>
      %c0_146 = arith.constant 0 : index
      %c0_147 = arith.constant 0 : index
      %362 = vector.load %arg12[%c0_146, %c0_147] : memref<1x32xf32, #tpu.memory_space<vmem>>, vector<1x32xf32>
      %363 = vector.broadcast %362 : vector<1x32xf32> to vector<16x32xf32>
      %364 = arith.addf %361, %363 : vector<16x32xf32>
      %365 = arith.addf %350, %364 : vector<16x32xf32>
      %cst_148 = arith.constant dense<0.000000e+00> : vector<16xf32>
      %366 = vector.multi_reduction <add>, %365, %cst_148 [1] : vector<16x32xf32> to vector<16xf32>
      %367 = vector.shape_cast %366 : vector<16xf32> to vector<16x1xf32>
      %368 = arith.mulf %365, %365 : vector<16x32xf32>
      %cst_149 = arith.constant dense<0.000000e+00> : vector<16xf32>
      %369 = vector.multi_reduction <add>, %368, %cst_149 [1] : vector<16x32xf32> to vector<16xf32>
      %370 = vector.shape_cast %369 : vector<16xf32> to vector<16x1xf32>
      %cst_150 = arith.constant 3.125000e-02 : f32
      %371 = vector.broadcast %cst_150 : f32 to vector<16x1xf32>
      %372 = arith.mulf %367, %371 : vector<16x1xf32>
      %cst_151 = arith.constant 3.125000e-02 : f32
      %373 = vector.broadcast %cst_151 : f32 to vector<16x1xf32>
      %374 = arith.mulf %370, %373 : vector<16x1xf32>
      %375 = arith.mulf %372, %372 : vector<16x1xf32>
      %376 = arith.subf %374, %375 : vector<16x1xf32>
      %cst_152 = arith.constant 0.000000e+00 : f32
      %377 = vector.broadcast %cst_152 : f32 to vector<16x1xf32>
      %378 = arith.maximumf %376, %377 : vector<16x1xf32>
      %379 = vector.broadcast %372 : vector<16x1xf32> to vector<16x32xf32>
      %380 = arith.subf %365, %379 : vector<16x32xf32>
      %cst_153 = arith.constant 9.99999974E-6 : f32
      %381 = vector.broadcast %cst_153 : f32 to vector<16x1xf32>
      %382 = arith.addf %378, %381 : vector<16x1xf32>
      %383 = math.rsqrt %382 : vector<16x1xf32>
      %384 = vector.broadcast %383 : vector<16x1xf32> to vector<16x32xf32>
      %385 = arith.mulf %380, %384 : vector<16x32xf32>
      %c2_154 = arith.constant 2 : index
      %c0_155 = arith.constant 0 : index
      %c0_156 = arith.constant 0 : index
      %386 = vector.load %arg13[%c2_154, %c0_155, %c0_156] : memref<3x1x32xf32, #tpu.memory_space<vmem>>, vector<1x1x32xf32>
      %387 = vector.shape_cast %386 : vector<1x1x32xf32> to vector<1x32xf32>
      %388 = vector.broadcast %387 : vector<1x32xf32> to vector<16x32xf32>
      %389 = arith.mulf %385, %388 : vector<16x32xf32>
      %c2_157 = arith.constant 2 : index
      %c0_158 = arith.constant 0 : index
      %c0_159 = arith.constant 0 : index
      %390 = vector.load %arg14[%c2_157, %c0_158, %c0_159] : memref<3x1x32xf32, #tpu.memory_space<vmem>>, vector<1x1x32xf32>
      %391 = vector.shape_cast %390 : vector<1x1x32xf32> to vector<1x32xf32>
      %392 = vector.broadcast %391 : vector<1x32xf32> to vector<16x32xf32>
      %393 = arith.addf %389, %392 : vector<16x32xf32>
      %394 = vector.shape_cast %393 : vector<16x32xf32> to vector<2x8x32xf32>
      %395 = vector.extract_strided_slice %394 {offsets = [0, 0, 0], sizes = [2, 1, 32], strides = [1, 1, 1]} : vector<2x8x32xf32> to vector<2x1x32xf32>
      %396 = vector.shape_cast %395 : vector<2x1x32xf32> to vector<2x32xf32>
      %397 = arith.truncf %396 : vector<2x32xf32> to vector<2x32xbf16>
      %398 = arith.index_cast %230 : i32 to index
      %c0_160 = arith.constant 0 : index
      %c0_161 = arith.constant 0 : index
      %399 = vector.load %arg15[%398, %c0_160, %c0_161] : memref<4x2x256xbf16, #tpu.memory_space<vmem>>, vector<1x2x32xbf16>
      %400 = vector.shape_cast %399 : vector<1x2x32xbf16> to vector<2x32xbf16>
      %401 = vector.shape_cast %397 : vector<2x32xbf16> to vector<1x2x32xbf16>
      tpu.vector_store %arg15[%398, %c0_160, %c0_161], %401 {strides = array<i32>} : memref<4x2x256xbf16, #tpu.memory_space<vmem>>, vector<1x2x32xbf16>,
      %402 = vector.extract_strided_slice %394 {offsets = [0, 1, 0], sizes = [2, 1, 32], strides = [1, 1, 1]} : vector<2x8x32xf32> to vector<2x1x32xf32>
      %403 = vector.shape_cast %402 : vector<2x1x32xf32> to vector<2x32xf32>
      %404 = arith.truncf %403 : vector<2x32xf32> to vector<2x32xbf16>
      %405 = arith.index_cast %230 : i32 to index
      %c0_162 = arith.constant 0 : index
      %c32_163 = arith.constant 32 : index
      %406 = vector.load %arg15[%405, %c0_162, %c32_163] : memref<4x2x256xbf16, #tpu.memory_space<vmem>>, vector<1x2x32xbf16>
      %407 = vector.shape_cast %406 : vector<1x2x32xbf16> to vector<2x32xbf16>
      %408 = vector.shape_cast %404 : vector<2x32xbf16> to vector<1x2x32xbf16>
      tpu.vector_store %arg15[%405, %c0_162, %c32_163], %408 {strides = array<i32>} : memref<4x2x256xbf16, #tpu.memory_space<vmem>>, vector<1x2x32xbf16>,
      %409 = vector.extract_strided_slice %394 {offsets = [0, 2, 0], sizes = [2, 1, 32], strides = [1, 1, 1]} : vector<2x8x32xf32> to vector<2x1x32xf32>
      %410 = vector.shape_cast %409 : vector<2x1x32xf32> to vector<2x32xf32>
      %411 = arith.truncf %410 : vector<2x32xf32> to vector<2x32xbf16>
      %412 = arith.index_cast %230 : i32 to index
      %c0_164 = arith.constant 0 : index
      %c64_165 = arith.constant 64 : index
      %413 = vector.load %arg15[%412, %c0_164, %c64_165] : memref<4x2x256xbf16, #tpu.memory_space<vmem>>, vector<1x2x32xbf16>
      %414 = vector.shape_cast %413 : vector<1x2x32xbf16> to vector<2x32xbf16>
      %415 = vector.shape_cast %411 : vector<2x32xbf16> to vector<1x2x32xbf16>
      tpu.vector_store %arg15[%412, %c0_164, %c64_165], %415 {strides = array<i32>} : memref<4x2x256xbf16, #tpu.memory_space<vmem>>, vector<1x2x32xbf16>,
      %416 = vector.extract_strided_slice %394 {offsets = [0, 3, 0], sizes = [2, 1, 32], strides = [1, 1, 1]} : vector<2x8x32xf32> to vector<2x1x32xf32>
      %417 = vector.shape_cast %416 : vector<2x1x32xf32> to vector<2x32xf32>
      %418 = arith.truncf %417 : vector<2x32xf32> to vector<2x32xbf16>
      %419 = arith.index_cast %230 : i32 to index
      %c0_166 = arith.constant 0 : index
      %c96_167 = arith.constant 96 : index
      %420 = vector.load %arg15[%419, %c0_166, %c96_167] : memref<4x2x256xbf16, #tpu.memory_space<vmem>>, vector<1x2x32xbf16>
      %421 = vector.shape_cast %420 : vector<1x2x32xbf16> to vector<2x32xbf16>
      %422 = vector.shape_cast %418 : vector<2x32xbf16> to vector<1x2x32xbf16>
      tpu.vector_store %arg15[%419, %c0_166, %c96_167], %422 {strides = array<i32>} : memref<4x2x256xbf16, #tpu.memory_space<vmem>>, vector<1x2x32xbf16>,
      %423 = vector.extract_strided_slice %394 {offsets = [0, 4, 0], sizes = [2, 1, 32], strides = [1, 1, 1]} : vector<2x8x32xf32> to vector<2x1x32xf32>
      %424 = vector.shape_cast %423 : vector<2x1x32xf32> to vector<2x32xf32>
      %425 = arith.truncf %424 : vector<2x32xf32> to vector<2x32xbf16>
      %426 = arith.index_cast %230 : i32 to index
      %c0_168 = arith.constant 0 : index
      %c128_169 = arith.constant 128 : index
      %427 = vector.load %arg15[%426, %c0_168, %c128_169] : memref<4x2x256xbf16, #tpu.memory_space<vmem>>, vector<1x2x32xbf16>
      %428 = vector.shape_cast %427 : vector<1x2x32xbf16> to vector<2x32xbf16>
      %429 = vector.shape_cast %425 : vector<2x32xbf16> to vector<1x2x32xbf16>
      tpu.vector_store %arg15[%426, %c0_168, %c128_169], %429 {strides = array<i32>} : memref<4x2x256xbf16, #tpu.memory_space<vmem>>, vector<1x2x32xbf16>,
      %430 = vector.extract_strided_slice %394 {offsets = [0, 5, 0], sizes = [2, 1, 32], strides = [1, 1, 1]} : vector<2x8x32xf32> to vector<2x1x32xf32>
      %431 = vector.shape_cast %430 : vector<2x1x32xf32> to vector<2x32xf32>
      %432 = arith.truncf %431 : vector<2x32xf32> to vector<2x32xbf16>
      %433 = arith.index_cast %230 : i32 to index
      %c0_170 = arith.constant 0 : index
      %c160_171 = arith.constant 160 : index
      %434 = vector.load %arg15[%433, %c0_170, %c160_171] : memref<4x2x256xbf16, #tpu.memory_space<vmem>>, vector<1x2x32xbf16>
      %435 = vector.shape_cast %434 : vector<1x2x32xbf16> to vector<2x32xbf16>
      %436 = vector.shape_cast %432 : vector<2x32xbf16> to vector<1x2x32xbf16>
      tpu.vector_store %arg15[%433, %c0_170, %c160_171], %436 {strides = array<i32>} : memref<4x2x256xbf16, #tpu.memory_space<vmem>>, vector<1x2x32xbf16>,
      %437 = vector.extract_strided_slice %394 {offsets = [0, 6, 0], sizes = [2, 1, 32], strides = [1, 1, 1]} : vector<2x8x32xf32> to vector<2x1x32xf32>
      %438 = vector.shape_cast %437 : vector<2x1x32xf32> to vector<2x32xf32>
      %439 = arith.truncf %438 : vector<2x32xf32> to vector<2x32xbf16>
      %440 = arith.index_cast %230 : i32 to index
      %c0_172 = arith.constant 0 : index
      %c192_173 = arith.constant 192 : index
      %441 = vector.load %arg15[%440, %c0_172, %c192_173] : memref<4x2x256xbf16, #tpu.memory_space<vmem>>, vector<1x2x32xbf16>
      %442 = vector.shape_cast %441 : vector<1x2x32xbf16> to vector<2x32xbf16>
      %443 = vector.shape_cast %439 : vector<2x32xbf16> to vector<1x2x32xbf16>
      tpu.vector_store %arg15[%440, %c0_172, %c192_173], %443 {strides = array<i32>} : memref<4x2x256xbf16, #tpu.memory_space<vmem>>, vector<1x2x32xbf16>,
      %444 = vector.extract_strided_slice %394 {offsets = [0, 7, 0], sizes = [2, 1, 32], strides = [1, 1, 1]} : vector<2x8x32xf32> to vector<2x1x32xf32>
      %445 = vector.shape_cast %444 : vector<2x1x32xf32> to vector<2x32xf32>
      %446 = arith.truncf %445 : vector<2x32xf32> to vector<2x32xbf16>
      %447 = arith.index_cast %230 : i32 to index
      %c0_174 = arith.constant 0 : index
      %c224_175 = arith.constant 224 : index
      %448 = vector.load %arg15[%447, %c0_174, %c224_175] : memref<4x2x256xbf16, #tpu.memory_space<vmem>>, vector<1x2x32xbf16>
      %449 = vector.shape_cast %448 : vector<1x2x32xbf16> to vector<2x32xbf16>
      %450 = vector.shape_cast %446 : vector<2x32xbf16> to vector<1x2x32xbf16>
      tpu.vector_store %arg15[%447, %c0_174, %c224_175], %450 {strides = array<i32>} : memref<4x2x256xbf16, #tpu.memory_space<vmem>>, vector<1x2x32xbf16>,
      scf.yield %393 : vector<16x32xf32>
    }
    %c2_i32_3 = arith.constant 2 : i32
    %c0_4 = arith.constant 0 : index
    %c0_5 = arith.constant 0 : index
    %6 = vector.load %arg16[%c0_4, %c0_5] : memref<16x32xf32, #tpu.memory_space<vmem>>, vector<16x32xf32>
    tpu.vector_store %arg16[%c0_4, %c0_5], %5 {strides = array<i32>} : memref<16x32xf32, #tpu.memory_space<vmem>>, vector<16x32xf32>,
    return
  }
  func.func @transform_0(%arg0: i32, %arg1: i32) -> (i32, i32, i32) {
    %c0_i32 = arith.constant 0 : i32
    %c0_i32_0 = arith.constant 0 : i32
    return %arg1, %arg0, %c0_i32 : i32, i32, i32
  }
  func.func @transform_1(%arg0: i32, %arg1: i32) -> (i32, i32) {
    %c0_i32 = arith.constant 0 : i32
    %c0_i32_0 = arith.constant 0 : i32
    return %arg0, %c0_i32 : i32, i32
  }
  func.func @transform_2(%arg0: i32, %arg1: i32) -> (i32, i32) {
    %c0_i32 = arith.constant 0 : i32
    %c0_i32_0 = arith.constant 0 : i32
    %c0_i32_1 = arith.constant 0 : i32
    return %c0_i32, %c0_i32_0 : i32, i32
  }
  func.func @transform_3(%arg0: i32, %arg1: i32) -> (i32, i32) {
    %c0_i32 = arith.constant 0 : i32
    %c0_i32_0 = arith.constant 0 : i32
    %c0_i32_1 = arith.constant 0 : i32
    return %c0_i32, %c0_i32_0 : i32, i32
  }
  func.func @transform_4(%arg0: i32, %arg1: i32) -> (i32, i32) {
    %c0_i32 = arith.constant 0 : i32
    %c0_i32_0 = arith.constant 0 : i32
    %c0_i32_1 = arith.constant 0 : i32
    return %c0_i32, %c0_i32_0 : i32, i32
  }
  func.func @transform_5(%arg0: i32, %arg1: i32) -> (i32, i32) {
    %c0_i32 = arith.constant 0 : i32
    %c0_i32_0 = arith.constant 0 : i32
    %c0_i32_1 = arith.constant 0 : i32
    return %c0_i32, %c0_i32_0 : i32, i32
  }
  func.func @transform_6(%arg0: i32, %arg1: i32) -> (i32, i32) {
    %c0_i32 = arith.constant 0 : i32
    %c0_i32_0 = arith.constant 0 : i32
    %c0_i32_1 = arith.constant 0 : i32
    return %c0_i32, %c0_i32_0 : i32, i32
  }
  func.func @transform_7(%arg0: i32, %arg1: i32) -> (i32, i32) {
    %c0_i32 = arith.constant 0 : i32
    %c0_i32_0 = arith.constant 0 : i32
    %c0_i32_1 = arith.constant 0 : i32
    return %c0_i32, %c0_i32_0 : i32, i32
  }
  func.func @transform_8(%arg0: i32, %arg1: i32) -> (i32, i32) {
    %c0_i32 = arith.constant 0 : i32
    %c0_i32_0 = arith.constant 0 : i32
    %c0_i32_1 = arith.constant 0 : i32
    return %c0_i32, %c0_i32_0 : i32, i32
  }
  func.func @transform_9(%arg0: i32, %arg1: i32) -> (i32, i32) {
    %c0_i32 = arith.constant 0 : i32
    %c0_i32_0 = arith.constant 0 : i32
    %c0_i32_1 = arith.constant 0 : i32
    return %c0_i32, %c0_i32_0 : i32, i32
  }
  func.func @transform_10(%arg0: i32, %arg1: i32) -> (i32, i32) {
    %c0_i32 = arith.constant 0 : i32
    %c0_i32_0 = arith.constant 0 : i32
    %c0_i32_1 = arith.constant 0 : i32
    return %c0_i32, %c0_i32_0 : i32, i32
  }
  func.func @transform_11(%arg0: i32, %arg1: i32) -> (i32, i32, i32) {
    %c0_i32 = arith.constant 0 : i32
    %c0_i32_0 = arith.constant 0 : i32
    %c0_i32_1 = arith.constant 0 : i32
    %c0_i32_2 = arith.constant 0 : i32
    return %c0_i32, %c0_i32_0, %c0_i32_1 : i32, i32, i32
  }
  func.func @transform_12(%arg0: i32, %arg1: i32) -> (i32, i32, i32) {
    %c0_i32 = arith.constant 0 : i32
    %c0_i32_0 = arith.constant 0 : i32
    %c0_i32_1 = arith.constant 0 : i32
    %c0_i32_2 = arith.constant 0 : i32
    return %c0_i32, %c0_i32_0, %c0_i32_1 : i32, i32, i32
  }
  func.func @transform_13(%arg0: i32, %arg1: i32) -> (i32, i32, i32) {
    %c0_i32 = arith.constant 0 : i32
    %c0_i32_0 = arith.constant 0 : i32
    return %arg1, %arg0, %c0_i32 : i32, i32, i32
  }
}

</mosaic_0001>

<llo_original>
// kernel: tpu_custom_call.1
$region0: #{tpu_custom_call.1}
  #allocation0 [shape = 'u32[]', space=smem, size = 0x4, offset = 0x4, fixed_abs, tag = 'smem constant byte address 0x4 - core index']
  #allocation1 [shape = 'u32[144,128]{1,0:T(1,128)}', space=vmem, size = 0x12000, scoped, tag = 'internal scratch']
  #allocation2 [shape = 'f32[16,32]{1,0:T(8,128)}', space=vmem, size = 0x2000, scoped, tag = 'scratch operand']
  %s0 = inlined_call_operand.hbm [shape: bf16[8,32,32], index: 0, kind: input, shape index: {}]
  %s1 = inlined_call_operand.hbm [shape: f32[16,32], index: 1, kind: input, shape index: {}]
  %s2 = inlined_call_operand.hbm [shape: bf16[32,96], index: 2, kind: input, shape index: {}]
  %s3 = inlined_call_operand.hbm [shape: bf16[32,32], index: 3, kind: input, shape index: {}]
  %s4 = inlined_call_operand.hbm [shape: bf16[32,32], index: 4, kind: input, shape index: {}]
  %s5 = inlined_call_operand.hbm [shape: bf16[32,64], index: 5, kind: input, shape index: {}]
  %s6 = inlined_call_operand.hbm [shape: bf16[32,32], index: 6, kind: input, shape index: {}]
  %s7 = inlined_call_operand.hbm [shape: bf16[32,64], index: 7, kind: input, shape index: {}]
  %s8 = inlined_call_operand.hbm [shape: f32[1,64], index: 8, kind: input, shape index: {}]
  %s9 = inlined_call_operand.hbm [shape: bf16[64,32], index: 9, kind: input, shape index: {}]
  %s10 = inlined_call_operand.hbm [shape: f32[1,32], index: 10, kind: input, shape index: {}]
  %s11 = inlined_call_operand.hbm [shape: f32[3,1,32], index: 11, kind: input, shape index: {}]
  %s12 = inlined_call_operand.hbm [shape: f32[3,1,32], index: 12, kind: input, shape index: {}]
  %s13 = inlined_call_operand.hbm [shape: bf16[8,2,256], index: 13, kind: output, shape index: {}]
  %s14 = sld [smem:[#allocation0]]
  $region148: #{tpu_custom_call.1} parent=0
    _
  %s16 = ssub.s32 1, %s14
  %s17 = scalar_select 0, %s16, %s14
  $region1: #{tpu_custom_call.1} parent=0
    #allocation3 [shape = 'u8[65536]{0}', space=vmem, size = 0x10000, scoped, tag = 'input window, operand 0']
    #allocation4 [shape = 's32[2]{0}', space=sflag, size = 0x8, scoped, tag = 'scoped memory for tpu_custom_call.1']
    #allocation5 [shape = 's32[2]{0}', space=sflag, size = 0x8, scoped, tag = 'scoped memory for tpu_custom_call.1']
    #allocation6 [shape = 'u8[8192]{0}', space=vmem, size = 0x2000, scoped, tag = 'input window, operand 1, single buffered']
    #allocation7 [shape = 's32[1]{0}', space=sflag, size = 0x4, scoped, tag = 'scoped memory for tpu_custom_call.1']
    #allocation8 [shape = 'u8[8192]{0}', space=vmem, size = 0x2000, scoped, tag = 'input window, operand 2, single buffered']
    #allocation9 [shape = 'u8[8192]{0}', space=vmem, size = 0x2000, scoped, tag = 'input window, operand 3, single buffered']
    #allocation10 [shape = 's32[1]{0}', space=sflag, size = 0x4, scoped, tag = 'scoped memory for tpu_custom_call.1']
    #allocation11 [shape = 'u8[8192]{0}', space=vmem, size = 0x2000, scoped, tag = 'input window, operand 4, single buffered']
    #allocation12 [shape = 'u8[8192]{0}', space=vmem, size = 0x2000, scoped, tag = 'input window, operand 5, single buffered']
    #allocation13 [shape = 's32[1]{0}', space=sflag, size = 0x4, scoped, tag = 'scoped memory for tpu_custom_call.1']
    #allocation14 [shape = 'u8[8192]{0}', space=vmem, size = 0x2000, scoped, tag = 'input window, operand 6, single buffered']
    #allocation15 [shape = 'u8[8192]{0}', space=vmem, size = 0x2000, scoped, tag = 'input window, operand 7, single buffered']
    #allocation16 [shape = 's32[1]{0}', space=sflag, size = 0x4, scoped, tag = 'scoped memory for tpu_custom_call.1']
    #allocation17 [shape = 'u8[512]{0}', space=vmem, size = 0x400, scoped, tag = 'input window, operand 8, single buffered']
    #allocation18 [shape = 'u8[16384]{0}', space=vmem, size = 0x4000, scoped, tag = 'input window, operand 9, single buffered']
    #allocation19 [shape = 's32[1]{0}', space=sflag, size = 0x4, scoped, tag = 'scoped memory for tpu_custom_call.1']
    #allocation20 [shape = 'u8[512]{0}', space=vmem, size = 0x400, scoped, tag = 'input window, operand 10, single buffered']
    #allocation21 [shape = 'u8[1536]{0}', space=vmem, size = 0x800, scoped, tag = 'input window, operand 11, single buffered']
    #allocation22 [shape = 's32[1]{0}', space=sflag, size = 0x4, scoped, tag = 'scoped memory for tpu_custom_call.1']
    #allocation23 [shape = 'u8[1536]{0}', space=vmem, size = 0x800, scoped, tag = 'input window, operand 12, single buffered']
    #allocation24 [shape = 'u8[8192]{0}', space=vmem, size = 0x2000, scoped, tag = 'output window, operand 0']
    %18 = vsyncpa [#allocation4], 0
    %s19 = scalar_lea.sflag [#allocation4], 1
    %20 = vsyncpa %s19, 0
    %21 = vsyncpa [#allocation7], 0
    %22 = vsyncpa [#allocation10], 0
    %23 = vsyncpa [#allocation13], 0
    %24 = vsyncpa [#allocation16], 0
    %25 = vsyncpa [#allocation19], 0
    %26 = vsyncpa [#allocation22], 0
    %27 = vsyncpa [#allocation5], 0
    %s28 = scalar_lea.sflag [#allocation5], 1
    %29 = vsyncpa %s28, 0
    loop: start=0, step=1, limit=4
    $region2: #{tpu_custom_call.1} parent=1 // loop_pre_header
      _
    $region3: #{tpu_custom_call.1} parent=1 // loop_header
      %s31 = sphi 0, %s35
      %p32 = scmp.ge.s32.totalorder %s31, 4
      %s38 = sphi 0, %s50
      %s39 = sphi 0, %s46
      %s40 = sphi 0, %s38
      %s41 = sphi 0, %s39
      %s42 = sphi 0, %s40
      %s43 = sphi 0, %s41
      %s55 = sphi 0, %s57
      %s58 = sphi 0, %s55
      %s59 = sphi 0, %s58
      %s75 = sphi 0, %s59
      %s81 = sphi 0, %s83
      %s84 = sphi 0, %s81
      %s85 = sphi 0, %s84
      %s101 = sphi 0, %s85
      %s105 = sphi 0, %s105
      %s107 = sphi 0, %s105
      %s108 = sphi 0, %s107
      %s122 = sphi 0, %s108
      %s126 = sphi 0, %s126
      %s128 = sphi 0, %s126
      %s129 = sphi 0, %s128
      %s143 = sphi 0, %s129
      %s147 = sphi 0, %s147
      %s149 = sphi 0, %s147
      %s150 = sphi 0, %s149
      %s164 = sphi 0, %s150
      %s168 = sphi 0, %s168
      %s170 = sphi 0, %s168
      %s171 = sphi 0, %s170
      %s185 = sphi 0, %s171
      %s189 = sphi 0, %s189
      %s191 = sphi 0, %s189
      %s192 = sphi 0, %s191
      %s206 = sphi 0, %s192
      %s210 = sphi 0, %s210
      %s212 = sphi 0, %s210
      %s213 = sphi 0, %s212
      %s227 = sphi 0, %s213
      %s231 = sphi 0, %s231
      %s233 = sphi 0, %s231
      %s234 = sphi 0, %s233
      %s248 = sphi 0, %s234
      %s252 = sphi 0, %s252
      %s254 = sphi 0, %s252
      %s255 = sphi 0, %s254
      %s269 = sphi 0, %s255
      %s273 = sphi 0, %s273
      %s275 = sphi 0, %s273
      %s276 = sphi 0, %s275
      %s290 = sphi 0, %s276
      %s294 = sphi 0, %s294
      %s296 = sphi 0, %s294
      %s297 = sphi 0, %s296
      %s311 = sphi 0, %s297
      %s315 = sphi 0, %s315
      %s317 = sphi 0, %s315
      %s318 = sphi 0, %s317
      %s332 = sphi 0, %s318
      %s340 = sphi 0, %s342
      %s343 = sphi 0, %s340
      %s344 = sphi 0, %s343
      %s360 = sphi 0, %s344
    $region4: #{tpu_custom_call.1} parent=1 // loop_header_branch
      %34 = sbr.rel (%p32) target = $region8
    $region5: #{tpu_custom_call.1} parent=1 // loop_body
      %s36 = ssub.s32 %s31, 1
      %s37 = ssub.s32 %s31, 2
      %s44 = sadd.s32 1, %s39
      %p45 = scmp.ge.s32.totalorder %s44, 2
      %s46 = scalar_select %p45, 0, %s44
      %s47 = sadd.s32 1, %s38
      %s48 = scalar_select %p45, %s47, %s38
      %p49 = scmp.ge.s32.totalorder %s48, 1
      %s50 = scalar_select %p49, 0, %s48
      %s51 = ssub.s32 %s39, %s46
      %s52 = ssub.s32 %s38, %s50
      %s53 = sor.u32 %s51, %s52
      %p54 = scmp.eq.s32.totalorder %s53, 0
      %s56 = sadd.s32 %s55, 1
      %s57 = scalar_select %p54, %s55, %s56
      %p60 = pneg %p54
      %p61 = scmp.eq.s32.totalorder %s31, 1
      %p62 = por %p60, %p61
      %p63 = scmp.ne.s32.totalorder %s55, %s58
      %p64 = scmp.eq.s32.totalorder %s31, 0
      %p65 = por %p63, %p64
      %p66 = scmp.ne.s32.totalorder %s55, %s58
      %p67 = scmp.eq.s32.totalorder %s36, 1
      %p68 = por %p66, %p67
      %p69 = scmp.ne.s32.totalorder %s58, %s59
      %p70 = scmp.eq.s32.totalorder %s36, 0
      %p71 = por %p69, %p70
      %p72 = scmp.ne.s32.totalorder %s58, %s59
      %p73 = scmp.eq.s32.totalorder %s37, 1
      %p74 = por %p72, %p73
      %p76 = scmp.ne.s32.totalorder %s59, %s75
      %p77 = scmp.eq.s32.totalorder %s37, 0
      %p78 = por %p76, %p77
      %s79 = ssub.s32 %s38, %s50
      %p80 = scmp.eq.s32.totalorder %s79, 0
      %s82 = sadd.s32 %s81, 1
      %s83 = scalar_select %p80, %s81, %s82
      %p86 = pneg %p80
      %p87 = scmp.eq.s32.totalorder %s31, 1
      %p88 = por %p86, %p87
      %p89 = scmp.ne.s32.totalorder %s81, %s84
      %p90 = scmp.eq.s32.totalorder %s31, 0
      %p91 = por %p89, %p90
      %p92 = scmp.ne.s32.totalorder %s81, %s84
      %p93 = scmp.eq.s32.totalorder %s36, 1
      %p94 = por %p92, %p93
      %p95 = scmp.ne.s32.totalorder %s84, %s85
      %p96 = scmp.eq.s32.totalorder %s36, 0
      %p97 = por %p95, %p96
      %p98 = scmp.ne.s32.totalorder %s84, %s85
      %p99 = scmp.eq.s32.totalorder %s37, 1
      %p100 = por %p98, %p99
      %p102 = scmp.ne.s32.totalorder %s85, %s101
      %p103 = scmp.eq.s32.totalorder %s37, 0
      %p104 = por %p102, %p103
      %s106 = sadd.s32 %s105, 1
      %p109 = scmp.eq.s32.totalorder %s31, 1
      %p110 = scmp.ne.s32.totalorder %s105, %s107
      %p111 = scmp.eq.s32.totalorder %s31, 0
      %p112 = por %p110, %p111
      %p113 = scmp.ne.s32.totalorder %s105, %s107
      %p114 = scmp.eq.s32.totalorder %s36, 1
      %p115 = por %p113, %p114
      %p116 = scmp.ne.s32.totalorder %s107, %s108
      %p117 = scmp.eq.s32.totalorder %s36, 0
      %p118 = por %p116, %p117
      %p119 = scmp.ne.s32.totalorder %s107, %s108
      %p120 = scmp.eq.s32.totalorder %s37, 1
      %p121 = por %p119, %p120
      %p123 = scmp.ne.s32.totalorder %s108, %s122
      %p124 = scmp.eq.s32.totalorder %s37, 0
      %p125 = por %p123, %p124
      %s127 = sadd.s32 %s126, 1
      %p130 = scmp.eq.s32.totalorder %s31, 1
      %p131 = scmp.ne.s32.totalorder %s126, %s128
      %p132 = scmp.eq.s32.totalorder %s31, 0
      %p133 = por %p131, %p132
      %p134 = scmp.ne.s32.totalorder %s126, %s128
      %p135 = scmp.eq.s32.totalorder %s36, 1
      %p136 = por %p134, %p135
      %p137 = scmp.ne.s32.totalorder %s128, %s129
      %p138 = scmp.eq.s32.totalorder %s36, 0
      %p139 = por %p137, %p138
      %p140 = scmp.ne.s32.totalorder %s128, %s129
      %p141 = scmp.eq.s32.totalorder %s37, 1
      %p142 = por %p140, %p141
      %p144 = scmp.ne.s32.totalorder %s129, %s143
      %p145 = scmp.eq.s32.totalorder %s37, 0
      %p146 = por %p144, %p145
      %s148 = sadd.s32 %s147, 1
      %p151 = scmp.eq.s32.totalorder %s31, 1
      %p152 = scmp.ne.s32.totalorder %s147, %s149
      %p153 = scmp.eq.s32.totalorder %s31, 0
      %p154 = por %p152, %p153
      %p155 = scmp.ne.s32.totalorder %s147, %s149
      %p156 = scmp.eq.s32.totalorder %s36, 1
      %p157 = por %p155, %p156
      %p158 = scmp.ne.s32.totalorder %s149, %s150
      %p159 = scmp.eq.s32.totalorder %s36, 0
      %p160 = por %p158, %p159
      %p161 = scmp.ne.s32.totalorder %s149, %s150
      %p162 = scmp.eq.s32.totalorder %s37, 1
      %p163 = por %p161, %p162
      %p165 = scmp.ne.s32.totalorder %s150, %s164
      %p166 = scmp.eq.s32.totalorder %s37, 0
      %p167 = por %p165, %p166
      %s169 = sadd.s32 %s168, 1
      %p172 = scmp.eq.s32.totalorder %s31, 1
      %p173 = scmp.ne.s32.totalorder %s168, %s170
      %p174 = scmp.eq.s32.totalorder %s31, 0
      %p175 = por %p173, %p174
      %p176 = scmp.ne.s32.totalorder %s168, %s170
      %p177 = scmp.eq.s32.totalorder %s36, 1
      %p178 = por %p176, %p177
      %p179 = scmp.ne.s32.totalorder %s170, %s171
      %p180 = scmp.eq.s32.totalorder %s36, 0
      %p181 = por %p179, %p180
      %p182 = scmp.ne.s32.totalorder %s170, %s171
      %p183 = scmp.eq.s32.totalorder %s37, 1
      %p184 = por %p182, %p183
      %p186 = scmp.ne.s32.totalorder %s171, %s185
      %p187 = scmp.eq.s32.totalorder %s37, 0
      %p188 = por %p186, %p187
      %s190 = sadd.s32 %s189, 1
      %p193 = scmp.eq.s32.totalorder %s31, 1
      %p194 = scmp.ne.s32.totalorder %s189, %s191
      %p195 = scmp.eq.s32.totalorder %s31, 0
      %p196 = por %p194, %p195
      %p197 = scmp.ne.s32.totalorder %s189, %s191
      %p198 = scmp.eq.s32.totalorder %s36, 1
      %p199 = por %p197, %p198
      %p200 = scmp.ne.s32.totalorder %s191, %s192
      %p201 = scmp.eq.s32.totalorder %s36, 0
      %p202 = por %p200, %p201
      %p203 = scmp.ne.s32.totalorder %s191, %s192
      %p204 = scmp.eq.s32.totalorder %s37, 1
      %p205 = por %p203, %p204
      %p207 = scmp.ne.s32.totalorder %s192, %s206
      %p208 = scmp.eq.s32.totalorder %s37, 0
      %p209 = por %p207, %p208
      %s211 = sadd.s32 %s210, 1
      %p214 = scmp.eq.s32.totalorder %s31, 1
      %p215 = scmp.ne.s32.totalorder %s210, %s212
      %p216 = scmp.eq.s32.totalorder %s31, 0
      %p217 = por %p215, %p216
      %p218 = scmp.ne.s32.totalorder %s210, %s212
      %p219 = scmp.eq.s32.totalorder %s36, 1
      %p220 = por %p218, %p219
      %p221 = scmp.ne.s32.totalorder %s212, %s213
      %p222 = scmp.eq.s32.totalorder %s36, 0
      %p223 = por %p221, %p222
      %p224 = scmp.ne.s32.totalorder %s212, %s213
      %p225 = scmp.eq.s32.totalorder %s37, 1
      %p226 = por %p224, %p225
      %p228 = scmp.ne.s32.totalorder %s213, %s227
      %p229 = scmp.eq.s32.totalorder %s37, 0
      %p230 = por %p228, %p229
      %s232 = sadd.s32 %s231, 1
      %p235 = scmp.eq.s32.totalorder %s31, 1
      %p236 = scmp.ne.s32.totalorder %s231, %s233
      %p237 = scmp.eq.s32.totalorder %s31, 0
      %p238 = por %p236, %p237
      %p239 = scmp.ne.s32.totalorder %s231, %s233
      %p240 = scmp.eq.s32.totalorder %s36, 1
      %p241 = por %p239, %p240
      %p242 = scmp.ne.s32.totalorder %s233, %s234
      %p243 = scmp.eq.s32.totalorder %s36, 0
      %p244 = por %p242, %p243
      %p245 = scmp.ne.s32.totalorder %s233, %s234
      %p246 = scmp.eq.s32.totalorder %s37, 1
      %p247 = por %p245, %p246
      %p249 = scmp.ne.s32.totalorder %s234, %s248
      %p250 = scmp.eq.s32.totalorder %s37, 0
      %p251 = por %p249, %p250
      %s253 = sadd.s32 %s252, 1
      %p256 = scmp.eq.s32.totalorder %s31, 1
      %p257 = scmp.ne.s32.totalorder %s252, %s254
      %p258 = scmp.eq.s32.totalorder %s31, 0
      %p259 = por %p257, %p258
      %p260 = scmp.ne.s32.totalorder %s252, %s254
      %p261 = scmp.eq.s32.totalorder %s36, 1
      %p262 = por %p260, %p261
      %p263 = scmp.ne.s32.totalorder %s254, %s255
      %p264 = scmp.eq.s32.totalorder %s36, 0
      %p265 = por %p263, %p264
      %p266 = scmp.ne.s32.totalorder %s254, %s255
      %p267 = scmp.eq.s32.totalorder %s37, 1
      %p268 = por %p266, %p267
      %p270 = scmp.ne.s32.totalorder %s255, %s269
      %p271 = scmp.eq.s32.totalorder %s37, 0
      %p272 = por %p270, %p271
      %s274 = sadd.s32 %s273, 1
      %p277 = scmp.eq.s32.totalorder %s31, 1
      %p278 = scmp.ne.s32.totalorder %s273, %s275
      %p279 = scmp.eq.s32.totalorder %s31, 0
      %p280 = por %p278, %p279
      %p281 = scmp.ne.s32.totalorder %s273, %s275
      %p282 = scmp.eq.s32.totalorder %s36, 1
      %p283 = por %p281, %p282
      %p284 = scmp.ne.s32.totalorder %s275, %s276
      %p285 = scmp.eq.s32.totalorder %s36, 0
      %p286 = por %p284, %p285
      %p287 = scmp.ne.s32.totalorder %s275, %s276
      %p288 = scmp.eq.s32.totalorder %s37, 1
      %p289 = por %p287, %p288
      %p291 = scmp.ne.s32.totalorder %s276, %s290
      %p292 = scmp.eq.s32.totalorder %s37, 0
      %p293 = por %p291, %p292
      %s295 = sadd.s32 %s294, 1
      %p298 = scmp.eq.s32.totalorder %s31, 1
      %p299 = scmp.ne.s32.totalorder %s294, %s296
      %p300 = scmp.eq.s32.totalorder %s31, 0
      %p301 = por %p299, %p300
      %p302 = scmp.ne.s32.totalorder %s294, %s296
      %p303 = scmp.eq.s32.totalorder %s36, 1
      %p304 = por %p302, %p303
      %p305 = scmp.ne.s32.totalorder %s296, %s297
      %p306 = scmp.eq.s32.totalorder %s36, 0
      %p307 = por %p305, %p306
      %p308 = scmp.ne.s32.totalorder %s296, %s297
      %p309 = scmp.eq.s32.totalorder %s37, 1
      %p310 = por %p308, %p309
      %p312 = scmp.ne.s32.totalorder %s297, %s311
      %p313 = scmp.eq.s32.totalorder %s37, 0
      %p314 = por %p312, %p313
      %s316 = sadd.s32 %s315, 1
      %p319 = scmp.eq.s32.totalorder %s31, 1
      %p320 = scmp.ne.s32.totalorder %s315, %s317
      %p321 = scmp.eq.s32.totalorder %s31, 0
      %p322 = por %p320, %p321
      %p323 = scmp.ne.s32.totalorder %s315, %s317
      %p324 = scmp.eq.s32.totalorder %s36, 1
      %p325 = por %p323, %p324
      %p326 = scmp.ne.s32.totalorder %s317, %s318
      %p327 = scmp.eq.s32.totalorder %s36, 0
      %p328 = por %p326, %p327
      %p329 = scmp.ne.s32.totalorder %s317, %s318
      %p330 = scmp.eq.s32.totalorder %s37, 1
      %p331 = por %p329, %p330
      %p333 = scmp.ne.s32.totalorder %s318, %s332
      %p334 = scmp.eq.s32.totalorder %s37, 0
      %p335 = por %p333, %p334
      %s336 = ssub.s32 %s39, %s46
      %s337 = ssub.s32 %s38, %s50
      %s338 = sor.u32 %s336, %s337
      %p339 = scmp.eq.s32.totalorder %s338, 0
      %s341 = sadd.s32 %s340, 1
      %s342 = scalar_select %p339, %s340, %s341
      %p345 = pneg %p339
      %p346 = scmp.eq.s32.totalorder %s31, 1
      %p347 = por %p345, %p346
      %p348 = scmp.ne.s32.totalorder %s340, %s343
      %p349 = scmp.eq.s32.totalorder %s31, 0
      %p350 = por %p348, %p349
      %p351 = scmp.ne.s32.totalorder %s340, %s343
      %p352 = scmp.eq.s32.totalorder %s36, 1
      %p353 = por %p351, %p352
      %p354 = scmp.ne.s32.totalorder %s343, %s344
      %p355 = scmp.eq.s32.totalorder %s36, 0
      %p356 = por %p354, %p355
      %p357 = scmp.ne.s32.totalorder %s343, %s344
      %p358 = scmp.eq.s32.totalorder %s37, 1
      %p359 = por %p357, %p358
      %p361 = scmp.ne.s32.totalorder %s344, %s360
      %p362 = scmp.eq.s32.totalorder %s37, 0
      %p363 = por %p361, %p362
      %p364 = scmp.le.s32.totalorder 1, %s31
      %p365 = scmp.lt.s32.totalorder %s31, 3
      %p366 = pnand %p364, %p365
      %p367 = pneg %p366
      // Predicated region
      $region9: #{tpu_custom_call.1} parent=5 // pred_check
        _
      $region10: #{tpu_custom_call.1} parent=5 // pred_check_branch
        %369 = sbr.rel (%p366) target = $region12
      $region11: #{tpu_custom_call.1} parent=5 // pred_region
        %s370 = ssub.s32 %s31, 1
        // Predicated region
        $region13: #{tpu_custom_call.1} parent=11 // pred_check
          %p371 = pneg %p97
        $region14: #{tpu_custom_call.1} parent=11 // pred_check_branch
          %373 = sbr.rel (%p371) target = $region16
        $region15: #{tpu_custom_call.1} parent=11 // pred_region
          %s374 = smul.u32 2, %s40
          %s376 = ssub.s32 256, 256
          %377 = vsyncadd [#allocation7], %s376
          %s378 = smul.addr %s374, 128
          %s379 = scalar_lea.hbm %s1, %s378
          %s380 = sshll.u32 [#allocation6], 4
          %s381 = int_to_ptr.vmem [resolvable:$true] %s380
          %386 = dma.hbm_to_vmem [thread:$0]  %s379, 256, %s381, [#allocation7], 128, 128, 8
        $region16: #{tpu_custom_call.1} parent=11 // pred_fallthru
          _
        // Predicated region
        $region17: #{tpu_custom_call.1} parent=11 // pred_check
          %p387 = pneg %p118
        $region18: #{tpu_custom_call.1} parent=11 // pred_check_branch
          %389 = sbr.rel (%p387) target = $region20
        $region19: #{tpu_custom_call.1} parent=11 // pred_region
          %s391 = ssub.s32 256, 256
          %392 = vsyncadd [#allocation7], %s391
          %s393 = sshll.u32 [#allocation8], 4
          %s394 = int_to_ptr.vmem [resolvable:$true] %s393
          %399 = dma.hbm_to_vmem [thread:$0]  %s2, 256, %s394, [#allocation7], 64, 64, 4
        $region20: #{tpu_custom_call.1} parent=11 // pred_fallthru
          _
        // Predicated region
        $region21: #{tpu_custom_call.1} parent=11 // pred_check
          %p400 = pneg %p139
        $region22: #{tpu_custom_call.1} parent=11 // pred_check_branch
          %402 = sbr.rel (%p400) target = $region24
        $region23: #{tpu_custom_call.1} parent=11 // pred_region
          %s404 = ssub.s32 256, 256
          %405 = vsyncadd [#allocation10], %s404
          %s406 = sshll.u32 [#allocation9], 4
          %s407 = int_to_ptr.vmem [resolvable:$true] %s406
          %412 = dma.hbm_to_vmem [thread:$0]  %s3, 256, %s407, [#allocation10], 64, 64, 4
        $region24: #{tpu_custom_call.1} parent=11 // pred_fallthru
          _
        // Predicated region
        $region25: #{tpu_custom_call.1} parent=11 // pred_check
          %p413 = pneg %p160
        $region26: #{tpu_custom_call.1} parent=11 // pred_check_branch
          %415 = sbr.rel (%p413) target = $region28
        $region27: #{tpu_custom_call.1} parent=11 // pred_region
          %s417 = ssub.s32 256, 256
          %418 = vsyncadd [#allocation10], %s417
          %s419 = sshll.u32 [#allocation11], 4
          %s420 = int_to_ptr.vmem [resolvable:$true] %s419
          %425 = dma.hbm_to_vmem [thread:$0]  %s4, 256, %s420, [#allocation10], 64, 64, 4
        $region28: #{tpu_custom_call.1} parent=11 // pred_fallthru
          _
        // Predicated region
        $region29: #{tpu_custom_call.1} parent=11 // pred_check
          %p426 = pneg %p181
        $region30: #{tpu_custom_call.1} parent=11 // pred_check_branch
          %428 = sbr.rel (%p426) target = $region32
        $region31: #{tpu_custom_call.1} parent=11 // pred_region
          %s430 = ssub.s32 256, 256
          %431 = vsyncadd [#allocation13], %s430
          %s432 = sshll.u32 [#allocation12], 4
          %s433 = int_to_ptr.vmem [resolvable:$true] %s432
          %438 = dma.hbm_to_vmem [thread:$0]  %s5, 256, %s433, [#allocation13], 64, 64, 4
        $region32: #{tpu_custom_call.1} parent=11 // pred_fallthru
          _
        // Predicated region
        $region33: #{tpu_custom_call.1} parent=11 // pred_check
          %p439 = pneg %p202
        $region34: #{tpu_custom_call.1} parent=11 // pred_check_branch
          %441 = sbr.rel (%p439) target = $region36
        $region35: #{tpu_custom_call.1} parent=11 // pred_region
          %s443 = ssub.s32 256, 256
          %444 = vsyncadd [#allocation13], %s443
          %s445 = sshll.u32 [#allocation14], 4
          %s446 = int_to_ptr.vmem [resolvable:$true] %s445
          %451 = dma.hbm_to_vmem [thread:$0]  %s6, 256, %s446, [#allocation13], 64, 64, 4
        $region36: #{tpu_custom_call.1} parent=11 // pred_fallthru
          _
        // Predicated region
        $region37: #{tpu_custom_call.1} parent=11 // pred_check
          %p452 = pneg %p223
        $region38: #{tpu_custom_call.1} parent=11 // pred_check_branch
          %454 = sbr.rel (%p452) target = $region40
        $region39: #{tpu_custom_call.1} parent=11 // pred_region
          %s456 = ssub.s32 256, 256
          %457 = vsyncadd [#allocation16], %s456
          %s458 = sshll.u32 [#allocation15], 4
          %s459 = int_to_ptr.vmem [resolvable:$true] %s458
          %464 = dma.hbm_to_vmem [thread:$0]  %s7, 256, %s459, [#allocation16], 64, 64, 4
        $region40: #{tpu_custom_call.1} parent=11 // pred_fallthru
          _
        // Predicated region
        $region41: #{tpu_custom_call.1} parent=11 // pred_check
          %p465 = pneg %p244
        $region42: #{tpu_custom_call.1} parent=11 // pred_check_branch
          %467 = sbr.rel (%p465) target = $region44
        $region43: #{tpu_custom_call.1} parent=11 // pred_region
          %s469 = ssub.s32 16, 16
          %470 = vsyncadd [#allocation16], %s469
          %s472 = sshll.u32 [#allocation17], 4
          %s473 = int_to_ptr.vmem [resolvable:$true] %s472
          %475 = dma.hbm_to_vmem [thread:$0]  %s8, 16, %s473, [#allocation16]
        $region44: #{tpu_custom_call.1} parent=11 // pred_fallthru
          _
        // Predicated region
        $region45: #{tpu_custom_call.1} parent=11 // pred_check
          %p476 = pneg %p265
        $region46: #{tpu_custom_call.1} parent=11 // pred_check_branch
          %478 = sbr.rel (%p476) target = $region48
        $region47: #{tpu_custom_call.1} parent=11 // pred_region
          %s480 = ssub.s32 512, 512
          %481 = vsyncadd [#allocation19], %s480
          %s482 = sshll.u32 [#allocation18], 4
          %s483 = int_to_ptr.vmem [resolvable:$true] %s482
          %488 = dma.hbm_to_vmem [thread:$0]  %s9, 512, %s483, [#allocation19], 64, 64, 4
        $region48: #{tpu_custom_call.1} parent=11 // pred_fallthru
          _
        // Predicated region
        $region49: #{tpu_custom_call.1} parent=11 // pred_check
          %p489 = pneg %p286
        $region50: #{tpu_custom_call.1} parent=11 // pred_check_branch
          %491 = sbr.rel (%p489) target = $region52
        $region51: #{tpu_custom_call.1} parent=11 // pred_region
          %s493 = ssub.s32 16, 16
          %494 = vsyncadd [#allocation19], %s493
          %s496 = sshll.u32 [#allocation20], 4
          %s497 = int_to_ptr.vmem [resolvable:$true] %s496
          %499 = dma.hbm_to_vmem [thread:$0]  %s10, 16, %s497, [#allocation19]
        $region52: #{tpu_custom_call.1} parent=11 // pred_fallthru
          _
        // Predicated region
        $region53: #{tpu_custom_call.1} parent=11 // pred_check
          %p500 = pneg %p307
        $region54: #{tpu_custom_call.1} parent=11 // pred_check_branch
          %502 = sbr.rel (%p500) target = $region56
        $region55: #{tpu_custom_call.1} parent=11 // pred_region
          %s504 = ssub.s32 48, 48
          %505 = vsyncadd [#allocation22], %s504
          %s506 = sshll.u32 [#allocation21], 4
          %s507 = int_to_ptr.vmem [resolvable:$true] %s506
          %512 = dma.hbm_to_vmem [thread:$0]  %s11, 48, %s507, [#allocation22], 16, 16, 1
        $region56: #{tpu_custom_call.1} parent=11 // pred_fallthru
          _
        // Predicated region
        $region57: #{tpu_custom_call.1} parent=11 // pred_check
          %p513 = pneg %p328
        $region58: #{tpu_custom_call.1} parent=11 // pred_check_branch
          %515 = sbr.rel (%p513) target = $region60
        $region59: #{tpu_custom_call.1} parent=11 // pred_region
          %s517 = ssub.s32 48, 48
          %518 = vsyncadd [#allocation22], %s517
          %s519 = sshll.u32 [#allocation23], 4
          %s520 = int_to_ptr.vmem [resolvable:$true] %s519
          %525 = dma.hbm_to_vmem [thread:$0]  %s12, 48, %s520, [#allocation22], 16, 16, 1
        $region60: #{tpu_custom_call.1} parent=11 // pred_fallthru
          _
      $region12: #{tpu_custom_call.1} parent=5 // pred_fallthru
        _
      %p526 = scmp.lt.s32.totalorder %s31, 2
      // Predicated region
      $region61: #{tpu_custom_call.1} parent=5 // pred_check
        %p527 = pneg %p526
      $region62: #{tpu_custom_call.1} parent=5 // pred_check_branch
        %529 = sbr.rel (%p527) target = $region64
      $region63: #{tpu_custom_call.1} parent=5 // pred_region
        // Predicated region
        $region65: #{tpu_custom_call.1} parent=63 // pred_check
          %p530 = pneg %p65
        $region66: #{tpu_custom_call.1} parent=63 // pred_check_branch
          %532 = sbr.rel (%p530) target = $region68
        $region67: #{tpu_custom_call.1} parent=63 // pred_region
          %s533 = sand.u32 %s55, 1
          %s534 = scalar_lea.sflag [#allocation4], %s533
          %s535 = sand.u32 %s55, 1
          %s536 = smul.addr %s535, 64
          %s537 = scalar_lea.vmem [#allocation3], %s536
          %s538 = smul.u32 4, %s39
          %s539 = smul.u32 4, %s38
          %s541 = ssub.s32 1024, 1024
          %542 = vsyncadd %s534, %s541
          %s543 = smul.addr %s538, 4
          %s544 = sadd.s32 %s539, %s543
          %s545 = smul.addr %s544, 64
          %s546 = scalar_lea.hbm %s0, %s545
          %s547 = sshll.u32 %s537, 4
          %s548 = int_to_ptr.vmem [resolvable:$true] %s547
          %553 = dma.hbm_to_vmem [thread:$0]  %s546, 1024, %s548, %s534, 64, 64, 4
        $region68: #{tpu_custom_call.1} parent=63 // pred_fallthru
          _
      $region64: #{tpu_custom_call.1} parent=5 // pred_fallthru
        _
      %p554 = scmp.le.s32.totalorder 1, %s31
      %p555 = scmp.lt.s32.totalorder %s31, 3
      %p556 = pnand %p554, %p555
      %p557 = pneg %p556
      // Predicated region
      $region69: #{tpu_custom_call.1} parent=5 // pred_check
        _
      $region70: #{tpu_custom_call.1} parent=5 // pred_check_branch
        %559 = sbr.rel (%p556) target = $region72
      $region71: #{tpu_custom_call.1} parent=5 // pred_region
        %s560 = ssub.s32 %s31, 1
        %s561 = sand.u32 %s58, 1
        %s562 = scalar_lea.sflag [#allocation4], %s561
        %s563 = sand.u32 %s58, 1
        %s564 = smul.addr %s563, 64
        %s565 = scalar_lea.vmem [#allocation3], %s564
        // Predicated region
        $region73: #{tpu_custom_call.1} parent=71 // pred_check
          %p566 = pneg %p71
        $region74: #{tpu_custom_call.1} parent=71 // pred_check_branch
          %568 = sbr.rel (%p566) target = $region76
        $region75: #{tpu_custom_call.1} parent=71 // pred_region
          %569 = dma.done %s562, 1024
        $region76: #{tpu_custom_call.1} parent=71 // pred_fallthru
          _
        // Predicated region
        $region77: #{tpu_custom_call.1} parent=71 // pred_check
          %p570 = pneg %p97
        $region78: #{tpu_custom_call.1} parent=71 // pred_check_branch
          %572 = sbr.rel (%p570) target = $region80
        $region79: #{tpu_custom_call.1} parent=71 // pred_region
          %573 = dma.done [#allocation7], 256
        $region80: #{tpu_custom_call.1} parent=71 // pred_fallthru
          _
        // Predicated region
        $region81: #{tpu_custom_call.1} parent=71 // pred_check
          %p574 = pneg %p118
        $region82: #{tpu_custom_call.1} parent=71 // pred_check_branch
          %576 = sbr.rel (%p574) target = $region84
        $region83: #{tpu_custom_call.1} parent=71 // pred_region
          %577 = dma.done [#allocation7], 256
        $region84: #{tpu_custom_call.1} parent=71 // pred_fallthru
          _
        // Predicated region
        $region85: #{tpu_custom_call.1} parent=71 // pred_check
          %p578 = pneg %p139
        $region86: #{tpu_custom_call.1} parent=71 // pred_check_branch
          %580 = sbr.rel (%p578) target = $region88
        $region87: #{tpu_custom_call.1} parent=71 // pred_region
          %581 = dma.done [#allocation10], 256
        $region88: #{tpu_custom_call.1} parent=71 // pred_fallthru
          _
        // Predicated region
        $region89: #{tpu_custom_call.1} parent=71 // pred_check
          %p582 = pneg %p160
        $region90: #{tpu_custom_call.1} parent=71 // pred_check_branch
          %584 = sbr.rel (%p582) target = $region92
        $region91: #{tpu_custom_call.1} parent=71 // pred_region
          %585 = dma.done [#allocation10], 256
        $region92: #{tpu_custom_call.1} parent=71 // pred_fallthru
          _
        // Predicated region
        $region93: #{tpu_custom_call.1} parent=71 // pred_check
          %p586 = pneg %p181
        $region94: #{tpu_custom_call.1} parent=71 // pred_check_branch
          %588 = sbr.rel (%p586) target = $region96
        $region95: #{tpu_custom_call.1} parent=71 // pred_region
          %589 = dma.done [#allocation13], 256
        $region96: #{tpu_custom_call.1} parent=71 // pred_fallthru
          _
        // Predicated region
        $region97: #{tpu_custom_call.1} parent=71 // pred_check
          %p590 = pneg %p202
        $region98: #{tpu_custom_call.1} parent=71 // pred_check_branch
          %592 = sbr.rel (%p590) target = $region100
        $region99: #{tpu_custom_call.1} parent=71 // pred_region
          %593 = dma.done [#allocation13], 256
        $region100: #{tpu_custom_call.1} parent=71 // pred_fallthru
          _
        // Predicated region
        $region101: #{tpu_custom_call.1} parent=71 // pred_check
          %p594 = pneg %p223
        $region102: #{tpu_custom_call.1} parent=71 // pred_check_branch
          %596 = sbr.rel (%p594) target = $region104
        $region103: #{tpu_custom_call.1} parent=71 // pred_region
          %597 = dma.done [#allocation16], 256
        $region104: #{tpu_custom_call.1} parent=71 // pred_fallthru
          _
        // Predicated region
        $region105: #{tpu_custom_call.1} parent=71 // pred_check
          %p598 = pneg %p244
        $region106: #{tpu_custom_call.1} parent=71 // pred_check_branch
          %600 = sbr.rel (%p598) target = $region108
        $region107: #{tpu_custom_call.1} parent=71 // pred_region
          %601 = dma.done [#allocation16], 16
        $region108: #{tpu_custom_call.1} parent=71 // pred_fallthru
          _
        // Predicated region
        $region109: #{tpu_custom_call.1} parent=71 // pred_check
          %p602 = pneg %p265
        $region110: #{tpu_custom_call.1} parent=71 // pred_check_branch
          %604 = sbr.rel (%p602) target = $region112
        $region111: #{tpu_custom_call.1} parent=71 // pred_region
          %605 = dma.done [#allocation19], 512
        $region112: #{tpu_custom_call.1} parent=71 // pred_fallthru
          _
        // Predicated region
        $region113: #{tpu_custom_call.1} parent=71 // pred_check
          %p606 = pneg %p286
        $region114: #{tpu_custom_call.1} parent=71 // pred_check_branch
          %608 = sbr.rel (%p606) target = $region116
        $region115: #{tpu_custom_call.1} parent=71 // pred_region
          %609 = dma.done [#allocation19], 16
        $region116: #{tpu_custom_call.1} parent=71 // pred_fallthru
          _
        // Predicated region
        $region117: #{tpu_custom_call.1} parent=71 // pred_check
          %p610 = pneg %p307
        $region118: #{tpu_custom_call.1} parent=71 // pred_check_branch
          %612 = sbr.rel (%p610) target = $region120
        $region119: #{tpu_custom_call.1} parent=71 // pred_region
          %613 = dma.done [#allocation22], 48
        $region120: #{tpu_custom_call.1} parent=71 // pred_fallthru
          _
        // Predicated region
        $region121: #{tpu_custom_call.1} parent=71 // pred_check
          %p614 = pneg %p328
        $region122: #{tpu_custom_call.1} parent=71 // pred_check_branch
          %616 = sbr.rel (%p614) target = $region124
        $region123: #{tpu_custom_call.1} parent=71 // pred_region
          %617 = dma.done [#allocation22], 48
        $region124: #{tpu_custom_call.1} parent=71 // pred_fallthru
          _
        %s618 = sand.u32 %s58, 1
        %s619 = scalar_lea.sflag [#allocation4], %s618
        %s620 = sand.u32 %s58, 1
        %s621 = smul.addr %s620, 64
        %s622 = scalar_lea.vmem [#allocation3], %s621
        %p623 = pneg %p71
        %p624 = pneg %p68
        %p625 = pneg %p97
        %p626 = pneg %p94
        %p627 = pneg %p118
        %p628 = pneg %p115
        %p629 = pneg %p139
        %p630 = pneg %p136
        %p631 = pneg %p160
        %p632 = pneg %p157
        %p633 = pneg %p181
        %p634 = pneg %p178
        %p635 = pneg %p202
        %p636 = pneg %p199
        %p637 = pneg %p223
        %p638 = pneg %p220
        %p639 = pneg %p244
        %p640 = pneg %p241
        %p641 = pneg %p265
        %p642 = pneg %p262
        %p643 = pneg %p286
        %p644 = pneg %p283
        %p645 = pneg %p307
        %p646 = pneg %p304
        %p647 = pneg %p328
        %p648 = pneg %p325
        %p649 = pneg %p356
        %p650 = pneg %p353
        %s651 = sand.u32 %s343, 1
        %s652 = scalar_lea.sflag [#allocation5], %s651
        %s653 = sand.u32 %s343, 1
        %s654 = smul.addr %s653, 8
        %s655 = scalar_lea.vmem [#allocation24], %s654
        %s656 = smul.u32 4, %s41
        %s657 = smul.u32 4, %s40
        %s658 = smul.u32 2, %s40
        %s659 = smul.u32 4, %s41
        %p661 = scmp.eq.s32.totalorder %s41, 0
        // Predicated region
        $region125: #{tpu_custom_call.1} parent=71 // pred_check
          %p662 = pneg %p661
        $region126: #{tpu_custom_call.1} parent=71 // pred_check_branch
          %664 = sbr.rel (%p662) target = $region128
        $region127: #{tpu_custom_call.1} parent=71 // pred_region
          %v665 = vld [vmem:[#allocation6] sm:$0xff]
          %v666 = vld [vmem:[#allocation6 + $0x8] sm:$0xff]
          %vm667 = vcmask 261120
          %668 = vst.msk [vmem:[#allocation2] sm:$0xff] %vm667, %v665
          %669 = vst.msk [vmem:[#allocation2 + $0x8] sm:$0xff] %vm667, %v666
        $region128: #{tpu_custom_call.1} parent=71 // pred_fallthru
          _
        %v670 = vld [vmem:[#allocation2] sm:$0xff]
        %v671 = vld [vmem:[#allocation2 + $0x8] sm:$0xff]
        loop: start=0, step=1, limit=2
        $region129: #{tpu_custom_call.1} parent=71 // loop_pre_header
          _
        $region130: #{tpu_custom_call.1} parent=71 // loop_header
          %s673 = sphi 0, %s677
          %p674 = scmp.ge.s32.totalorder %s673, 2
          %v678 = vphi %v670, %v3184
          %v679 = vphi %v671, %v3185
        $region131: #{tpu_custom_call.1} parent=71 // loop_header_branch
          %676 = sbr.rel (%p674) target = $region135
        $region132: #{tpu_custom_call.1} parent=71 // loop_body
          %s680 = smul.u32 %s673, 2
          %s681 = smul.u32 %s680, 4
          %s682 = smul.addr %s681, 4
          %s683 = scalar_lea.vmem %s565, %s682 [#allocation3]
          %v684 = vld [vmem:[%s683] sm:$0xf]
          %v685 = vld [vmem:[%s683 + $0x4] sm:$0xf]
          %v686 = vld [vmem:[%s683 + $0x8] sm:$0xf]
          %v687 = vld [vmem:[%s683 + $0xc] sm:$0xf]
          %v688 = vpack.c.bf16 %v679, %v678
          %v689 = vld [vmem:[#allocation8] sm:$0xf]
          %v690 = vld [vmem:[#allocation8 + $0x4] sm:$0xf]
          %v691 = vld [vmem:[#allocation8 + $0x8] sm:$0xf]
          %v692 = vld [vmem:[#allocation8 + $0xc] sm:$0xf]
          %v697 = vunpack.c.l.b16 %v689
          %v698 = vunpack.c.l.b16 %v690
          %v699 = vunpack.c.l.b16 %v691
          %v700 = vunpack.c.l.b16 %v692
          %v701 = vpack.c.b16 %v698, %v697
          %v702 = vpack.c.b16 %v700, %v699
          %vm705 = vcmask 261120
          %v707 = vsel %vm705, %v688, 0
          %709 = vmatprep.subr.bf16.mxu0 0
          %710 = vmatpush1.bf16.msra.mxu0 %v701
          %711 = vmatprep.subr.bf16.mxu0 0
          %712 = vmatpush1.bf16.msra.mxu0 %v702
          %713 = vmatprep.subr.bf16.mxu0 0
          %714 = vmatpush1.bf16.msra.mxu0 0
          %715 = vmatprep.subr.bf16.mxu0 0
          %716 = vmatpush1.bf16.msra.mxu0 0
          %717 = vmatprep.subr.bf16.mxu0 0
          %718 = vmatpush1.bf16.msra.mxu0 0
          %719 = vmatprep.subr.bf16.mxu0 0
          %720 = vmatpush1.bf16.msra.mxu0 0
          %721 = vmatprep.subr.bf16.mxu0 0
          %722 = vmatpush1.bf16.msra.mxu0 0
          %723 = vmatprep.subr.bf16.mxu0 0
          %724 = vmatpush1.bf16.msra.mxu0 0
          %725 = vmatprep.subr.bf16.mxu0 0
          %726 = vmatpush1.bf16.msra.mxu0 0
          %727 = vmatprep.subr.bf16.mxu0 0
          %728 = vmatpush1.bf16.msra.mxu0 0
          %729 = vmatprep.subr.bf16.mxu0 0
          %730 = vmatpush1.bf16.msra.mxu0 0
          %731 = vmatprep.subr.bf16.mxu0 0
          %732 = vmatpush1.bf16.msra.mxu0 0
          %733 = vmatprep.subr.bf16.mxu0 0
          %734 = vmatpush1.bf16.msra.mxu0 0
          %735 = vmatprep.subr.bf16.mxu0 0
          %736 = vmatpush1.bf16.msra.mxu0 0
          %737 = vmatprep.subr.bf16.mxu0 0
          %738 = vmatpush1.bf16.msra.mxu0 0
          %739 = vmatprep.subr.bf16.mxu0 0
          %740 = vmatpush1.bf16.msra.mxu0 0
          %741 = vmatprep.mubr.bf16.mxu0 0
          %742 = vmatmul.mubr.bf16.gmra.mrb[0].mxu0 %v707
          %v743 = vpop.f32.mrb[0].mxu0
          %v744 = vadd.f32 0.0, %v743
          %v745 = vpop.f32.mrb[0].mxu0
          %v746 = vpop.f32.mrb[0].mxu0
          %v747 = vadd.f32 0.0, %v746
          %v748 = vpop.f32.mrb[0].mxu0
          %749 = vdwg.mxu0
          %v750 = vpack.c.bf16 %v744, %v744
          %v751 = vpack.c.bf16 %v747, %v747
          %753 = vrot.lane.b32.xlu0 %v750, 96
          %v754 = vpop.permute.xlu0 %753
          %v756 = vsel %vm705, %v750, 0
          %v759 = vsel %vm705, %v754, 0
          %761 = vmatprep.subr.bf16.mxu0 0
          %762 = vmatpush1.bf16.xpose.msra.mxu0 %v759
          %763 = vmatprep.subr.bf16.mxu0 0
          %764 = vmatpush1.bf16.xpose.msra.mxu0 0
          %765 = vmatprep.subr.bf16.mxu0 0
          %766 = vmatpush1.bf16.xpose.msra.mxu0 0
          %767 = vmatprep.subr.bf16.mxu0 0
          %768 = vmatpush1.bf16.xpose.msra.mxu0 0
          %769 = vmatprep.subr.bf16.mxu0 0
          %770 = vmatpush1.bf16.xpose.msra.mxu0 0
          %771 = vmatprep.subr.bf16.mxu0 0
          %772 = vmatpush1.bf16.xpose.msra.mxu0 0
          %773 = vmatprep.subr.bf16.mxu0 0
          %774 = vmatpush1.bf16.xpose.msra.mxu0 0
          %775 = vmatprep.subr.bf16.mxu0 0
          %776 = vmatpush1.bf16.xpose.msra.mxu0 0
          %777 = vmatprep.subr.bf16.mxu0 0
          %778 = vmatpush1.bf16.xpose.msra.mxu0 0
          %779 = vmatprep.subr.bf16.mxu0 0
          %780 = vmatpush1.bf16.xpose.msra.mxu0 0
          %781 = vmatprep.subr.bf16.mxu0 0
          %782 = vmatpush1.bf16.xpose.msra.mxu0 0
          %783 = vmatprep.subr.bf16.mxu0 0
          %784 = vmatpush1.bf16.xpose.msra.mxu0 0
          %785 = vmatprep.subr.bf16.mxu0 0
          %786 = vmatpush1.bf16.xpose.msra.mxu0 0
          %787 = vmatprep.subr.bf16.mxu0 0
          %788 = vmatpush1.bf16.xpose.msra.mxu0 0
          %789 = vmatprep.subr.bf16.mxu0 0
          %790 = vmatpush1.bf16.xpose.msra.mxu0 0
          %791 = vmatprep.subr.bf16.mxu0 0
          %792 = vmatpush1.bf16.xpose.msra.mxu0 0
          %793 = vmatprep.mubr.bf16.mxu0 0
          %794 = vmatmul.mubr.bf16.gmra.mrb[0].mxu0 %v756
          %v795 = vpop.f32.mrb[0].mxu0
          %v796 = vadd.f32 0.0, %v795
          %v797 = vpop.f32.mrb[0].mxu0
          %v798 = vpop.f32.mrb[0].mxu0
          %v799 = vpop.f32.mrb[0].mxu0
          %800 = vdwg.mxu0
          %802 = vrot.lane.b32.xlu0 %v751, 96
          %v803 = vpop.permute.xlu0 %802
          %v805 = vsel %vm705, %v751, 0
          %v808 = vsel %vm705, %v803, 0
          %810 = vmatprep.subr.bf16.mxu0 0
          %811 = vmatpush1.bf16.xpose.msra.mxu0 %v808
          %812 = vmatprep.subr.bf16.mxu0 0
          %813 = vmatpush1.bf16.xpose.msra.mxu0 0
          %814 = vmatprep.subr.bf16.mxu0 0
          %815 = vmatpush1.bf16.xpose.msra.mxu0 0
          %816 = vmatprep.subr.bf16.mxu0 0
          %817 = vmatpush1.bf16.xpose.msra.mxu0 0
          %818 = vmatprep.subr.bf16.mxu0 0
          %819 = vmatpush1.bf16.xpose.msra.mxu0 0
          %820 = vmatprep.subr.bf16.mxu0 0
          %821 = vmatpush1.bf16.xpose.msra.mxu0 0
          %822 = vmatprep.subr.bf16.mxu0 0
          %823 = vmatpush1.bf16.xpose.msra.mxu0 0
          %824 = vmatprep.subr.bf16.mxu0 0
          %825 = vmatpush1.bf16.xpose.msra.mxu0 0
          %826 = vmatprep.subr.bf16.mxu0 0
          %827 = vmatpush1.bf16.xpose.msra.mxu0 0
          %828 = vmatprep.subr.bf16.mxu0 0
          %829 = vmatpush1.bf16.xpose.msra.mxu0 0
          %830 = vmatprep.subr.bf16.mxu0 0
          %831 = vmatpush1.bf16.xpose.msra.mxu0 0
          %832 = vmatprep.subr.bf16.mxu0 0
          %833 = vmatpush1.bf16.xpose.msra.mxu0 0
          %834 = vmatprep.subr.bf16.mxu0 0
          %835 = vmatpush1.bf16.xpose.msra.mxu0 0
          %836 = vmatprep.subr.bf16.mxu0 0
          %837 = vmatpush1.bf16.xpose.msra.mxu0 0
          %838 = vmatprep.subr.bf16.mxu0 0
          %839 = vmatpush1.bf16.xpose.msra.mxu0 0
          %840 = vmatprep.subr.bf16.mxu0 0
          %841 = vmatpush1.bf16.xpose.msra.mxu0 0
          %842 = vmatprep.mubr.bf16.mxu0 0
          %843 = vmatmul.mubr.bf16.gmra.mrb[0].mxu0 %v805
          %v844 = vpop.f32.mrb[0].mxu0
          %v845 = vadd.f32 0.0, %v844
          %v846 = vpop.f32.mrb[0].mxu0
          %v847 = vpop.f32.mrb[0].mxu0
          %v848 = vpop.f32.mrb[0].mxu0
          %849 = vdwg.mxu0
          %vm850 = vcmask 64512
          %v851 = vsel %vm850, %v796, -inf
          %852 = vmax.xlane.f32.xlu0 %v851
          %v853 = vpop.xlane.xlu0 %852
          %v854 = vsel %vm850, %v845, -inf
          %855 = vmax.xlane.f32.xlu0 %v854
          %v856 = vpop.xlane.xlu0 %855
          %v857 = vsub.f32 %v796, %v853
          %v858 = vsub.f32 %v845, %v856
          %v859 = vmul.f32 %v857, 1.442695
          %v860 = vpow.pop %v859
          %v861 = vmul.f32 %v858, 1.442695
          %v862 = vpow.pop %v861
          %v863 = vsel %vm850, %v860, 0.0
          %864 = vadd.xlane.f32.xlu0 %v863
          %v865 = vpop.xlane.xlu0 %864
          %v866 = vsel %vm850, %v862, 0.0
          %867 = vadd.xlane.f32.xlu0 %v866
          %v868 = vpop.xlane.xlu0 %867
          %v869 = vrcp.pop %v865
          %v870 = vrcp.pop %v868
          %v871 = vmul.f32 %v860, %v869
          %v872 = vmul.f32 %v862, %v870
          %v873 = vpack.c.bf16 %v871, %v871
          %v874 = vpack.c.bf16 %v872, %v872
          %875 = vrot.lane.b32.xlu0 %v750, 64
          %v876 = vpop.permute.xlu0 %875
          %v878 = vsel %vm850, %v873, 0
          %vm880 = vcmask 1043456
          %v882 = vsel %vm880, %v876, 0
          %884 = vmatprep.subr.bf16.mxu0 0
          %885 = vmatpush1.bf16.msra.mxu0 %v882
          %886 = vmatprep.subr.bf16.mxu0 0
          %887 = vmatpush1.bf16.msra.mxu0 0
          %888 = vmatprep.subr.bf16.mxu0 0
          %889 = vmatpush1.bf16.msra.mxu0 0
          %890 = vmatprep.subr.bf16.mxu0 0
          %891 = vmatpush1.bf16.msra.mxu0 0
          %892 = vmatprep.subr.bf16.mxu0 0
          %893 = vmatpush1.bf16.msra.mxu0 0
          %894 = vmatprep.subr.bf16.mxu0 0
          %895 = vmatpush1.bf16.msra.mxu0 0
          %896 = vmatprep.subr.bf16.mxu0 0
          %897 = vmatpush1.bf16.msra.mxu0 0
          %898 = vmatprep.subr.bf16.mxu0 0
          %899 = vmatpush1.bf16.msra.mxu0 0
          %900 = vmatprep.subr.bf16.mxu0 0
          %901 = vmatpush1.bf16.msra.mxu0 0
          %902 = vmatprep.subr.bf16.mxu0 0
          %903 = vmatpush1.bf16.msra.mxu0 0
          %904 = vmatprep.subr.bf16.mxu0 0
          %905 = vmatpush1.bf16.msra.mxu0 0
          %906 = vmatprep.subr.bf16.mxu0 0
          %907 = vmatpush1.bf16.msra.mxu0 0
          %908 = vmatprep.subr.bf16.mxu0 0
          %909 = vmatpush1.bf16.msra.mxu0 0
          %910 = vmatprep.subr.bf16.mxu0 0
          %911 = vmatpush1.bf16.msra.mxu0 0
          %912 = vmatprep.subr.bf16.mxu0 0
          %913 = vmatpush1.bf16.msra.mxu0 0
          %914 = vmatprep.subr.bf16.mxu0 0
          %915 = vmatpush1.bf16.msra.mxu0 0
          %916 = vmatprep.mubr.bf16.mxu0 0
          %917 = vmatmul.mubr.bf16.gmra.mrb[0].mxu0 %v878
          %v918 = vpop.f32.mrb[0].mxu0
          %v919 = vadd.f32 0.0, %v918
          %v920 = vpop.f32.mrb[0].mxu0
          %v921 = vpop.f32.mrb[0].mxu0
          %v922 = vpop.f32.mrb[0].mxu0
          %923 = vdwg.mxu0
          %924 = vrot.lane.b32.xlu0 %v751, 64
          %v925 = vpop.permute.xlu0 %924
          %v927 = vsel %vm850, %v874, 0
          %v930 = vsel %vm880, %v925, 0
          %932 = vmatprep.subr.bf16.mxu0 0
          %933 = vmatpush1.bf16.msra.mxu0 %v930
          %934 = vmatprep.subr.bf16.mxu0 0
          %935 = vmatpush1.bf16.msra.mxu0 0
          %936 = vmatprep.subr.bf16.mxu0 0
          %937 = vmatpush1.bf16.msra.mxu0 0
          %938 = vmatprep.subr.bf16.mxu0 0
          %939 = vmatpush1.bf16.msra.mxu0 0
          %940 = vmatprep.subr.bf16.mxu0 0
          %941 = vmatpush1.bf16.msra.mxu0 0
          %942 = vmatprep.subr.bf16.mxu0 0
          %943 = vmatpush1.bf16.msra.mxu0 0
          %944 = vmatprep.subr.bf16.mxu0 0
          %945 = vmatpush1.bf16.msra.mxu0 0
          %946 = vmatprep.subr.bf16.mxu0 0
          %947 = vmatpush1.bf16.msra.mxu0 0
          %948 = vmatprep.subr.bf16.mxu0 0
          %949 = vmatpush1.bf16.msra.mxu0 0
          %950 = vmatprep.subr.bf16.mxu0 0
          %951 = vmatpush1.bf16.msra.mxu0 0
          %952 = vmatprep.subr.bf16.mxu0 0
          %953 = vmatpush1.bf16.msra.mxu0 0
          %954 = vmatprep.subr.bf16.mxu0 0
          %955 = vmatpush1.bf16.msra.mxu0 0
          %956 = vmatprep.subr.bf16.mxu0 0
          %957 = vmatpush1.bf16.msra.mxu0 0
          %958 = vmatprep.subr.bf16.mxu0 0
          %959 = vmatpush1.bf16.msra.mxu0 0
          %960 = vmatprep.subr.bf16.mxu0 0
          %961 = vmatpush1.bf16.msra.mxu0 0
          %962 = vmatprep.subr.bf16.mxu0 0
          %963 = vmatpush1.bf16.msra.mxu0 0
          %964 = vmatprep.mubr.bf16.mxu0 0
          %965 = vmatmul.mubr.bf16.gmra.mrb[0].mxu0 %v927
          %v966 = vpop.f32.mrb[0].mxu0
          %v967 = vadd.f32 0.0, %v966
          %v968 = vpop.f32.mrb[0].mxu0
          %v969 = vpop.f32.mrb[0].mxu0
          %v970 = vpop.f32.mrb[0].mxu0
          %971 = vdwg.mxu0
          %v972 = vld [vmem:[#allocation9] sm:$0xf]
          %v973 = vld [vmem:[#allocation9 + $0x4] sm:$0xf]
          %v974 = vld [vmem:[#allocation9 + $0x8] sm:$0xf]
          %v975 = vld [vmem:[#allocation9 + $0xc] sm:$0xf]
          %v976 = vpack.c.bf16 %v967, %v919
          %v981 = vunpack.c.l.b16 %v972
          %v982 = vunpack.c.l.b16 %v973
          %v983 = vunpack.c.l.b16 %v974
          %v984 = vunpack.c.l.b16 %v975
          %v985 = vpack.c.b16 %v982, %v981
          %v986 = vpack.c.b16 %v984, %v983
          %v990 = vsel %vm705, %v976, 0
          %992 = vmatprep.subr.bf16.mxu0 0
          %993 = vmatpush1.bf16.msra.mxu0 %v985
          %994 = vmatprep.subr.bf16.mxu0 0
          %995 = vmatpush1.bf16.msra.mxu0 %v986
          %996 = vmatprep.subr.bf16.mxu0 0
          %997 = vmatpush1.bf16.msra.mxu0 0
          %998 = vmatprep.subr.bf16.mxu0 0
          %999 = vmatpush1.bf16.msra.mxu0 0
          %1000 = vmatprep.subr.bf16.mxu0 0
          %1001 = vmatpush1.bf16.msra.mxu0 0
          %1002 = vmatprep.subr.bf16.mxu0 0
          %1003 = vmatpush1.bf16.msra.mxu0 0
          %1004 = vmatprep.subr.bf16.mxu0 0
          %1005 = vmatpush1.bf16.msra.mxu0 0
          %1006 = vmatprep.subr.bf16.mxu0 0
          %1007 = vmatpush1.bf16.msra.mxu0 0
          %1008 = vmatprep.subr.bf16.mxu0 0
          %1009 = vmatpush1.bf16.msra.mxu0 0
          %1010 = vmatprep.subr.bf16.mxu0 0
          %1011 = vmatpush1.bf16.msra.mxu0 0
          %1012 = vmatprep.subr.bf16.mxu0 0
          %1013 = vmatpush1.bf16.msra.mxu0 0
          %1014 = vmatprep.subr.bf16.mxu0 0
          %1015 = vmatpush1.bf16.msra.mxu0 0
          %1016 = vmatprep.subr.bf16.mxu0 0
          %1017 = vmatpush1.bf16.msra.mxu0 0
          %1018 = vmatprep.subr.bf16.mxu0 0
          %1019 = vmatpush1.bf16.msra.mxu0 0
          %1020 = vmatprep.subr.bf16.mxu0 0
          %1021 = vmatpush1.bf16.msra.mxu0 0
          %1022 = vmatprep.subr.bf16.mxu0 0
          %1023 = vmatpush1.bf16.msra.mxu0 0
          %1024 = vmatprep.mubr.bf16.mxu0 0
          %1025 = vmatmul.mubr.bf16.gmra.mrb[0].mxu0 %v990
          %v1026 = vpop.f32.mrb[0].mxu0
          %v1027 = vadd.f32 0.0, %v1026
          %v1028 = vpop.f32.mrb[0].mxu0
          %v1029 = vpop.f32.mrb[0].mxu0
          %v1030 = vadd.f32 0.0, %v1029
          %v1031 = vpop.f32.mrb[0].mxu0
          %1032 = vdwg.mxu0
          %v1033 = vadd.f32 %v678, %v1027
          %v1034 = vadd.f32 %v679, %v1030
          %v1035 = vsel %vm705, %v1033, 0.0
          %1036 = vadd.xlane.f32.xlu0 %v1035
          %v1037 = vpop.xlane.xlu0 %1036
          %v1038 = vsel %vm705, %v1034, 0.0
          %1039 = vadd.xlane.f32.xlu0 %v1038
          %v1040 = vpop.xlane.xlu0 %1039
          %v1041 = vmul.f32 %v1033, %v1033
          %v1042 = vmul.f32 %v1034, %v1034
          %v1043 = vsel %vm705, %v1041, 0.0
          %1044 = vadd.xlane.f32.xlu0 %v1043
          %v1045 = vpop.xlane.xlu0 %1044
          %v1046 = vsel %vm705, %v1042, 0.0
          %1047 = vadd.xlane.f32.xlu0 %v1046
          %v1048 = vpop.xlane.xlu0 %1047
          %v1049 = vmul.f32 %v1037, 0.03125
          %v1050 = vmul.f32 %v1040, 0.03125
          %v1051 = vmul.f32 %v1045, 0.03125
          %v1052 = vmul.f32 %v1048, 0.03125
          %v1053 = vmul.f32 %v1049, %v1049
          %v1054 = vmul.f32 %v1050, %v1050
          %v1055 = vsub.f32 %v1051, %v1053
          %v1056 = vsub.f32 %v1052, %v1054
          %v1057 = vmax.f32 %v1055, 0.0
          %v1058 = vmax.f32 %v1056, 0.0
          %v1059 = vsub.f32 %v1033, %v1049
          %v1060 = vsub.f32 %v1034, %v1050
          %v1061 = vadd.f32 %v1057, 1e-05
          %v1062 = vadd.f32 %v1058, 1e-05
          %v1063 = vrsqrt.pop %v1061
          %v1064 = vrsqrt.pop %v1062
          %v1065 = vmul.f32 %v1059, %v1063
          %v1066 = vmul.f32 %v1060, %v1064
          %v1067 = vld [vmem:[#allocation21] sm:$0x1]
          %v1069 = vlaneseq
          %v1070 = vshrl.u32 %v1069, 7
          %v1071 = vsub.s32 0, %v1070
          %v1072 = vrot.slane %v1067, %v1071
          %v1074 = vmul.f32 %v1065, %v1072
          %v1075 = vmul.f32 %v1066, %v1072
          %v1076 = vld [vmem:[#allocation23] sm:$0x1]
          %v1078 = vlaneseq
          %v1079 = vshrl.u32 %v1078, 7
          %v1080 = vsub.s32 0, %v1079
          %v1081 = vrot.slane %v1076, %v1080
          %v1083 = vadd.f32 %v1074, %v1081
          %v1084 = vadd.f32 %v1075, %v1081
          %v1085 = vpack.c.bf16 %v1084, %v1083
          %v1086 = vld [vmem:[#allocation11] sm:$0xf]
          %v1087 = vld [vmem:[#allocation11 + $0x4] sm:$0xf]
          %v1088 = vld [vmem:[#allocation11 + $0x8] sm:$0xf]
          %v1089 = vld [vmem:[#allocation11 + $0xc] sm:$0xf]
          %v1094 = vunpack.c.l.b16 %v1086
          %v1095 = vunpack.c.l.b16 %v1087
          %v1096 = vunpack.c.l.b16 %v1088
          %v1097 = vunpack.c.l.b16 %v1089
          %v1098 = vpack.c.b16 %v1095, %v1094
          %v1099 = vpack.c.b16 %v1097, %v1096
          %v1103 = vsel %vm705, %v1085, 0
          %1105 = vmatprep.subr.bf16.mxu0 0
          %1106 = vmatpush1.bf16.msra.mxu0 %v1098
          %1107 = vmatprep.subr.bf16.mxu0 0
          %1108 = vmatpush1.bf16.msra.mxu0 %v1099
          %1109 = vmatprep.subr.bf16.mxu0 0
          %1110 = vmatpush1.bf16.msra.mxu0 0
          %1111 = vmatprep.subr.bf16.mxu0 0
          %1112 = vmatpush1.bf16.msra.mxu0 0
          %1113 = vmatprep.subr.bf16.mxu0 0
          %1114 = vmatpush1.bf16.msra.mxu0 0
          %1115 = vmatprep.subr.bf16.mxu0 0
          %1116 = vmatpush1.bf16.msra.mxu0 0
          %1117 = vmatprep.subr.bf16.mxu0 0
          %1118 = vmatpush1.bf16.msra.mxu0 0
          %1119 = vmatprep.subr.bf16.mxu0 0
          %1120 = vmatpush1.bf16.msra.mxu0 0
          %1121 = vmatprep.subr.bf16.mxu0 0
          %1122 = vmatpush1.bf16.msra.mxu0 0
          %1123 = vmatprep.subr.bf16.mxu0 0
          %1124 = vmatpush1.bf16.msra.mxu0 0
          %1125 = vmatprep.subr.bf16.mxu0 0
          %1126 = vmatpush1.bf16.msra.mxu0 0
          %1127 = vmatprep.subr.bf16.mxu0 0
          %1128 = vmatpush1.bf16.msra.mxu0 0
          %1129 = vmatprep.subr.bf16.mxu0 0
          %1130 = vmatpush1.bf16.msra.mxu0 0
          %1131 = vmatprep.subr.bf16.mxu0 0
          %1132 = vmatpush1.bf16.msra.mxu0 0
          %1133 = vmatprep.subr.bf16.mxu0 0
          %1134 = vmatpush1.bf16.msra.mxu0 0
          %1135 = vmatprep.subr.bf16.mxu0 0
          %1136 = vmatpush1.bf16.msra.mxu0 0
          %1137 = vmatprep.mubr.bf16.mxu0 0
          %1138 = vmatmul.mubr.bf16.gmra.mrb[0].mxu0 %v1103
          %v1139 = vpop.f32.mrb[0].mxu0
          %v1140 = vadd.f32 0.0, %v1139
          %v1141 = vpop.f32.mrb[0].mxu0
          %v1142 = vpop.f32.mrb[0].mxu0
          %v1143 = vadd.f32 0.0, %v1142
          %v1144 = vpop.f32.mrb[0].mxu0
          %1145 = vdwg.mxu0
          %v1146 = vpack.c.bf16 %v1140, %v1140
          %v1147 = vpack.c.bf16 %v1143, %v1143
          %v1148 = vld [vmem:[#allocation12] sm:$0xf]
          %v1149 = vld [vmem:[#allocation12 + $0x4] sm:$0xf]
          %v1150 = vld [vmem:[#allocation12 + $0x8] sm:$0xf]
          %v1151 = vld [vmem:[#allocation12 + $0xc] sm:$0xf]
          %v1156 = vunpack.c.l.b16 %v684
          %v1157 = vunpack.c.l.b16 %v685
          %v1158 = vunpack.c.l.b16 %v686
          %v1159 = vunpack.c.l.b16 %v687
          %v1160 = vpack.c.b16 %v1157, %v1156
          %v1161 = vpack.c.b16 %v1159, %v1158
          %v1166 = vunpack.c.l.b16 %v1148
          %v1167 = vunpack.c.l.b16 %v1149
          %v1168 = vunpack.c.l.b16 %v1150
          %v1169 = vunpack.c.l.b16 %v1151
          %v1170 = vpack.c.b16 %v1167, %v1166
          %v1171 = vpack.c.b16 %v1169, %v1168
          %v1175 = vsel %vm705, %v1160, 0
          %v1178 = vsel %vm705, %v1161, 0
          %1180 = vmatprep.subr.bf16.mxu0 0
          %1181 = vmatpush1.bf16.msra.mxu0 %v1170
          %1182 = vmatprep.subr.bf16.mxu0 0
          %1183 = vmatpush1.bf16.msra.mxu0 %v1171
          %1184 = vmatprep.subr.bf16.mxu0 0
          %1185 = vmatpush1.bf16.msra.mxu0 0
          %1186 = vmatprep.subr.bf16.mxu0 0
          %1187 = vmatpush1.bf16.msra.mxu0 0
          %1188 = vmatprep.subr.bf16.mxu0 0
          %1189 = vmatpush1.bf16.msra.mxu0 0
          %1190 = vmatprep.subr.bf16.mxu0 0
          %1191 = vmatpush1.bf16.msra.mxu0 0
          %1192 = vmatprep.subr.bf16.mxu0 0
          %1193 = vmatpush1.bf16.msra.mxu0 0
          %1194 = vmatprep.subr.bf16.mxu0 0
          %1195 = vmatpush1.bf16.msra.mxu0 0
          %1196 = vmatprep.subr.bf16.mxu0 0
          %1197 = vmatpush1.bf16.msra.mxu0 0
          %1198 = vmatprep.subr.bf16.mxu0 0
          %1199 = vmatpush1.bf16.msra.mxu0 0
          %1200 = vmatprep.subr.bf16.mxu0 0
          %1201 = vmatpush1.bf16.msra.mxu0 0
          %1202 = vmatprep.subr.bf16.mxu0 0
          %1203 = vmatpush1.bf16.msra.mxu0 0
          %1204 = vmatprep.subr.bf16.mxu0 0
          %1205 = vmatpush1.bf16.msra.mxu0 0
          %1206 = vmatprep.subr.bf16.mxu0 0
          %1207 = vmatpush1.bf16.msra.mxu0 0
          %1208 = vmatprep.subr.bf16.mxu0 0
          %1209 = vmatpush1.bf16.msra.mxu0 0
          %1210 = vmatprep.subr.bf16.mxu0 0
          %1211 = vmatpush1.bf16.msra.mxu0 0
          %1212 = vmatprep.mubr.bf16.mxu0 0
          %1213 = vmatmul.mubr.bf16.gmra.mrb[0].mxu0 %v1175
          %v1214 = vpop.f32.mrb[0].mxu0
          %v1215 = vadd.f32 0.0, %v1214
          %v1216 = vpop.f32.mrb[0].mxu0
          %v1217 = vpop.f32.mrb[0].mxu0
          %v1218 = vadd.f32 0.0, %v1217
          %v1219 = vpop.f32.mrb[0].mxu0
          %1220 = vmatprep.mubr.bf16.mxu0 0
          %1221 = vmatmul.mubr.bf16.gmra.mrb[0].mxu0 %v1178
          %v1222 = vpop.f32.mrb[0].mxu0
          %v1223 = vadd.f32 0.0, %v1222
          %v1224 = vpop.f32.mrb[0].mxu0
          %v1225 = vpop.f32.mrb[0].mxu0
          %v1226 = vadd.f32 0.0, %v1225
          %v1227 = vpop.f32.mrb[0].mxu0
          %1228 = vdwg.mxu0
          %v1229 = vpack.c.bf16 %v1218, %v1215
          %v1230 = vpack.c.bf16 %v1226, %v1223
          %v1232 = vsel %vm705, %v1146, 0
          %v1235 = vsel %vm705, %v1229, 0
          %1237 = vmatprep.subr.bf16.mxu0 0
          %1238 = vmatpush1.bf16.xpose.msra.mxu0 %v1235
          %1239 = vmatprep.subr.bf16.mxu0 0
          %1240 = vmatpush1.bf16.xpose.msra.mxu0 0
          %1241 = vmatprep.subr.bf16.mxu0 0
          %1242 = vmatpush1.bf16.xpose.msra.mxu0 0
          %1243 = vmatprep.subr.bf16.mxu0 0
          %1244 = vmatpush1.bf16.xpose.msra.mxu0 0
          %1245 = vmatprep.subr.bf16.mxu0 0
          %1246 = vmatpush1.bf16.xpose.msra.mxu0 0
          %1247 = vmatprep.subr.bf16.mxu0 0
          %1248 = vmatpush1.bf16.xpose.msra.mxu0 0
          %1249 = vmatprep.subr.bf16.mxu0 0
          %1250 = vmatpush1.bf16.xpose.msra.mxu0 0
          %1251 = vmatprep.subr.bf16.mxu0 0
          %1252 = vmatpush1.bf16.xpose.msra.mxu0 0
          %1253 = vmatprep.subr.bf16.mxu0 0
          %1254 = vmatpush1.bf16.xpose.msra.mxu0 0
          %1255 = vmatprep.subr.bf16.mxu0 0
          %1256 = vmatpush1.bf16.xpose.msra.mxu0 0
          %1257 = vmatprep.subr.bf16.mxu0 0
          %1258 = vmatpush1.bf16.xpose.msra.mxu0 0
          %1259 = vmatprep.subr.bf16.mxu0 0
          %1260 = vmatpush1.bf16.xpose.msra.mxu0 0
          %1261 = vmatprep.subr.bf16.mxu0 0
          %1262 = vmatpush1.bf16.xpose.msra.mxu0 0
          %1263 = vmatprep.subr.bf16.mxu0 0
          %1264 = vmatpush1.bf16.xpose.msra.mxu0 0
          %1265 = vmatprep.subr.bf16.mxu0 0
          %1266 = vmatpush1.bf16.xpose.msra.mxu0 0
          %1267 = vmatprep.subr.bf16.mxu0 0
          %1268 = vmatpush1.bf16.xpose.msra.mxu0 0
          %1269 = vmatprep.mubr.bf16.mxu0 0
          %1270 = vmatmul.mubr.bf16.gmra.mrb[0].mxu0 %v1232
          %v1271 = vpop.f32.mrb[0].mxu0
          %v1272 = vadd.f32 0.0, %v1271
          %v1273 = vpop.f32.mrb[0].mxu0
          %v1274 = vpop.f32.mrb[0].mxu0
          %v1275 = vpop.f32.mrb[0].mxu0
          %1276 = vdwg.mxu0
          %v1278 = vsel %vm705, %v1147, 0
          %v1281 = vsel %vm705, %v1230, 0
          %1283 = vmatprep.subr.bf16.mxu0 0
          %1284 = vmatpush1.bf16.xpose.msra.mxu0 %v1281
          %1285 = vmatprep.subr.bf16.mxu0 0
          %1286 = vmatpush1.bf16.xpose.msra.mxu0 0
          %1287 = vmatprep.subr.bf16.mxu0 0
          %1288 = vmatpush1.bf16.xpose.msra.mxu0 0
          %1289 = vmatprep.subr.bf16.mxu0 0
          %1290 = vmatpush1.bf16.xpose.msra.mxu0 0
          %1291 = vmatprep.subr.bf16.mxu0 0
          %1292 = vmatpush1.bf16.xpose.msra.mxu0 0
          %1293 = vmatprep.subr.bf16.mxu0 0
          %1294 = vmatpush1.bf16.xpose.msra.mxu0 0
          %1295 = vmatprep.subr.bf16.mxu0 0
          %1296 = vmatpush1.bf16.xpose.msra.mxu0 0
          %1297 = vmatprep.subr.bf16.mxu0 0
          %1298 = vmatpush1.bf16.xpose.msra.mxu0 0
          %1299 = vmatprep.subr.bf16.mxu0 0
          %1300 = vmatpush1.bf16.xpose.msra.mxu0 0
          %1301 = vmatprep.subr.bf16.mxu0 0
          %1302 = vmatpush1.bf16.xpose.msra.mxu0 0
          %1303 = vmatprep.subr.bf16.mxu0 0
          %1304 = vmatpush1.bf16.xpose.msra.mxu0 0
          %1305 = vmatprep.subr.bf16.mxu0 0
          %1306 = vmatpush1.bf16.xpose.msra.mxu0 0
          %1307 = vmatprep.subr.bf16.mxu0 0
          %1308 = vmatpush1.bf16.xpose.msra.mxu0 0
          %1309 = vmatprep.subr.bf16.mxu0 0
          %1310 = vmatpush1.bf16.xpose.msra.mxu0 0
          %1311 = vmatprep.subr.bf16.mxu0 0
          %1312 = vmatpush1.bf16.xpose.msra.mxu0 0
          %1313 = vmatprep.subr.bf16.mxu0 0
          %1314 = vmatpush1.bf16.xpose.msra.mxu0 0
          %1315 = vmatprep.mubr.bf16.mxu0 0
          %1316 = vmatmul.mubr.bf16.gmra.mrb[0].mxu0 %v1278
          %v1317 = vpop.f32.mrb[0].mxu0
          %v1318 = vadd.f32 0.0, %v1317
          %v1319 = vpop.f32.mrb[0].mxu0
          %v1320 = vpop.f32.mrb[0].mxu0
          %v1321 = vpop.f32.mrb[0].mxu0
          %1322 = vdwg.mxu0
          %vm1323 = vcmask 130048
          %v1324 = vsel %vm1323, %v1272, -inf
          %1325 = vmax.xlane.f32.xlu0 %v1324
          %v1326 = vpop.xlane.xlu0 %1325
          %v1327 = vsel %vm1323, %v1318, -inf
          %1328 = vmax.xlane.f32.xlu0 %v1327
          %v1329 = vpop.xlane.xlu0 %1328
          %v1330 = vsub.f32 %v1272, %v1326
          %v1331 = vsub.f32 %v1318, %v1329
          %v1332 = vmul.f32 %v1330, 1.442695
          %v1333 = vpow.pop %v1332
          %v1334 = vmul.f32 %v1331, 1.442695
          %v1335 = vpow.pop %v1334
          %v1336 = vsel %vm1323, %v1333, 0.0
          %1337 = vadd.xlane.f32.xlu0 %v1336
          %v1338 = vpop.xlane.xlu0 %1337
          %v1339 = vsel %vm1323, %v1335, 0.0
          %1340 = vadd.xlane.f32.xlu0 %v1339
          %v1341 = vpop.xlane.xlu0 %1340
          %v1342 = vrcp.pop %v1338
          %v1343 = vrcp.pop %v1341
          %v1344 = vmul.f32 %v1333, %v1342
          %v1345 = vmul.f32 %v1335, %v1343
          %v1346 = vpack.c.bf16 %v1344, %v1344
          %v1347 = vpack.c.bf16 %v1345, %v1345
          %1349 = vrot.lane.b32.xlu0 %v1229, 96
          %v1350 = vpop.permute.xlu0 %1349
          %v1353 = vsel %vm1323, %v1346, 0
          %1355 = vmatprep.subr.bf16.mxu0 0
          %1356 = vmatpush1.bf16.msra.mxu0 %v1350
          %1357 = vmatprep.subr.bf16.mxu0 0
          %1358 = vmatpush1.bf16.msra.mxu0 0
          %1359 = vmatprep.subr.bf16.mxu0 0
          %1360 = vmatpush1.bf16.msra.mxu0 0
          %1361 = vmatprep.subr.bf16.mxu0 0
          %1362 = vmatpush1.bf16.msra.mxu0 0
          %1363 = vmatprep.subr.bf16.mxu0 0
          %1364 = vmatpush1.bf16.msra.mxu0 0
          %1365 = vmatprep.subr.bf16.mxu0 0
          %1366 = vmatpush1.bf16.msra.mxu0 0
          %1367 = vmatprep.subr.bf16.mxu0 0
          %1368 = vmatpush1.bf16.msra.mxu0 0
          %1369 = vmatprep.subr.bf16.mxu0 0
          %1370 = vmatpush1.bf16.msra.mxu0 0
          %1371 = vmatprep.subr.bf16.mxu0 0
          %1372 = vmatpush1.bf16.msra.mxu0 0
          %1373 = vmatprep.subr.bf16.mxu0 0
          %1374 = vmatpush1.bf16.msra.mxu0 0
          %1375 = vmatprep.subr.bf16.mxu0 0
          %1376 = vmatpush1.bf16.msra.mxu0 0
          %1377 = vmatprep.subr.bf16.mxu0 0
          %1378 = vmatpush1.bf16.msra.mxu0 0
          %1379 = vmatprep.subr.bf16.mxu0 0
          %1380 = vmatpush1.bf16.msra.mxu0 0
          %1381 = vmatprep.subr.bf16.mxu0 0
          %1382 = vmatpush1.bf16.msra.mxu0 0
          %1383 = vmatprep.subr.bf16.mxu0 0
          %1384 = vmatpush1.bf16.msra.mxu0 0
          %1385 = vmatprep.subr.bf16.mxu0 0
          %1386 = vmatpush1.bf16.msra.mxu0 0
          %1387 = vmatprep.mubr.bf16.mxu0 0
          %1388 = vmatmul.mubr.bf16.gmra.mrb[0].mxu0 %v1353
          %v1389 = vpop.f32.mrb[0].mxu0
          %v1390 = vadd.f32 0.0, %v1389
          %v1391 = vpop.f32.mrb[0].mxu0
          %v1392 = vpop.f32.mrb[0].mxu0
          %v1393 = vpop.f32.mrb[0].mxu0
          %1394 = vdwg.mxu0
          %1396 = vrot.lane.b32.xlu0 %v1230, 96
          %v1397 = vpop.permute.xlu0 %1396
          %v1400 = vsel %vm1323, %v1347, 0
          %1402 = vmatprep.subr.bf16.mxu0 0
          %1403 = vmatpush1.bf16.msra.mxu0 %v1397
          %1404 = vmatprep.subr.bf16.mxu0 0
          %1405 = vmatpush1.bf16.msra.mxu0 0
          %1406 = vmatprep.subr.bf16.mxu0 0
          %1407 = vmatpush1.bf16.msra.mxu0 0
          %1408 = vmatprep.subr.bf16.mxu0 0
          %1409 = vmatpush1.bf16.msra.mxu0 0
          %1410 = vmatprep.subr.bf16.mxu0 0
          %1411 = vmatpush1.bf16.msra.mxu0 0
          %1412 = vmatprep.subr.bf16.mxu0 0
          %1413 = vmatpush1.bf16.msra.mxu0 0
          %1414 = vmatprep.subr.bf16.mxu0 0
          %1415 = vmatpush1.bf16.msra.mxu0 0
          %1416 = vmatprep.subr.bf16.mxu0 0
          %1417 = vmatpush1.bf16.msra.mxu0 0
          %1418 = vmatprep.subr.bf16.mxu0 0
          %1419 = vmatpush1.bf16.msra.mxu0 0
          %1420 = vmatprep.subr.bf16.mxu0 0
          %1421 = vmatpush1.bf16.msra.mxu0 0
          %1422 = vmatprep.subr.bf16.mxu0 0
          %1423 = vmatpush1.bf16.msra.mxu0 0
          %1424 = vmatprep.subr.bf16.mxu0 0
          %1425 = vmatpush1.bf16.msra.mxu0 0
          %1426 = vmatprep.subr.bf16.mxu0 0
          %1427 = vmatpush1.bf16.msra.mxu0 0
          %1428 = vmatprep.subr.bf16.mxu0 0
          %1429 = vmatpush1.bf16.msra.mxu0 0
          %1430 = vmatprep.subr.bf16.mxu0 0
          %1431 = vmatpush1.bf16.msra.mxu0 0
          %1432 = vmatprep.subr.bf16.mxu0 0
          %1433 = vmatpush1.bf16.msra.mxu0 0
          %1434 = vmatprep.mubr.bf16.mxu0 0
          %1435 = vmatmul.mubr.bf16.gmra.mrb[0].mxu0 %v1400
          %v1436 = vpop.f32.mrb[0].mxu0
          %v1437 = vadd.f32 0.0, %v1436
          %v1438 = vpop.f32.mrb[0].mxu0
          %v1439 = vpop.f32.mrb[0].mxu0
          %v1440 = vpop.f32.mrb[0].mxu0
          %1441 = vdwg.mxu0
          %v1442 = vld [vmem:[#allocation14] sm:$0xf]
          %v1443 = vld [vmem:[#allocation14 + $0x4] sm:$0xf]
          %v1444 = vld [vmem:[#allocation14 + $0x8] sm:$0xf]
          %v1445 = vld [vmem:[#allocation14 + $0xc] sm:$0xf]
          %v1446 = vpack.c.bf16 %v1437, %v1390
          %v1451 = vunpack.c.l.b16 %v1442
          %v1452 = vunpack.c.l.b16 %v1443
          %v1453 = vunpack.c.l.b16 %v1444
          %v1454 = vunpack.c.l.b16 %v1445
          %v1455 = vpack.c.b16 %v1452, %v1451
          %v1456 = vpack.c.b16 %v1454, %v1453
          %v1460 = vsel %vm705, %v1446, 0
          %1462 = vmatprep.subr.bf16.mxu0 0
          %1463 = vmatpush1.bf16.msra.mxu0 %v1455
          %1464 = vmatprep.subr.bf16.mxu0 0
          %1465 = vmatpush1.bf16.msra.mxu0 %v1456
          %1466 = vmatprep.subr.bf16.mxu0 0
          %1467 = vmatpush1.bf16.msra.mxu0 0
          %1468 = vmatprep.subr.bf16.mxu0 0
          %1469 = vmatpush1.bf16.msra.mxu0 0
          %1470 = vmatprep.subr.bf16.mxu0 0
          %1471 = vmatpush1.bf16.msra.mxu0 0
          %1472 = vmatprep.subr.bf16.mxu0 0
          %1473 = vmatpush1.bf16.msra.mxu0 0
          %1474 = vmatprep.subr.bf16.mxu0 0
          %1475 = vmatpush1.bf16.msra.mxu0 0
          %1476 = vmatprep.subr.bf16.mxu0 0
          %1477 = vmatpush1.bf16.msra.mxu0 0
          %1478 = vmatprep.subr.bf16.mxu0 0
          %1479 = vmatpush1.bf16.msra.mxu0 0
          %1480 = vmatprep.subr.bf16.mxu0 0
          %1481 = vmatpush1.bf16.msra.mxu0 0
          %1482 = vmatprep.subr.bf16.mxu0 0
          %1483 = vmatpush1.bf16.msra.mxu0 0
          %1484 = vmatprep.subr.bf16.mxu0 0
          %1485 = vmatpush1.bf16.msra.mxu0 0
          %1486 = vmatprep.subr.bf16.mxu0 0
          %1487 = vmatpush1.bf16.msra.mxu0 0
          %1488 = vmatprep.subr.bf16.mxu0 0
          %1489 = vmatpush1.bf16.msra.mxu0 0
          %1490 = vmatprep.subr.bf16.mxu0 0
          %1491 = vmatpush1.bf16.msra.mxu0 0
          %1492 = vmatprep.subr.bf16.mxu0 0
          %1493 = vmatpush1.bf16.msra.mxu0 0
          %1494 = vmatprep.mubr.bf16.mxu0 0
          %1495 = vmatmul.mubr.bf16.gmra.mrb[0].mxu0 %v1460
          %v1496 = vpop.f32.mrb[0].mxu0
          %v1497 = vadd.f32 0.0, %v1496
          %v1498 = vpop.f32.mrb[0].mxu0
          %v1499 = vpop.f32.mrb[0].mxu0
          %v1500 = vadd.f32 0.0, %v1499
          %v1501 = vpop.f32.mrb[0].mxu0
          %1502 = vdwg.mxu0
          %v1503 = vadd.f32 %v1083, %v1497
          %v1504 = vadd.f32 %v1084, %v1500
          %v1505 = vsel %vm705, %v1503, 0.0
          %1506 = vadd.xlane.f32.xlu0 %v1505
          %v1507 = vpop.xlane.xlu0 %1506
          %v1508 = vsel %vm705, %v1504, 0.0
          %1509 = vadd.xlane.f32.xlu0 %v1508
          %v1510 = vpop.xlane.xlu0 %1509
          %v1511 = vmul.f32 %v1503, %v1503
          %v1512 = vmul.f32 %v1504, %v1504
          %v1513 = vsel %vm705, %v1511, 0.0
          %1514 = vadd.xlane.f32.xlu0 %v1513
          %v1515 = vpop.xlane.xlu0 %1514
          %v1516 = vsel %vm705, %v1512, 0.0
          %1517 = vadd.xlane.f32.xlu0 %v1516
          %v1518 = vpop.xlane.xlu0 %1517
          %v1519 = vmul.f32 %v1507, 0.03125
          %v1520 = vmul.f32 %v1510, 0.03125
          %v1521 = vmul.f32 %v1515, 0.03125
          %v1522 = vmul.f32 %v1518, 0.03125
          %v1523 = vmul.f32 %v1519, %v1519
          %v1524 = vmul.f32 %v1520, %v1520
          %v1525 = vsub.f32 %v1521, %v1523
          %v1526 = vsub.f32 %v1522, %v1524
          %v1527 = vmax.f32 %v1525, 0.0
          %v1528 = vmax.f32 %v1526, 0.0
          %v1529 = vsub.f32 %v1503, %v1519
          %v1530 = vsub.f32 %v1504, %v1520
          %v1531 = vadd.f32 %v1527, 1e-05
          %v1532 = vadd.f32 %v1528, 1e-05
          %v1533 = vrsqrt.pop %v1531
          %v1534 = vrsqrt.pop %v1532
          %v1535 = vmul.f32 %v1529, %v1533
          %v1536 = vmul.f32 %v1530, %v1534
          %s1537 = scalar_lea.vmem [#allocation21], 1
          %v1538 = vld [vmem:[%s1537] sm:$0x1]
          %v1540 = vlaneseq
          %v1541 = vshrl.u32 %v1540, 7
          %v1542 = vsub.s32 0, %v1541
          %v1543 = vrot.slane %v1538, %v1542
          %v1545 = vmul.f32 %v1535, %v1543
          %v1546 = vmul.f32 %v1536, %v1543
          %s1547 = scalar_lea.vmem [#allocation23], 1
          %v1548 = vld [vmem:[%s1547] sm:$0x1]
          %v1550 = vlaneseq
          %v1551 = vshrl.u32 %v1550, 7
          %v1552 = vsub.s32 0, %v1551
          %v1553 = vrot.slane %v1548, %v1552
          %v1555 = vadd.f32 %v1545, %v1553
          %v1556 = vadd.f32 %v1546, %v1553
          %v1557 = vld [vmem:[#allocation15] sm:$0xf]
          %v1558 = vld [vmem:[#allocation15 + $0x4] sm:$0xf]
          %v1559 = vld [vmem:[#allocation15 + $0x8] sm:$0xf]
          %v1560 = vld [vmem:[#allocation15 + $0xc] sm:$0xf]
          %v1561 = vpack.c.bf16 %v1556, %v1555
          %v1562 = vld [vmem:[#allocation17] sm:$0x1]
          %v1564 = vlaneseq
          %v1565 = vshrl.u32 %v1564, 7
          %v1566 = vsub.s32 0, %v1565
          %v1567 = vrot.slane %v1562, %v1566
          %v1573 = vunpack.c.l.b16 %v1557
          %v1574 = vunpack.c.l.b16 %v1558
          %v1575 = vunpack.c.l.b16 %v1559
          %v1576 = vunpack.c.l.b16 %v1560
          %v1577 = vpack.c.b16 %v1574, %v1573
          %v1578 = vpack.c.b16 %v1576, %v1575
          %v1582 = vsel %vm705, %v1561, 0
          %1584 = vmatprep.subr.bf16.mxu0 0
          %1585 = vmatpush1.bf16.msra.mxu0 %v1577
          %1586 = vmatprep.subr.bf16.mxu0 0
          %1587 = vmatpush1.bf16.msra.mxu0 %v1578
          %1588 = vmatprep.subr.bf16.mxu0 0
          %1589 = vmatpush1.bf16.msra.mxu0 0
          %1590 = vmatprep.subr.bf16.mxu0 0
          %1591 = vmatpush1.bf16.msra.mxu0 0
          %1592 = vmatprep.subr.bf16.mxu0 0
          %1593 = vmatpush1.bf16.msra.mxu0 0
          %1594 = vmatprep.subr.bf16.mxu0 0
          %1595 = vmatpush1.bf16.msra.mxu0 0
          %1596 = vmatprep.subr.bf16.mxu0 0
          %1597 = vmatpush1.bf16.msra.mxu0 0
          %1598 = vmatprep.subr.bf16.mxu0 0
          %1599 = vmatpush1.bf16.msra.mxu0 0
          %1600 = vmatprep.subr.bf16.mxu0 0
          %1601 = vmatpush1.bf16.msra.mxu0 0
          %1602 = vmatprep.subr.bf16.mxu0 0
          %1603 = vmatpush1.bf16.msra.mxu0 0
          %1604 = vmatprep.subr.bf16.mxu0 0
          %1605 = vmatpush1.bf16.msra.mxu0 0
          %1606 = vmatprep.subr.bf16.mxu0 0
          %1607 = vmatpush1.bf16.msra.mxu0 0
          %1608 = vmatprep.subr.bf16.mxu0 0
          %1609 = vmatpush1.bf16.msra.mxu0 0
          %1610 = vmatprep.subr.bf16.mxu0 0
          %1611 = vmatpush1.bf16.msra.mxu0 0
          %1612 = vmatprep.subr.bf16.mxu0 0
          %1613 = vmatpush1.bf16.msra.mxu0 0
          %1614 = vmatprep.subr.bf16.mxu0 0
          %1615 = vmatpush1.bf16.msra.mxu0 0
          %1616 = vmatprep.mubr.bf16.mxu0 0
          %1617 = vmatmul.mubr.bf16.gmra.mrb[0].mxu0 %v1582
          %v1618 = vpop.f32.mrb[0].mxu0
          %v1619 = vadd.f32 %v1567, %v1618
          %v1620 = vpop.f32.mrb[0].mxu0
          %v1621 = vpop.f32.mrb[0].mxu0
          %v1622 = vadd.f32 %v1567, %v1621
          %v1623 = vpop.f32.mrb[0].mxu0
          %1624 = vdwg.mxu0
          %v1625 = vmax.f32 %v1619, 0.0
          %v1626 = vmax.f32 %v1622, 0.0
          %v1627 = vld [vmem:[#allocation18] sm:$0xf]
          %v1628 = vld [vmem:[#allocation18 + $0x4] sm:$0xf]
          %v1629 = vld [vmem:[#allocation18 + $0x8] sm:$0xf]
          %v1630 = vld [vmem:[#allocation18 + $0xc] sm:$0xf]
          %v1631 = vld [vmem:[#allocation18 + $0x10] sm:$0xf]
          %v1632 = vld [vmem:[#allocation18 + $0x14] sm:$0xf]
          %v1633 = vld [vmem:[#allocation18 + $0x18] sm:$0xf]
          %v1634 = vld [vmem:[#allocation18 + $0x1c] sm:$0xf]
          %v1635 = vpack.c.bf16 %v1626, %v1625
          %v1636 = vld [vmem:[#allocation20] sm:$0x1]
          %v1638 = vlaneseq
          %v1639 = vshrl.u32 %v1638, 7
          %v1640 = vsub.s32 0, %v1639
          %v1641 = vrot.slane %v1636, %v1640
          %v1651 = vunpack.c.l.b16 %v1627
          %v1652 = vunpack.c.l.b16 %v1628
          %v1653 = vunpack.c.l.b16 %v1629
          %v1654 = vunpack.c.l.b16 %v1630
          %v1655 = vunpack.c.l.b16 %v1631
          %v1656 = vunpack.c.l.b16 %v1632
          %v1657 = vunpack.c.l.b16 %v1633
          %v1658 = vunpack.c.l.b16 %v1634
          %v1659 = vpack.c.b16 %v1652, %v1651
          %v1660 = vpack.c.b16 %v1654, %v1653
          %v1661 = vpack.c.b16 %v1656, %v1655
          %v1662 = vpack.c.b16 %v1658, %v1657
          %vm1667 = vcmask 523264
          %v1669 = vsel %vm1667, %v1635, 0
          %1671 = vmatprep.subr.bf16.mxu0 0
          %1672 = vmatpush1.bf16.msra.mxu0 %v1659
          %1673 = vmatprep.subr.bf16.mxu0 0
          %1674 = vmatpush1.bf16.msra.mxu0 %v1660
          %1675 = vmatprep.subr.bf16.mxu0 0
          %1676 = vmatpush1.bf16.msra.mxu0 %v1661
          %1677 = vmatprep.subr.bf16.mxu0 0
          %1678 = vmatpush1.bf16.msra.mxu0 %v1662
          %1679 = vmatprep.subr.bf16.mxu0 0
          %1680 = vmatpush1.bf16.msra.mxu0 0
          %1681 = vmatprep.subr.bf16.mxu0 0
          %1682 = vmatpush1.bf16.msra.mxu0 0
          %1683 = vmatprep.subr.bf16.mxu0 0
          %1684 = vmatpush1.bf16.msra.mxu0 0
          %1685 = vmatprep.subr.bf16.mxu0 0
          %1686 = vmatpush1.bf16.msra.mxu0 0
          %1687 = vmatprep.subr.bf16.mxu0 0
          %1688 = vmatpush1.bf16.msra.mxu0 0
          %1689 = vmatprep.subr.bf16.mxu0 0
          %1690 = vmatpush1.bf16.msra.mxu0 0
          %1691 = vmatprep.subr.bf16.mxu0 0
          %1692 = vmatpush1.bf16.msra.mxu0 0
          %1693 = vmatprep.subr.bf16.mxu0 0
          %1694 = vmatpush1.bf16.msra.mxu0 0
          %1695 = vmatprep.subr.bf16.mxu0 0
          %1696 = vmatpush1.bf16.msra.mxu0 0
          %1697 = vmatprep.subr.bf16.mxu0 0
          %1698 = vmatpush1.bf16.msra.mxu0 0
          %1699 = vmatprep.subr.bf16.mxu0 0
          %1700 = vmatpush1.bf16.msra.mxu0 0
          %1701 = vmatprep.subr.bf16.mxu0 0
          %1702 = vmatpush1.bf16.msra.mxu0 0
          %1703 = vmatprep.mubr.bf16.mxu0 0
          %1704 = vmatmul.mubr.bf16.gmra.mrb[0].mxu0 %v1669
          %v1705 = vpop.f32.mrb[0].mxu0
          %v1706 = vadd.f32 %v1641, %v1705
          %v1707 = vpop.f32.mrb[0].mxu0
          %v1708 = vpop.f32.mrb[0].mxu0
          %v1709 = vadd.f32 %v1641, %v1708
          %v1710 = vpop.f32.mrb[0].mxu0
          %1711 = vdwg.mxu0
          %v1712 = vadd.f32 %v1555, %v1706
          %v1713 = vadd.f32 %v1556, %v1709
          %v1714 = vsel %vm705, %v1712, 0.0
          %1715 = vadd.xlane.f32.xlu0 %v1714
          %v1716 = vpop.xlane.xlu0 %1715
          %v1717 = vsel %vm705, %v1713, 0.0
          %1718 = vadd.xlane.f32.xlu0 %v1717
          %v1719 = vpop.xlane.xlu0 %1718
          %v1720 = vmul.f32 %v1712, %v1712
          %v1721 = vmul.f32 %v1713, %v1713
          %v1722 = vsel %vm705, %v1720, 0.0
          %1723 = vadd.xlane.f32.xlu0 %v1722
          %v1724 = vpop.xlane.xlu0 %1723
          %v1725 = vsel %vm705, %v1721, 0.0
          %1726 = vadd.xlane.f32.xlu0 %v1725
          %v1727 = vpop.xlane.xlu0 %1726
          %v1728 = vmul.f32 %v1716, 0.03125
          %v1729 = vmul.f32 %v1719, 0.03125
          %v1730 = vmul.f32 %v1724, 0.03125
          %v1731 = vmul.f32 %v1727, 0.03125
          %v1732 = vmul.f32 %v1728, %v1728
          %v1733 = vmul.f32 %v1729, %v1729
          %v1734 = vsub.f32 %v1730, %v1732
          %v1735 = vsub.f32 %v1731, %v1733
          %v1736 = vmax.f32 %v1734, 0.0
          %v1737 = vmax.f32 %v1735, 0.0
          %v1738 = vsub.f32 %v1712, %v1728
          %v1739 = vsub.f32 %v1713, %v1729
          %v1740 = vadd.f32 %v1736, 1e-05
          %v1741 = vadd.f32 %v1737, 1e-05
          %v1742 = vrsqrt.pop %v1740
          %v1743 = vrsqrt.pop %v1741
          %v1744 = vmul.f32 %v1738, %v1742
          %v1745 = vmul.f32 %v1739, %v1743
          %s1746 = scalar_lea.vmem [#allocation21], 2
          %v1747 = vld [vmem:[%s1746] sm:$0x1]
          %v1749 = vlaneseq
          %v1750 = vshrl.u32 %v1749, 7
          %v1751 = vsub.s32 0, %v1750
          %v1752 = vrot.slane %v1747, %v1751
          %v1754 = vmul.f32 %v1744, %v1752
          %v1755 = vmul.f32 %v1745, %v1752
          %s1756 = scalar_lea.vmem [#allocation23], 2
          %v1757 = vld [vmem:[%s1756] sm:$0x1]
          %v1759 = vlaneseq
          %v1760 = vshrl.u32 %v1759, 7
          %v1761 = vsub.s32 0, %v1760
          %v1762 = vrot.slane %v1757, %v1761
          %v1764 = vadd.f32 %v1754, %v1762
          %v1765 = vadd.f32 %v1755, %v1762
          %v1766 = vpack.c.bf16 %v1764, %v1764
          %v1767 = vpack.c.bf16 %v1765, %v1765
          %v1771 = vunpack.c.l.s4 1966171168
          %v1772 = vunpack.c.0.s8 %v1771
          %v1773 = vlaneseq
          %v1774 = vshrl.u32 %v1773, 7
          %v1775 = vsub.s32 %v1772, %v1774
          %v1776 = vrot.slane %v1766, %v1775
          %v1778 = vunpack.c.l.s4 1966171168
          %v1779 = vunpack.c.0.s8 %v1778
          %v1780 = vlaneseq
          %v1781 = vshrl.u32 %v1780, 7
          %v1782 = vsub.s32 %v1779, %v1781
          %v1783 = vrot.slane %v1776, %v1782
          %v1785 = vunpack.c.l.s4 1966171168
          %v1786 = vunpack.c.0.s8 %v1785
          %v1787 = vlaneseq
          %v1788 = vshrl.u32 %v1787, 7
          %v1789 = vsub.s32 %v1786, %v1788
          %v1790 = vrot.slane %v1767, %v1789
          %v1792 = vunpack.c.l.s4 1966171168
          %v1793 = vunpack.c.0.s8 %v1792
          %v1794 = vlaneseq
          %v1795 = vshrl.u32 %v1794, 7
          %v1796 = vsub.s32 %v1793, %v1795
          %v1797 = vrot.slane %v1790, %v1796
          %v1799 = vunpack.c.l.s4 1935823168
          %v1800 = vunpack.c.0.s8 %v1799
          %v1801 = vlaneseq
          %v1802 = vshrl.u32 %v1801, 7
          %v1803 = vsub.s32 %v1800, %v1802
          %v1804 = vrot.slane %v1783, %v1803
          %v1806 = vunpack.c.l.s4 1935823168
          %v1807 = vunpack.c.0.s8 %v1806
          %v1808 = vlaneseq
          %v1809 = vshrl.u32 %v1808, 7
          %v1810 = vsub.s32 %v1807, %v1809
          %v1811 = vrot.slane %v1804, %v1810
          %v1813 = vunpack.c.l.s4 1935823168
          %v1814 = vunpack.c.0.s8 %v1813
          %v1815 = vlaneseq
          %v1816 = vshrl.u32 %v1815, 7
          %v1817 = vsub.s32 %v1814, %v1816
          %v1818 = vrot.slane %v1797, %v1817
          %v1820 = vunpack.c.l.s4 1935823168
          %v1821 = vunpack.c.0.s8 %v1820
          %v1822 = vlaneseq
          %v1823 = vshrl.u32 %v1822, 7
          %v1824 = vsub.s32 %v1821, %v1823
          %v1825 = vrot.slane %v1818, %v1824
          %v1826 = vunpack.c.l.b16 %v1811
          %v1827 = vunpack.c.l.b16 %v1825
          %v1828 = vrot.slane %v1827, 7
          %vm1829 = vcmask 1041409
          %v1830 = vsel %vm1829, %v1828, %v1826
          %v1831 = vpack.c.b16 %v1830, %v1830
          %v1833 = vunpack.c.l.s4 1966171168
          %v1834 = vunpack.c.0.s8 %v1833
          %v1835 = vlaneseq
          %v1836 = vshrl.u32 %v1835, 7
          %v1837 = vsub.s32 %v1834, %v1836
          %v1838 = vrot.slane %v1831, %v1837
          %v1840 = vunpack.c.l.s4 1966171168
          %v1841 = vunpack.c.0.s8 %v1840
          %v1842 = vlaneseq
          %v1843 = vshrl.u32 %v1842, 7
          %v1844 = vsub.s32 %v1841, %v1843
          %v1845 = vrot.slane %v1838, %v1844
          %s1847 = smul.u32 %s680, 2
          %s1848 = scalar_lea.vmem %s655, %s1847 [#allocation24]
          %vm1849 = vcmask 253952
          %1850 = vst.msk [vmem:[%s1848] sm:$0x1] %vm1849, %v1845
          %v1851 = vrot.slane %v1826, 1
          %v1852 = vsel %vm1829, %v1827, %v1851
          %v1853 = vpack.c.b16 %v1852, %v1852
          %v1855 = vunpack.c.l.s4 1966171168
          %v1856 = vunpack.c.0.s8 %v1855
          %v1857 = vlaneseq
          %v1858 = vshrl.u32 %v1857, 7
          %v1859 = vsub.s32 %v1856, %v1858
          %v1860 = vrot.slane %v1853, %v1859
          %v1862 = vunpack.c.l.s4 1966171168
          %v1863 = vunpack.c.0.s8 %v1862
          %v1864 = vlaneseq
          %v1865 = vshrl.u32 %v1864, 7
          %v1866 = vsub.s32 %v1863, %v1865
          %v1867 = vrot.slane %v1860, %v1866
          %1868 = vrot.lane.b32.xlu0 %v1867, 32
          %v1869 = vpop.permute.xlu0 %1868
          %vm1871 = vcmask 516352
          %1872 = vst.msk [vmem:[%s1848] sm:$0x1] %vm1871, %v1869
          %v1873 = vcombine.high %v1776, %v1776
          %v1875 = vunpack.c.l.s4 1966171168
          %v1876 = vunpack.c.0.s8 %v1875
          %v1877 = vlaneseq
          %v1878 = vshrl.u32 %v1877, 7
          %v1879 = vsub.s32 %v1876, %v1878
          %v1880 = vrot.slane %v1873, %v1879
          %v1881 = vcombine.high %v1790, %v1790
          %v1883 = vunpack.c.l.s4 1966171168
          %v1884 = vunpack.c.0.s8 %v1883
          %v1885 = vlaneseq
          %v1886 = vshrl.u32 %v1885, 7
          %v1887 = vsub.s32 %v1884, %v1886
          %v1888 = vrot.slane %v1881, %v1887
          %v1890 = vunpack.c.l.s4 1935823168
          %v1891 = vunpack.c.0.s8 %v1890
          %v1892 = vlaneseq
          %v1893 = vshrl.u32 %v1892, 7
          %v1894 = vsub.s32 %v1891, %v1893
          %v1895 = vrot.slane %v1880, %v1894
          %v1897 = vunpack.c.l.s4 1935823168
          %v1898 = vunpack.c.0.s8 %v1897
          %v1899 = vlaneseq
          %v1900 = vshrl.u32 %v1899, 7
          %v1901 = vsub.s32 %v1898, %v1900
          %v1902 = vrot.slane %v1895, %v1901
          %v1904 = vunpack.c.l.s4 1935823168
          %v1905 = vunpack.c.0.s8 %v1904
          %v1906 = vlaneseq
          %v1907 = vshrl.u32 %v1906, 7
          %v1908 = vsub.s32 %v1905, %v1907
          %v1909 = vrot.slane %v1888, %v1908
          %v1911 = vunpack.c.l.s4 1935823168
          %v1912 = vunpack.c.0.s8 %v1911
          %v1913 = vlaneseq
          %v1914 = vshrl.u32 %v1913, 7
          %v1915 = vsub.s32 %v1912, %v1914
          %v1916 = vrot.slane %v1909, %v1915
          %v1917 = vunpack.c.l.b16 %v1902
          %v1918 = vunpack.c.l.b16 %v1916
          %v1919 = vrot.slane %v1918, 7
          %v1920 = vsel %vm1829, %v1919, %v1917
          %v1921 = vpack.c.b16 %v1920, %v1920
          %v1923 = vunpack.c.l.s4 1966171168
          %v1924 = vunpack.c.0.s8 %v1923
          %v1925 = vlaneseq
          %v1926 = vshrl.u32 %v1925, 7
          %v1927 = vsub.s32 %v1924, %v1926
          %v1928 = vrot.slane %v1921, %v1927
          %v1930 = vunpack.c.l.s4 1966171168
          %v1931 = vunpack.c.0.s8 %v1930
          %v1932 = vlaneseq
          %v1933 = vshrl.u32 %v1932, 7
          %v1934 = vsub.s32 %v1931, %v1933
          %v1935 = vrot.slane %v1928, %v1934
          %1936 = vrot.lane.b32.xlu0 %v1935, 64
          %v1937 = vpop.permute.xlu0 %1936
          %vm1939 = vcmask 778752
          %1940 = vst.msk [vmem:[%s1848] sm:$0x1] %vm1939, %v1937
          %v1941 = vrot.slane %v1917, 1
          %v1942 = vsel %vm1829, %v1918, %v1941
          %v1943 = vpack.c.b16 %v1942, %v1942
          %v1945 = vunpack.c.l.s4 1966171168
          %v1946 = vunpack.c.0.s8 %v1945
          %v1947 = vlaneseq
          %v1948 = vshrl.u32 %v1947, 7
          %v1949 = vsub.s32 %v1946, %v1948
          %v1950 = vrot.slane %v1943, %v1949
          %v1952 = vunpack.c.l.s4 1966171168
          %v1953 = vunpack.c.0.s8 %v1952
          %v1954 = vlaneseq
          %v1955 = vshrl.u32 %v1954, 7
          %v1956 = vsub.s32 %v1953, %v1955
          %v1957 = vrot.slane %v1950, %v1956
          %1958 = vrot.lane.b32.xlu0 %v1957, 96
          %v1959 = vpop.permute.xlu0 %1958
          %vm1961 = vcmask 1041152
          %1962 = vst.msk [vmem:[%s1848] sm:$0x1] %vm1961, %v1959
          %v1963 = vcombine.high %v1783, %v1783
          %v1964 = vcombine.high %v1797, %v1797
          %v1966 = vunpack.c.l.s4 1935823168
          %v1967 = vunpack.c.0.s8 %v1966
          %v1968 = vlaneseq
          %v1969 = vshrl.u32 %v1968, 7
          %v1970 = vsub.s32 %v1967, %v1969
          %v1971 = vrot.slane %v1963, %v1970
          %v1973 = vunpack.c.l.s4 1935823168
          %v1974 = vunpack.c.0.s8 %v1973
          %v1975 = vlaneseq
          %v1976 = vshrl.u32 %v1975, 7
          %v1977 = vsub.s32 %v1974, %v1976
          %v1978 = vrot.slane %v1971, %v1977
          %v1980 = vunpack.c.l.s4 1935823168
          %v1981 = vunpack.c.0.s8 %v1980
          %v1982 = vlaneseq
          %v1983 = vshrl.u32 %v1982, 7
          %v1984 = vsub.s32 %v1981, %v1983
          %v1985 = vrot.slane %v1964, %v1984
          %v1987 = vunpack.c.l.s4 1935823168
          %v1988 = vunpack.c.0.s8 %v1987
          %v1989 = vlaneseq
          %v1990 = vshrl.u32 %v1989, 7
          %v1991 = vsub.s32 %v1988, %v1990
          %v1992 = vrot.slane %v1985, %v1991
          %v1993 = vunpack.c.l.b16 %v1978
          %v1994 = vunpack.c.l.b16 %v1992
          %v1995 = vrot.slane %v1994, 7
          %v1996 = vsel %vm1829, %v1995, %v1993
          %v1997 = vpack.c.b16 %v1996, %v1996
          %v1999 = vunpack.c.l.s4 1966171168
          %v2000 = vunpack.c.0.s8 %v1999
          %v2001 = vlaneseq
          %v2002 = vshrl.u32 %v2001, 7
          %v2003 = vsub.s32 %v2000, %v2002
          %v2004 = vrot.slane %v1997, %v2003
          %v2006 = vunpack.c.l.s4 1966171168
          %v2007 = vunpack.c.0.s8 %v2006
          %v2008 = vlaneseq
          %v2009 = vshrl.u32 %v2008, 7
          %v2010 = vsub.s32 %v2007, %v2009
          %v2011 = vrot.slane %v2004, %v2010
          %2013 = vst.msk [vmem:[%s1848 + $0x1] sm:$0x1] %vm1849, %v2011
          %v2014 = vrot.slane %v1993, 1
          %v2015 = vsel %vm1829, %v1994, %v2014
          %v2016 = vpack.c.b16 %v2015, %v2015
          %v2018 = vunpack.c.l.s4 1966171168
          %v2019 = vunpack.c.0.s8 %v2018
          %v2020 = vlaneseq
          %v2021 = vshrl.u32 %v2020, 7
          %v2022 = vsub.s32 %v2019, %v2021
          %v2023 = vrot.slane %v2016, %v2022
          %v2025 = vunpack.c.l.s4 1966171168
          %v2026 = vunpack.c.0.s8 %v2025
          %v2027 = vlaneseq
          %v2028 = vshrl.u32 %v2027, 7
          %v2029 = vsub.s32 %v2026, %v2028
          %v2030 = vrot.slane %v2023, %v2029
          %2031 = vrot.lane.b32.xlu0 %v2030, 32
          %v2032 = vpop.permute.xlu0 %2031
          %2034 = vst.msk [vmem:[%s1848 + $0x1] sm:$0x1] %vm1871, %v2032
          %v2035 = vcombine.high %v1880, %v1880
          %v2036 = vcombine.high %v1888, %v1888
          %v2038 = vunpack.c.l.s4 1935823168
          %v2039 = vunpack.c.0.s8 %v2038
          %v2040 = vlaneseq
          %v2041 = vshrl.u32 %v2040, 7
          %v2042 = vsub.s32 %v2039, %v2041
          %v2043 = vrot.slane %v2035, %v2042
          %v2045 = vunpack.c.l.s4 1935823168
          %v2046 = vunpack.c.0.s8 %v2045
          %v2047 = vlaneseq
          %v2048 = vshrl.u32 %v2047, 7
          %v2049 = vsub.s32 %v2046, %v2048
          %v2050 = vrot.slane %v2043, %v2049
          %v2052 = vunpack.c.l.s4 1935823168
          %v2053 = vunpack.c.0.s8 %v2052
          %v2054 = vlaneseq
          %v2055 = vshrl.u32 %v2054, 7
          %v2056 = vsub.s32 %v2053, %v2055
          %v2057 = vrot.slane %v2036, %v2056
          %v2059 = vunpack.c.l.s4 1935823168
          %v2060 = vunpack.c.0.s8 %v2059
          %v2061 = vlaneseq
          %v2062 = vshrl.u32 %v2061, 7
          %v2063 = vsub.s32 %v2060, %v2062
          %v2064 = vrot.slane %v2057, %v2063
          %v2065 = vunpack.c.l.b16 %v2050
          %v2066 = vunpack.c.l.b16 %v2064
          %v2067 = vrot.slane %v2066, 7
          %v2068 = vsel %vm1829, %v2067, %v2065
          %v2069 = vpack.c.b16 %v2068, %v2068
          %v2071 = vunpack.c.l.s4 1966171168
          %v2072 = vunpack.c.0.s8 %v2071
          %v2073 = vlaneseq
          %v2074 = vshrl.u32 %v2073, 7
          %v2075 = vsub.s32 %v2072, %v2074
          %v2076 = vrot.slane %v2069, %v2075
          %v2078 = vunpack.c.l.s4 1966171168
          %v2079 = vunpack.c.0.s8 %v2078
          %v2080 = vlaneseq
          %v2081 = vshrl.u32 %v2080, 7
          %v2082 = vsub.s32 %v2079, %v2081
          %v2083 = vrot.slane %v2076, %v2082
          %2084 = vrot.lane.b32.xlu0 %v2083, 64
          %v2085 = vpop.permute.xlu0 %2084
          %2087 = vst.msk [vmem:[%s1848 + $0x1] sm:$0x1] %vm1939, %v2085
          %v2088 = vrot.slane %v2065, 1
          %v2089 = vsel %vm1829, %v2066, %v2088
          %v2090 = vpack.c.b16 %v2089, %v2089
          %v2092 = vunpack.c.l.s4 1966171168
          %v2093 = vunpack.c.0.s8 %v2092
          %v2094 = vlaneseq
          %v2095 = vshrl.u32 %v2094, 7
          %v2096 = vsub.s32 %v2093, %v2095
          %v2097 = vrot.slane %v2090, %v2096
          %v2099 = vunpack.c.l.s4 1966171168
          %v2100 = vunpack.c.0.s8 %v2099
          %v2101 = vlaneseq
          %v2102 = vshrl.u32 %v2101, 7
          %v2103 = vsub.s32 %v2100, %v2102
          %v2104 = vrot.slane %v2097, %v2103
          %2105 = vrot.lane.b32.xlu0 %v2104, 96
          %v2106 = vpop.permute.xlu0 %2105
          %2108 = vst.msk [vmem:[%s1848 + $0x1] sm:$0x1] %vm1961, %v2106
          %s2109 = sadd.s32 %s680, 1
          %s2110 = smul.u32 %s2109, 4
          %s2111 = smul.addr %s2110, 4
          %s2112 = scalar_lea.vmem %s565, %s2111 [#allocation3]
          %v2113 = vld [vmem:[%s2112] sm:$0xf]
          %v2114 = vld [vmem:[%s2112 + $0x4] sm:$0xf]
          %v2115 = vld [vmem:[%s2112 + $0x8] sm:$0xf]
          %v2116 = vld [vmem:[%s2112 + $0xc] sm:$0xf]
          %v2117 = vpack.c.bf16 %v1765, %v1764
          %v2118 = vld [vmem:[#allocation8] sm:$0xf]
          %v2119 = vld [vmem:[#allocation8 + $0x4] sm:$0xf]
          %v2120 = vld [vmem:[#allocation8 + $0x8] sm:$0xf]
          %v2121 = vld [vmem:[#allocation8 + $0xc] sm:$0xf]
          %v2126 = vunpack.c.l.b16 %v2118
          %v2127 = vunpack.c.l.b16 %v2119
          %v2128 = vunpack.c.l.b16 %v2120
          %v2129 = vunpack.c.l.b16 %v2121
          %v2130 = vpack.c.b16 %v2127, %v2126
          %v2131 = vpack.c.b16 %v2129, %v2128
          %v2135 = vsel %vm705, %v2117, 0
          %2137 = vmatprep.subr.bf16.mxu0 0
          %2138 = vmatpush1.bf16.msra.mxu0 %v2130
          %2139 = vmatprep.subr.bf16.mxu0 0
          %2140 = vmatpush1.bf16.msra.mxu0 %v2131
          %2141 = vmatprep.subr.bf16.mxu0 0
          %2142 = vmatpush1.bf16.msra.mxu0 0
          %2143 = vmatprep.subr.bf16.mxu0 0
          %2144 = vmatpush1.bf16.msra.mxu0 0
          %2145 = vmatprep.subr.bf16.mxu0 0
          %2146 = vmatpush1.bf16.msra.mxu0 0
          %2147 = vmatprep.subr.bf16.mxu0 0
          %2148 = vmatpush1.bf16.msra.mxu0 0
          %2149 = vmatprep.subr.bf16.mxu0 0
          %2150 = vmatpush1.bf16.msra.mxu0 0
          %2151 = vmatprep.subr.bf16.mxu0 0
          %2152 = vmatpush1.bf16.msra.mxu0 0
          %2153 = vmatprep.subr.bf16.mxu0 0
          %2154 = vmatpush1.bf16.msra.mxu0 0
          %2155 = vmatprep.subr.bf16.mxu0 0
          %2156 = vmatpush1.bf16.msra.mxu0 0
          %2157 = vmatprep.subr.bf16.mxu0 0
          %2158 = vmatpush1.bf16.msra.mxu0 0
          %2159 = vmatprep.subr.bf16.mxu0 0
          %2160 = vmatpush1.bf16.msra.mxu0 0
          %2161 = vmatprep.subr.bf16.mxu0 0
          %2162 = vmatpush1.bf16.msra.mxu0 0
          %2163 = vmatprep.subr.bf16.mxu0 0
          %2164 = vmatpush1.bf16.msra.mxu0 0
          %2165 = vmatprep.subr.bf16.mxu0 0
          %2166 = vmatpush1.bf16.msra.mxu0 0
          %2167 = vmatprep.subr.bf16.mxu0 0
          %2168 = vmatpush1.bf16.msra.mxu0 0
          %2169 = vmatprep.mubr.bf16.mxu0 0
          %2170 = vmatmul.mubr.bf16.gmra.mrb[0].mxu0 %v2135
          %v2171 = vpop.f32.mrb[0].mxu0
          %v2172 = vadd.f32 0.0, %v2171
          %v2173 = vpop.f32.mrb[0].mxu0
          %v2174 = vpop.f32.mrb[0].mxu0
          %v2175 = vadd.f32 0.0, %v2174
          %v2176 = vpop.f32.mrb[0].mxu0
          %2177 = vdwg.mxu0
          %v2178 = vpack.c.bf16 %v2172, %v2172
          %v2179 = vpack.c.bf16 %v2175, %v2175
          %2181 = vrot.lane.b32.xlu0 %v2178, 96
          %v2182 = vpop.permute.xlu0 %2181
          %v2184 = vsel %vm705, %v2178, 0
          %v2187 = vsel %vm705, %v2182, 0
          %2189 = vmatprep.subr.bf16.mxu0 0
          %2190 = vmatpush1.bf16.xpose.msra.mxu0 %v2187
          %2191 = vmatprep.subr.bf16.mxu0 0
          %2192 = vmatpush1.bf16.xpose.msra.mxu0 0
          %2193 = vmatprep.subr.bf16.mxu0 0
          %2194 = vmatpush1.bf16.xpose.msra.mxu0 0
          %2195 = vmatprep.subr.bf16.mxu0 0
          %2196 = vmatpush1.bf16.xpose.msra.mxu0 0
          %2197 = vmatprep.subr.bf16.mxu0 0
          %2198 = vmatpush1.bf16.xpose.msra.mxu0 0
          %2199 = vmatprep.subr.bf16.mxu0 0
          %2200 = vmatpush1.bf16.xpose.msra.mxu0 0
          %2201 = vmatprep.subr.bf16.mxu0 0
          %2202 = vmatpush1.bf16.xpose.msra.mxu0 0
          %2203 = vmatprep.subr.bf16.mxu0 0
          %2204 = vmatpush1.bf16.xpose.msra.mxu0 0
          %2205 = vmatprep.subr.bf16.mxu0 0
          %2206 = vmatpush1.bf16.xpose.msra.mxu0 0
          %2207 = vmatprep.subr.bf16.mxu0 0
          %2208 = vmatpush1.bf16.xpose.msra.mxu0 0
          %2209 = vmatprep.subr.bf16.mxu0 0
          %2210 = vmatpush1.bf16.xpose.msra.mxu0 0
          %2211 = vmatprep.subr.bf16.mxu0 0
          %2212 = vmatpush1.bf16.xpose.msra.mxu0 0
          %2213 = vmatprep.subr.bf16.mxu0 0
          %2214 = vmatpush1.bf16.xpose.msra.mxu0 0
          %2215 = vmatprep.subr.bf16.mxu0 0
          %2216 = vmatpush1.bf16.xpose.msra.mxu0 0
          %2217 = vmatprep.subr.bf16.mxu0 0
          %2218 = vmatpush1.bf16.xpose.msra.mxu0 0
          %2219 = vmatprep.subr.bf16.mxu0 0
          %2220 = vmatpush1.bf16.xpose.msra.mxu0 0
          %2221 = vmatprep.mubr.bf16.mxu0 0
          %2222 = vmatmul.mubr.bf16.gmra.mrb[0].mxu0 %v2184
          %v2223 = vpop.f32.mrb[0].mxu0
          %v2224 = vadd.f32 0.0, %v2223
          %v2225 = vpop.f32.mrb[0].mxu0
          %v2226 = vpop.f32.mrb[0].mxu0
          %v2227 = vpop.f32.mrb[0].mxu0
          %2228 = vdwg.mxu0
          %2230 = vrot.lane.b32.xlu0 %v2179, 96
          %v2231 = vpop.permute.xlu0 %2230
          %v2233 = vsel %vm705, %v2179, 0
          %v2236 = vsel %vm705, %v2231, 0
          %2238 = vmatprep.subr.bf16.mxu0 0
          %2239 = vmatpush1.bf16.xpose.msra.mxu0 %v2236
          %2240 = vmatprep.subr.bf16.mxu0 0
          %2241 = vmatpush1.bf16.xpose.msra.mxu0 0
          %2242 = vmatprep.subr.bf16.mxu0 0
          %2243 = vmatpush1.bf16.xpose.msra.mxu0 0
          %2244 = vmatprep.subr.bf16.mxu0 0
          %2245 = vmatpush1.bf16.xpose.msra.mxu0 0
          %2246 = vmatprep.subr.bf16.mxu0 0
          %2247 = vmatpush1.bf16.xpose.msra.mxu0 0
          %2248 = vmatprep.subr.bf16.mxu0 0
          %2249 = vmatpush1.bf16.xpose.msra.mxu0 0
          %2250 = vmatprep.subr.bf16.mxu0 0
          %2251 = vmatpush1.bf16.xpose.msra.mxu0 0
          %2252 = vmatprep.subr.bf16.mxu0 0
          %2253 = vmatpush1.bf16.xpose.msra.mxu0 0
          %2254 = vmatprep.subr.bf16.mxu0 0
          %2255 = vmatpush1.bf16.xpose.msra.mxu0 0
          %2256 = vmatprep.subr.bf16.mxu0 0
          %2257 = vmatpush1.bf16.xpose.msra.mxu0 0
          %2258 = vmatprep.subr.bf16.mxu0 0
          %2259 = vmatpush1.bf16.xpose.msra.mxu0 0
          %2260 = vmatprep.subr.bf16.mxu0 0
          %2261 = vmatpush1.bf16.xpose.msra.mxu0 0
          %2262 = vmatprep.subr.bf16.mxu0 0
          %2263 = vmatpush1.bf16.xpose.msra.mxu0 0
          %2264 = vmatprep.subr.bf16.mxu0 0
          %2265 = vmatpush1.bf16.xpose.msra.mxu0 0
          %2266 = vmatprep.subr.bf16.mxu0 0
          %2267 = vmatpush1.bf16.xpose.msra.mxu0 0
          %2268 = vmatprep.subr.bf16.mxu0 0
          %2269 = vmatpush1.bf16.xpose.msra.mxu0 0
          %2270 = vmatprep.mubr.bf16.mxu0 0
          %2271 = vmatmul.mubr.bf16.gmra.mrb[0].mxu0 %v2233
          %v2272 = vpop.f32.mrb[0].mxu0
          %v2273 = vadd.f32 0.0, %v2272
          %v2274 = vpop.f32.mrb[0].mxu0
          %v2275 = vpop.f32.mrb[0].mxu0
          %v2276 = vpop.f32.mrb[0].mxu0
          %2277 = vdwg.mxu0
          %v2278 = vsel %vm850, %v2224, -inf
          %2279 = vmax.xlane.f32.xlu0 %v2278
          %v2280 = vpop.xlane.xlu0 %2279
          %v2281 = vsel %vm850, %v2273, -inf
          %2282 = vmax.xlane.f32.xlu0 %v2281
          %v2283 = vpop.xlane.xlu0 %2282
          %v2284 = vsub.f32 %v2224, %v2280
          %v2285 = vsub.f32 %v2273, %v2283
          %v2286 = vmul.f32 %v2284, 1.442695
          %v2287 = vpow.pop %v2286
          %v2288 = vmul.f32 %v2285, 1.442695
          %v2289 = vpow.pop %v2288
          %v2290 = vsel %vm850, %v2287, 0.0
          %2291 = vadd.xlane.f32.xlu0 %v2290
          %v2292 = vpop.xlane.xlu0 %2291
          %v2293 = vsel %vm850, %v2289, 0.0
          %2294 = vadd.xlane.f32.xlu0 %v2293
          %v2295 = vpop.xlane.xlu0 %2294
          %v2296 = vrcp.pop %v2292
          %v2297 = vrcp.pop %v2295
          %v2298 = vmul.f32 %v2287, %v2296
          %v2299 = vmul.f32 %v2289, %v2297
          %v2300 = vpack.c.bf16 %v2298, %v2298
          %v2301 = vpack.c.bf16 %v2299, %v2299
          %2302 = vrot.lane.b32.xlu0 %v2178, 64
          %v2303 = vpop.permute.xlu0 %2302
          %v2305 = vsel %vm850, %v2300, 0
          %v2308 = vsel %vm880, %v2303, 0
          %2310 = vmatprep.subr.bf16.mxu0 0
          %2311 = vmatpush1.bf16.msra.mxu0 %v2308
          %2312 = vmatprep.subr.bf16.mxu0 0
          %2313 = vmatpush1.bf16.msra.mxu0 0
          %2314 = vmatprep.subr.bf16.mxu0 0
          %2315 = vmatpush1.bf16.msra.mxu0 0
          %2316 = vmatprep.subr.bf16.mxu0 0
          %2317 = vmatpush1.bf16.msra.mxu0 0
          %2318 = vmatprep.subr.bf16.mxu0 0
          %2319 = vmatpush1.bf16.msra.mxu0 0
          %2320 = vmatprep.subr.bf16.mxu0 0
          %2321 = vmatpush1.bf16.msra.mxu0 0
          %2322 = vmatprep.subr.bf16.mxu0 0
          %2323 = vmatpush1.bf16.msra.mxu0 0
          %2324 = vmatprep.subr.bf16.mxu0 0
          %2325 = vmatpush1.bf16.msra.mxu0 0
          %2326 = vmatprep.subr.bf16.mxu0 0
          %2327 = vmatpush1.bf16.msra.mxu0 0
          %2328 = vmatprep.subr.bf16.mxu0 0
          %2329 = vmatpush1.bf16.msra.mxu0 0
          %2330 = vmatprep.subr.bf16.mxu0 0
          %2331 = vmatpush1.bf16.msra.mxu0 0
          %2332 = vmatprep.subr.bf16.mxu0 0
          %2333 = vmatpush1.bf16.msra.mxu0 0
          %2334 = vmatprep.subr.bf16.mxu0 0
          %2335 = vmatpush1.bf16.msra.mxu0 0
          %2336 = vmatprep.subr.bf16.mxu0 0
          %2337 = vmatpush1.bf16.msra.mxu0 0
          %2338 = vmatprep.subr.bf16.mxu0 0
          %2339 = vmatpush1.bf16.msra.mxu0 0
          %2340 = vmatprep.subr.bf16.mxu0 0
          %2341 = vmatpush1.bf16.msra.mxu0 0
          %2342 = vmatprep.mubr.bf16.mxu0 0
          %2343 = vmatmul.mubr.bf16.gmra.mrb[0].mxu0 %v2305
          %v2344 = vpop.f32.mrb[0].mxu0
          %v2345 = vadd.f32 0.0, %v2344
          %v2346 = vpop.f32.mrb[0].mxu0
          %v2347 = vpop.f32.mrb[0].mxu0
          %v2348 = vpop.f32.mrb[0].mxu0
          %2349 = vdwg.mxu0
          %2350 = vrot.lane.b32.xlu0 %v2179, 64
          %v2351 = vpop.permute.xlu0 %2350
          %v2353 = vsel %vm850, %v2301, 0
          %v2356 = vsel %vm880, %v2351, 0
          %2358 = vmatprep.subr.bf16.mxu0 0
          %2359 = vmatpush1.bf16.msra.mxu0 %v2356
          %2360 = vmatprep.subr.bf16.mxu0 0
          %2361 = vmatpush1.bf16.msra.mxu0 0
          %2362 = vmatprep.subr.bf16.mxu0 0
          %2363 = vmatpush1.bf16.msra.mxu0 0
          %2364 = vmatprep.subr.bf16.mxu0 0
          %2365 = vmatpush1.bf16.msra.mxu0 0
          %2366 = vmatprep.subr.bf16.mxu0 0
          %2367 = vmatpush1.bf16.msra.mxu0 0
          %2368 = vmatprep.subr.bf16.mxu0 0
          %2369 = vmatpush1.bf16.msra.mxu0 0
          %2370 = vmatprep.subr.bf16.mxu0 0
          %2371 = vmatpush1.bf16.msra.mxu0 0
          %2372 = vmatprep.subr.bf16.mxu0 0
          %2373 = vmatpush1.bf16.msra.mxu0 0
          %2374 = vmatprep.subr.bf16.mxu0 0
          %2375 = vmatpush1.bf16.msra.mxu0 0
          %2376 = vmatprep.subr.bf16.mxu0 0
          %2377 = vmatpush1.bf16.msra.mxu0 0
          %2378 = vmatprep.subr.bf16.mxu0 0
          %2379 = vmatpush1.bf16.msra.mxu0 0
          %2380 = vmatprep.subr.bf16.mxu0 0
          %2381 = vmatpush1.bf16.msra.mxu0 0
          %2382 = vmatprep.subr.bf16.mxu0 0
          %2383 = vmatpush1.bf16.msra.mxu0 0
          %2384 = vmatprep.subr.bf16.mxu0 0
          %2385 = vmatpush1.bf16.msra.mxu0 0
          %2386 = vmatprep.subr.bf16.mxu0 0
          %2387 = vmatpush1.bf16.msra.mxu0 0
          %2388 = vmatprep.subr.bf16.mxu0 0
          %2389 = vmatpush1.bf16.msra.mxu0 0
          %2390 = vmatprep.mubr.bf16.mxu0 0
          %2391 = vmatmul.mubr.bf16.gmra.mrb[0].mxu0 %v2353
          %v2392 = vpop.f32.mrb[0].mxu0
          %v2393 = vadd.f32 0.0, %v2392
          %v2394 = vpop.f32.mrb[0].mxu0
          %v2395 = vpop.f32.mrb[0].mxu0
          %v2396 = vpop.f32.mrb[0].mxu0
          %2397 = vdwg.mxu0
          %v2398 = vld [vmem:[#allocation9] sm:$0xf]
          %v2399 = vld [vmem:[#allocation9 + $0x4] sm:$0xf]
          %v2400 = vld [vmem:[#allocation9 + $0x8] sm:$0xf]
          %v2401 = vld [vmem:[#allocation9 + $0xc] sm:$0xf]
          %v2402 = vpack.c.bf16 %v2393, %v2345
          %v2407 = vunpack.c.l.b16 %v2398
          %v2408 = vunpack.c.l.b16 %v2399
          %v2409 = vunpack.c.l.b16 %v2400
          %v2410 = vunpack.c.l.b16 %v2401
          %v2411 = vpack.c.b16 %v2408, %v2407
          %v2412 = vpack.c.b16 %v2410, %v2409
          %v2416 = vsel %vm705, %v2402, 0
          %2418 = vmatprep.subr.bf16.mxu0 0
          %2419 = vmatpush1.bf16.msra.mxu0 %v2411
          %2420 = vmatprep.subr.bf16.mxu0 0
          %2421 = vmatpush1.bf16.msra.mxu0 %v2412
          %2422 = vmatprep.subr.bf16.mxu0 0
          %2423 = vmatpush1.bf16.msra.mxu0 0
          %2424 = vmatprep.subr.bf16.mxu0 0
          %2425 = vmatpush1.bf16.msra.mxu0 0
          %2426 = vmatprep.subr.bf16.mxu0 0
          %2427 = vmatpush1.bf16.msra.mxu0 0
          %2428 = vmatprep.subr.bf16.mxu0 0
          %2429 = vmatpush1.bf16.msra.mxu0 0
          %2430 = vmatprep.subr.bf16.mxu0 0
          %2431 = vmatpush1.bf16.msra.mxu0 0
          %2432 = vmatprep.subr.bf16.mxu0 0
          %2433 = vmatpush1.bf16.msra.mxu0 0
          %2434 = vmatprep.subr.bf16.mxu0 0
          %2435 = vmatpush1.bf16.msra.mxu0 0
          %2436 = vmatprep.subr.bf16.mxu0 0
          %2437 = vmatpush1.bf16.msra.mxu0 0
          %2438 = vmatprep.subr.bf16.mxu0 0
          %2439 = vmatpush1.bf16.msra.mxu0 0
          %2440 = vmatprep.subr.bf16.mxu0 0
          %2441 = vmatpush1.bf16.msra.mxu0 0
          %2442 = vmatprep.subr.bf16.mxu0 0
          %2443 = vmatpush1.bf16.msra.mxu0 0
          %2444 = vmatprep.subr.bf16.mxu0 0
          %2445 = vmatpush1.bf16.msra.mxu0 0
          %2446 = vmatprep.subr.bf16.mxu0 0
          %2447 = vmatpush1.bf16.msra.mxu0 0
          %2448 = vmatprep.subr.bf16.mxu0 0
          %2449 = vmatpush1.bf16.msra.mxu0 0
          %2450 = vmatprep.mubr.bf16.mxu0 0
          %2451 = vmatmul.mubr.bf16.gmra.mrb[0].mxu0 %v2416
          %v2452 = vpop.f32.mrb[0].mxu0
          %v2453 = vadd.f32 0.0, %v2452
          %v2454 = vpop.f32.mrb[0].mxu0
          %v2455 = vpop.f32.mrb[0].mxu0
          %v2456 = vadd.f32 0.0, %v2455
          %v2457 = vpop.f32.mrb[0].mxu0
          %2458 = vdwg.mxu0
          %v2459 = vadd.f32 %v1764, %v2453
          %v2460 = vadd.f32 %v1765, %v2456
          %v2461 = vsel %vm705, %v2459, 0.0
          %2462 = vadd.xlane.f32.xlu0 %v2461
          %v2463 = vpop.xlane.xlu0 %2462
          %v2464 = vsel %vm705, %v2460, 0.0
          %2465 = vadd.xlane.f32.xlu0 %v2464
          %v2466 = vpop.xlane.xlu0 %2465
          %v2467 = vmul.f32 %v2459, %v2459
          %v2468 = vmul.f32 %v2460, %v2460
          %v2469 = vsel %vm705, %v2467, 0.0
          %2470 = vadd.xlane.f32.xlu0 %v2469
          %v2471 = vpop.xlane.xlu0 %2470
          %v2472 = vsel %vm705, %v2468, 0.0
          %2473 = vadd.xlane.f32.xlu0 %v2472
          %v2474 = vpop.xlane.xlu0 %2473
          %v2475 = vmul.f32 %v2463, 0.03125
          %v2476 = vmul.f32 %v2466, 0.03125
          %v2477 = vmul.f32 %v2471, 0.03125
          %v2478 = vmul.f32 %v2474, 0.03125
          %v2479 = vmul.f32 %v2475, %v2475
          %v2480 = vmul.f32 %v2476, %v2476
          %v2481 = vsub.f32 %v2477, %v2479
          %v2482 = vsub.f32 %v2478, %v2480
          %v2483 = vmax.f32 %v2481, 0.0
          %v2484 = vmax.f32 %v2482, 0.0
          %v2485 = vsub.f32 %v2459, %v2475
          %v2486 = vsub.f32 %v2460, %v2476
          %v2487 = vadd.f32 %v2483, 1e-05
          %v2488 = vadd.f32 %v2484, 1e-05
          %v2489 = vrsqrt.pop %v2487
          %v2490 = vrsqrt.pop %v2488
          %v2491 = vmul.f32 %v2485, %v2489
          %v2492 = vmul.f32 %v2486, %v2490
          %v2493 = vld [vmem:[#allocation21] sm:$0x1]
          %v2495 = vlaneseq
          %v2496 = vshrl.u32 %v2495, 7
          %v2497 = vsub.s32 0, %v2496
          %v2498 = vrot.slane %v2493, %v2497
          %v2500 = vmul.f32 %v2491, %v2498
          %v2501 = vmul.f32 %v2492, %v2498
          %v2502 = vld [vmem:[#allocation23] sm:$0x1]
          %v2504 = vlaneseq
          %v2505 = vshrl.u32 %v2504, 7
          %v2506 = vsub.s32 0, %v2505
          %v2507 = vrot.slane %v2502, %v2506
          %v2509 = vadd.f32 %v2500, %v2507
          %v2510 = vadd.f32 %v2501, %v2507
          %v2511 = vpack.c.bf16 %v2510, %v2509
          %v2512 = vld [vmem:[#allocation11] sm:$0xf]
          %v2513 = vld [vmem:[#allocation11 + $0x4] sm:$0xf]
          %v2514 = vld [vmem:[#allocation11 + $0x8] sm:$0xf]
          %v2515 = vld [vmem:[#allocation11 + $0xc] sm:$0xf]
          %v2520 = vunpack.c.l.b16 %v2512
          %v2521 = vunpack.c.l.b16 %v2513
          %v2522 = vunpack.c.l.b16 %v2514
          %v2523 = vunpack.c.l.b16 %v2515
          %v2524 = vpack.c.b16 %v2521, %v2520
          %v2525 = vpack.c.b16 %v2523, %v2522
          %v2529 = vsel %vm705, %v2511, 0
          %2531 = vmatprep.subr.bf16.mxu0 0
          %2532 = vmatpush1.bf16.msra.mxu0 %v2524
          %2533 = vmatprep.subr.bf16.mxu0 0
          %2534 = vmatpush1.bf16.msra.mxu0 %v2525
          %2535 = vmatprep.subr.bf16.mxu0 0
          %2536 = vmatpush1.bf16.msra.mxu0 0
          %2537 = vmatprep.subr.bf16.mxu0 0
          %2538 = vmatpush1.bf16.msra.mxu0 0
          %2539 = vmatprep.subr.bf16.mxu0 0
          %2540 = vmatpush1.bf16.msra.mxu0 0
          %2541 = vmatprep.subr.bf16.mxu0 0
          %2542 = vmatpush1.bf16.msra.mxu0 0
          %2543 = vmatprep.subr.bf16.mxu0 0
          %2544 = vmatpush1.bf16.msra.mxu0 0
          %2545 = vmatprep.subr.bf16.mxu0 0
          %2546 = vmatpush1.bf16.msra.mxu0 0
          %2547 = vmatprep.subr.bf16.mxu0 0
          %2548 = vmatpush1.bf16.msra.mxu0 0
          %2549 = vmatprep.subr.bf16.mxu0 0
          %2550 = vmatpush1.bf16.msra.mxu0 0
          %2551 = vmatprep.subr.bf16.mxu0 0
          %2552 = vmatpush1.bf16.msra.mxu0 0
          %2553 = vmatprep.subr.bf16.mxu0 0
          %2554 = vmatpush1.bf16.msra.mxu0 0
          %2555 = vmatprep.subr.bf16.mxu0 0
          %2556 = vmatpush1.bf16.msra.mxu0 0
          %2557 = vmatprep.subr.bf16.mxu0 0
          %2558 = vmatpush1.bf16.msra.mxu0 0
          %2559 = vmatprep.subr.bf16.mxu0 0
          %2560 = vmatpush1.bf16.msra.mxu0 0
          %2561 = vmatprep.subr.bf16.mxu0 0
          %2562 = vmatpush1.bf16.msra.mxu0 0
          %2563 = vmatprep.mubr.bf16.mxu0 0
          %2564 = vmatmul.mubr.bf16.gmra.mrb[0].mxu0 %v2529
          %v2565 = vpop.f32.mrb[0].mxu0
          %v2566 = vadd.f32 0.0, %v2565
          %v2567 = vpop.f32.mrb[0].mxu0
          %v2568 = vpop.f32.mrb[0].mxu0
          %v2569 = vadd.f32 0.0, %v2568
          %v2570 = vpop.f32.mrb[0].mxu0
          %2571 = vdwg.mxu0
          %v2572 = vpack.c.bf16 %v2566, %v2566
          %v2573 = vpack.c.bf16 %v2569, %v2569
          %v2574 = vld [vmem:[#allocation12] sm:$0xf]
          %v2575 = vld [vmem:[#allocation12 + $0x4] sm:$0xf]
          %v2576 = vld [vmem:[#allocation12 + $0x8] sm:$0xf]
          %v2577 = vld [vmem:[#allocation12 + $0xc] sm:$0xf]
          %v2582 = vunpack.c.l.b16 %v2113
          %v2583 = vunpack.c.l.b16 %v2114
          %v2584 = vunpack.c.l.b16 %v2115
          %v2585 = vunpack.c.l.b16 %v2116
          %v2586 = vpack.c.b16 %v2583, %v2582
          %v2587 = vpack.c.b16 %v2585, %v2584
          %v2592 = vunpack.c.l.b16 %v2574
          %v2593 = vunpack.c.l.b16 %v2575
          %v2594 = vunpack.c.l.b16 %v2576
          %v2595 = vunpack.c.l.b16 %v2577
          %v2596 = vpack.c.b16 %v2593, %v2592
          %v2597 = vpack.c.b16 %v2595, %v2594
          %v2601 = vsel %vm705, %v2586, 0
          %v2604 = vsel %vm705, %v2587, 0
          %2606 = vmatprep.subr.bf16.mxu0 0
          %2607 = vmatpush1.bf16.msra.mxu0 %v2596
          %2608 = vmatprep.subr.bf16.mxu0 0
          %2609 = vmatpush1.bf16.msra.mxu0 %v2597
          %2610 = vmatprep.subr.bf16.mxu0 0
          %2611 = vmatpush1.bf16.msra.mxu0 0
          %2612 = vmatprep.subr.bf16.mxu0 0
          %2613 = vmatpush1.bf16.msra.mxu0 0
          %2614 = vmatprep.subr.bf16.mxu0 0
          %2615 = vmatpush1.bf16.msra.mxu0 0
          %2616 = vmatprep.subr.bf16.mxu0 0
          %2617 = vmatpush1.bf16.msra.mxu0 0
          %2618 = vmatprep.subr.bf16.mxu0 0
          %2619 = vmatpush1.bf16.msra.mxu0 0
          %2620 = vmatprep.subr.bf16.mxu0 0
          %2621 = vmatpush1.bf16.msra.mxu0 0
          %2622 = vmatprep.subr.bf16.mxu0 0
          %2623 = vmatpush1.bf16.msra.mxu0 0
          %2624 = vmatprep.subr.bf16.mxu0 0
          %2625 = vmatpush1.bf16.msra.mxu0 0
          %2626 = vmatprep.subr.bf16.mxu0 0
          %2627 = vmatpush1.bf16.msra.mxu0 0
          %2628 = vmatprep.subr.bf16.mxu0 0
          %2629 = vmatpush1.bf16.msra.mxu0 0
          %2630 = vmatprep.subr.bf16.mxu0 0
          %2631 = vmatpush1.bf16.msra.mxu0 0
          %2632 = vmatprep.subr.bf16.mxu0 0
          %2633 = vmatpush1.bf16.msra.mxu0 0
          %2634 = vmatprep.subr.bf16.mxu0 0
          %2635 = vmatpush1.bf16.msra.mxu0 0
          %2636 = vmatprep.subr.bf16.mxu0 0
          %2637 = vmatpush1.bf16.msra.mxu0 0
          %2638 = vmatprep.mubr.bf16.mxu0 0
          %2639 = vmatmul.mubr.bf16.gmra.mrb[0].mxu0 %v2601
          %v2640 = vpop.f32.mrb[0].mxu0
          %v2641 = vadd.f32 0.0, %v2640
          %v2642 = vpop.f32.mrb[0].mxu0
          %v2643 = vpop.f32.mrb[0].mxu0
          %v2644 = vadd.f32 0.0, %v2643
          %v2645 = vpop.f32.mrb[0].mxu0
          %2646 = vmatprep.mubr.bf16.mxu0 0
          %2647 = vmatmul.mubr.bf16.gmra.mrb[0].mxu0 %v2604
          %v2648 = vpop.f32.mrb[0].mxu0
          %v2649 = vadd.f32 0.0, %v2648
          %v2650 = vpop.f32.mrb[0].mxu0
          %v2651 = vpop.f32.mrb[0].mxu0
          %v2652 = vadd.f32 0.0, %v2651
          %v2653 = vpop.f32.mrb[0].mxu0
          %2654 = vdwg.mxu0
          %v2655 = vpack.c.bf16 %v2644, %v2641
          %v2656 = vpack.c.bf16 %v2652, %v2649
          %v2658 = vsel %vm705, %v2572, 0
          %v2661 = vsel %vm705, %v2655, 0
          %2663 = vmatprep.subr.bf16.mxu0 0
          %2664 = vmatpush1.bf16.xpose.msra.mxu0 %v2661
          %2665 = vmatprep.subr.bf16.mxu0 0
          %2666 = vmatpush1.bf16.xpose.msra.mxu0 0
          %2667 = vmatprep.subr.bf16.mxu0 0
          %2668 = vmatpush1.bf16.xpose.msra.mxu0 0
          %2669 = vmatprep.subr.bf16.mxu0 0
          %2670 = vmatpush1.bf16.xpose.msra.mxu0 0
          %2671 = vmatprep.subr.bf16.mxu0 0
          %2672 = vmatpush1.bf16.xpose.msra.mxu0 0
          %2673 = vmatprep.subr.bf16.mxu0 0
          %2674 = vmatpush1.bf16.xpose.msra.mxu0 0
          %2675 = vmatprep.subr.bf16.mxu0 0
          %2676 = vmatpush1.bf16.xpose.msra.mxu0 0
          %2677 = vmatprep.subr.bf16.mxu0 0
          %2678 = vmatpush1.bf16.xpose.msra.mxu0 0
          %2679 = vmatprep.subr.bf16.mxu0 0
          %2680 = vmatpush1.bf16.xpose.msra.mxu0 0
          %2681 = vmatprep.subr.bf16.mxu0 0
          %2682 = vmatpush1.bf16.xpose.msra.mxu0 0
          %2683 = vmatprep.subr.bf16.mxu0 0
          %2684 = vmatpush1.bf16.xpose.msra.mxu0 0
          %2685 = vmatprep.subr.bf16.mxu0 0
          %2686 = vmatpush1.bf16.xpose.msra.mxu0 0
          %2687 = vmatprep.subr.bf16.mxu0 0
          %2688 = vmatpush1.bf16.xpose.msra.mxu0 0
          %2689 = vmatprep.subr.bf16.mxu0 0
          %2690 = vmatpush1.bf16.xpose.msra.mxu0 0
          %2691 = vmatprep.subr.bf16.mxu0 0
          %2692 = vmatpush1.bf16.xpose.msra.mxu0 0
          %2693 = vmatprep.subr.bf16.mxu0 0
          %2694 = vmatpush1.bf16.xpose.msra.mxu0 0
          %2695 = vmatprep.mubr.bf16.mxu0 0
          %2696 = vmatmul.mubr.bf16.gmra.mrb[0].mxu0 %v2658
          %v2697 = vpop.f32.mrb[0].mxu0
          %v2698 = vadd.f32 0.0, %v2697
          %v2699 = vpop.f32.mrb[0].mxu0
          %v2700 = vpop.f32.mrb[0].mxu0
          %v2701 = vpop.f32.mrb[0].mxu0
          %2702 = vdwg.mxu0
          %v2704 = vsel %vm705, %v2573, 0
          %v2707 = vsel %vm705, %v2656, 0
          %2709 = vmatprep.subr.bf16.mxu0 0
          %2710 = vmatpush1.bf16.xpose.msra.mxu0 %v2707
          %2711 = vmatprep.subr.bf16.mxu0 0
          %2712 = vmatpush1.bf16.xpose.msra.mxu0 0
          %2713 = vmatprep.subr.bf16.mxu0 0
          %2714 = vmatpush1.bf16.xpose.msra.mxu0 0
          %2715 = vmatprep.subr.bf16.mxu0 0
          %2716 = vmatpush1.bf16.xpose.msra.mxu0 0
          %2717 = vmatprep.subr.bf16.mxu0 0
          %2718 = vmatpush1.bf16.xpose.msra.mxu0 0
          %2719 = vmatprep.subr.bf16.mxu0 0
          %2720 = vmatpush1.bf16.xpose.msra.mxu0 0
          %2721 = vmatprep.subr.bf16.mxu0 0
          %2722 = vmatpush1.bf16.xpose.msra.mxu0 0
          %2723 = vmatprep.subr.bf16.mxu0 0
          %2724 = vmatpush1.bf16.xpose.msra.mxu0 0
          %2725 = vmatprep.subr.bf16.mxu0 0
          %2726 = vmatpush1.bf16.xpose.msra.mxu0 0
          %2727 = vmatprep.subr.bf16.mxu0 0
          %2728 = vmatpush1.bf16.xpose.msra.mxu0 0
          %2729 = vmatprep.subr.bf16.mxu0 0
          %2730 = vmatpush1.bf16.xpose.msra.mxu0 0
          %2731 = vmatprep.subr.bf16.mxu0 0
          %2732 = vmatpush1.bf16.xpose.msra.mxu0 0
          %2733 = vmatprep.subr.bf16.mxu0 0
          %2734 = vmatpush1.bf16.xpose.msra.mxu0 0
          %2735 = vmatprep.subr.bf16.mxu0 0
          %2736 = vmatpush1.bf16.xpose.msra.mxu0 0
          %2737 = vmatprep.subr.bf16.mxu0 0
          %2738 = vmatpush1.bf16.xpose.msra.mxu0 0
          %2739 = vmatprep.subr.bf16.mxu0 0
          %2740 = vmatpush1.bf16.xpose.msra.mxu0 0
          %2741 = vmatprep.mubr.bf16.mxu0 0
          %2742 = vmatmul.mubr.bf16.gmra.mrb[0].mxu0 %v2704
          %v2743 = vpop.f32.mrb[0].mxu0
          %v2744 = vadd.f32 0.0, %v2743
          %v2745 = vpop.f32.mrb[0].mxu0
          %v2746 = vpop.f32.mrb[0].mxu0
          %v2747 = vpop.f32.mrb[0].mxu0
          %2748 = vdwg.mxu0
          %v2749 = vsel %vm1323, %v2698, -inf
          %2750 = vmax.xlane.f32.xlu0 %v2749
          %v2751 = vpop.xlane.xlu0 %2750
          %v2752 = vsel %vm1323, %v2744, -inf
          %2753 = vmax.xlane.f32.xlu0 %v2752
          %v2754 = vpop.xlane.xlu0 %2753
          %v2755 = vsub.f32 %v2698, %v2751
          %v2756 = vsub.f32 %v2744, %v2754
          %v2757 = vmul.f32 %v2755, 1.442695
          %v2758 = vpow.pop %v2757
          %v2759 = vmul.f32 %v2756, 1.442695
          %v2760 = vpow.pop %v2759
          %v2761 = vsel %vm1323, %v2758, 0.0
          %2762 = vadd.xlane.f32.xlu0 %v2761
          %v2763 = vpop.xlane.xlu0 %2762
          %v2764 = vsel %vm1323, %v2760, 0.0
          %2765 = vadd.xlane.f32.xlu0 %v2764
          %v2766 = vpop.xlane.xlu0 %2765
          %v2767 = vrcp.pop %v2763
          %v2768 = vrcp.pop %v2766
          %v2769 = vmul.f32 %v2758, %v2767
          %v2770 = vmul.f32 %v2760, %v2768
          %v2771 = vpack.c.bf16 %v2769, %v2769
          %v2772 = vpack.c.bf16 %v2770, %v2770
          %2774 = vrot.lane.b32.xlu0 %v2655, 96
          %v2775 = vpop.permute.xlu0 %2774
          %v2778 = vsel %vm1323, %v2771, 0
          %2780 = vmatprep.subr.bf16.mxu0 0
          %2781 = vmatpush1.bf16.msra.mxu0 %v2775
          %2782 = vmatprep.subr.bf16.mxu0 0
          %2783 = vmatpush1.bf16.msra.mxu0 0
          %2784 = vmatprep.subr.bf16.mxu0 0
          %2785 = vmatpush1.bf16.msra.mxu0 0
          %2786 = vmatprep.subr.bf16.mxu0 0
          %2787 = vmatpush1.bf16.msra.mxu0 0
          %2788 = vmatprep.subr.bf16.mxu0 0
          %2789 = vmatpush1.bf16.msra.mxu0 0
          %2790 = vmatprep.subr.bf16.mxu0 0
          %2791 = vmatpush1.bf16.msra.mxu0 0
          %2792 = vmatprep.subr.bf16.mxu0 0
          %2793 = vmatpush1.bf16.msra.mxu0 0
          %2794 = vmatprep.subr.bf16.mxu0 0
          %2795 = vmatpush1.bf16.msra.mxu0 0
          %2796 = vmatprep.subr.bf16.mxu0 0
          %2797 = vmatpush1.bf16.msra.mxu0 0
          %2798 = vmatprep.subr.bf16.mxu0 0
          %2799 = vmatpush1.bf16.msra.mxu0 0
          %2800 = vmatprep.subr.bf16.mxu0 0
          %2801 = vmatpush1.bf16.msra.mxu0 0
          %2802 = vmatprep.subr.bf16.mxu0 0
          %2803 = vmatpush1.bf16.msra.mxu0 0
          %2804 = vmatprep.subr.bf16.mxu0 0
          %2805 = vmatpush1.bf16.msra.mxu0 0
          %2806 = vmatprep.subr.bf16.mxu0 0
          %2807 = vmatpush1.bf16.msra.mxu0 0
          %2808 = vmatprep.subr.bf16.mxu0 0
          %2809 = vmatpush1.bf16.msra.mxu0 0
          %2810 = vmatprep.subr.bf16.mxu0 0
          %2811 = vmatpush1.bf16.msra.mxu0 0
          %2812 = vmatprep.mubr.bf16.mxu0 0
          %2813 = vmatmul.mubr.bf16.gmra.mrb[0].mxu0 %v2778
          %v2814 = vpop.f32.mrb[0].mxu0
          %v2815 = vadd.f32 0.0, %v2814
          %v2816 = vpop.f32.mrb[0].mxu0
          %v2817 = vpop.f32.mrb[0].mxu0
          %v2818 = vpop.f32.mrb[0].mxu0
          %2819 = vdwg.mxu0
          %2821 = vrot.lane.b32.xlu0 %v2656, 96
          %v2822 = vpop.permute.xlu0 %2821
          %v2825 = vsel %vm1323, %v2772, 0
          %2827 = vmatprep.subr.bf16.mxu0 0
          %2828 = vmatpush1.bf16.msra.mxu0 %v2822
          %2829 = vmatprep.subr.bf16.mxu0 0
          %2830 = vmatpush1.bf16.msra.mxu0 0
          %2831 = vmatprep.subr.bf16.mxu0 0
          %2832 = vmatpush1.bf16.msra.mxu0 0
          %2833 = vmatprep.subr.bf16.mxu0 0
          %2834 = vmatpush1.bf16.msra.mxu0 0
          %2835 = vmatprep.subr.bf16.mxu0 0
          %2836 = vmatpush1.bf16.msra.mxu0 0
          %2837 = vmatprep.subr.bf16.mxu0 0
          %2838 = vmatpush1.bf16.msra.mxu0 0
          %2839 = vmatprep.subr.bf16.mxu0 0
          %2840 = vmatpush1.bf16.msra.mxu0 0
          %2841 = vmatprep.subr.bf16.mxu0 0
          %2842 = vmatpush1.bf16.msra.mxu0 0
          %2843 = vmatprep.subr.bf16.mxu0 0
          %2844 = vmatpush1.bf16.msra.mxu0 0
          %2845 = vmatprep.subr.bf16.mxu0 0
          %2846 = vmatpush1.bf16.msra.mxu0 0
          %2847 = vmatprep.subr.bf16.mxu0 0
          %2848 = vmatpush1.bf16.msra.mxu0 0
          %2849 = vmatprep.subr.bf16.mxu0 0
          %2850 = vmatpush1.bf16.msra.mxu0 0
          %2851 = vmatprep.subr.bf16.mxu0 0
          %2852 = vmatpush1.bf16.msra.mxu0 0
          %2853 = vmatprep.subr.bf16.mxu0 0
          %2854 = vmatpush1.bf16.msra.mxu0 0
          %2855 = vmatprep.subr.bf16.mxu0 0
          %2856 = vmatpush1.bf16.msra.mxu0 0
          %2857 = vmatprep.subr.bf16.mxu0 0
          %2858 = vmatpush1.bf16.msra.mxu0 0
          %2859 = vmatprep.mubr.bf16.mxu0 0
          %2860 = vmatmul.mubr.bf16.gmra.mrb[0].mxu0 %v2825
          %v2861 = vpop.f32.mrb[0].mxu0
          %v2862 = vadd.f32 0.0, %v2861
          %v2863 = vpop.f32.mrb[0].mxu0
          %v2864 = vpop.f32.mrb[0].mxu0
          %v2865 = vpop.f32.mrb[0].mxu0
          %2866 = vdwg.mxu0
          %v2867 = vld [vmem:[#allocation14] sm:$0xf]
          %v2868 = vld [vmem:[#allocation14 + $0x4] sm:$0xf]
          %v2869 = vld [vmem:[#allocation14 + $0x8] sm:$0xf]
          %v2870 = vld [vmem:[#allocation14 + $0xc] sm:$0xf]
          %v2871 = vpack.c.bf16 %v2862, %v2815
          %v2876 = vunpack.c.l.b16 %v2867
          %v2877 = vunpack.c.l.b16 %v2868
          %v2878 = vunpack.c.l.b16 %v2869
          %v2879 = vunpack.c.l.b16 %v2870
          %v2880 = vpack.c.b16 %v2877, %v2876
          %v2881 = vpack.c.b16 %v2879, %v2878
          %v2885 = vsel %vm705, %v2871, 0
          %2887 = vmatprep.subr.bf16.mxu0 0
          %2888 = vmatpush1.bf16.msra.mxu0 %v2880
          %2889 = vmatprep.subr.bf16.mxu0 0
          %2890 = vmatpush1.bf16.msra.mxu0 %v2881
          %2891 = vmatprep.subr.bf16.mxu0 0
          %2892 = vmatpush1.bf16.msra.mxu0 0
          %2893 = vmatprep.subr.bf16.mxu0 0
          %2894 = vmatpush1.bf16.msra.mxu0 0
          %2895 = vmatprep.subr.bf16.mxu0 0
          %2896 = vmatpush1.bf16.msra.mxu0 0
          %2897 = vmatprep.subr.bf16.mxu0 0
          %2898 = vmatpush1.bf16.msra.mxu0 0
          %2899 = vmatprep.subr.bf16.mxu0 0
          %2900 = vmatpush1.bf16.msra.mxu0 0
          %2901 = vmatprep.subr.bf16.mxu0 0
          %2902 = vmatpush1.bf16.msra.mxu0 0
          %2903 = vmatprep.subr.bf16.mxu0 0
          %2904 = vmatpush1.bf16.msra.mxu0 0
          %2905 = vmatprep.subr.bf16.mxu0 0
          %2906 = vmatpush1.bf16.msra.mxu0 0
          %2907 = vmatprep.subr.bf16.mxu0 0
          %2908 = vmatpush1.bf16.msra.mxu0 0
          %2909 = vmatprep.subr.bf16.mxu0 0
          %2910 = vmatpush1.bf16.msra.mxu0 0
          %2911 = vmatprep.subr.bf16.mxu0 0
          %2912 = vmatpush1.bf16.msra.mxu0 0
          %2913 = vmatprep.subr.bf16.mxu0 0
          %2914 = vmatpush1.bf16.msra.mxu0 0
          %2915 = vmatprep.subr.bf16.mxu0 0
          %2916 = vmatpush1.bf16.msra.mxu0 0
          %2917 = vmatprep.subr.bf16.mxu0 0
          %2918 = vmatpush1.bf16.msra.mxu0 0
          %2919 = vmatprep.mubr.bf16.mxu0 0
          %2920 = vmatmul.mubr.bf16.gmra.mrb[0].mxu0 %v2885
          %v2921 = vpop.f32.mrb[0].mxu0
          %v2922 = vadd.f32 0.0, %v2921
          %v2923 = vpop.f32.mrb[0].mxu0
          %v2924 = vpop.f32.mrb[0].mxu0
          %v2925 = vadd.f32 0.0, %v2924
          %v2926 = vpop.f32.mrb[0].mxu0
          %2927 = vdwg.mxu0
          %v2928 = vadd.f32 %v2509, %v2922
          %v2929 = vadd.f32 %v2510, %v2925
          %v2930 = vsel %vm705, %v2928, 0.0
          %2931 = vadd.xlane.f32.xlu0 %v2930
          %v2932 = vpop.xlane.xlu0 %2931
          %v2933 = vsel %vm705, %v2929, 0.0
          %2934 = vadd.xlane.f32.xlu0 %v2933
          %v2935 = vpop.xlane.xlu0 %2934
          %v2936 = vmul.f32 %v2928, %v2928
          %v2937 = vmul.f32 %v2929, %v2929
          %v2938 = vsel %vm705, %v2936, 0.0
          %2939 = vadd.xlane.f32.xlu0 %v2938
          %v2940 = vpop.xlane.xlu0 %2939
          %v2941 = vsel %vm705, %v2937, 0.0
          %2942 = vadd.xlane.f32.xlu0 %v2941
          %v2943 = vpop.xlane.xlu0 %2942
          %v2944 = vmul.f32 %v2932, 0.03125
          %v2945 = vmul.f32 %v2935, 0.03125
          %v2946 = vmul.f32 %v2940, 0.03125
          %v2947 = vmul.f32 %v2943, 0.03125
          %v2948 = vmul.f32 %v2944, %v2944
          %v2949 = vmul.f32 %v2945, %v2945
          %v2950 = vsub.f32 %v2946, %v2948
          %v2951 = vsub.f32 %v2947, %v2949
          %v2952 = vmax.f32 %v2950, 0.0
          %v2953 = vmax.f32 %v2951, 0.0
          %v2954 = vsub.f32 %v2928, %v2944
          %v2955 = vsub.f32 %v2929, %v2945
          %v2956 = vadd.f32 %v2952, 1e-05
          %v2957 = vadd.f32 %v2953, 1e-05
          %v2958 = vrsqrt.pop %v2956
          %v2959 = vrsqrt.pop %v2957
          %v2960 = vmul.f32 %v2954, %v2958
          %v2961 = vmul.f32 %v2955, %v2959
          %v2962 = vld [vmem:[%s1537] sm:$0x1]
          %v2964 = vlaneseq
          %v2965 = vshrl.u32 %v2964, 7
          %v2966 = vsub.s32 0, %v2965
          %v2967 = vrot.slane %v2962, %v2966
          %v2969 = vmul.f32 %v2960, %v2967
          %v2970 = vmul.f32 %v2961, %v2967
          %v2971 = vld [vmem:[%s1547] sm:$0x1]
          %v2973 = vlaneseq
          %v2974 = vshrl.u32 %v2973, 7
          %v2975 = vsub.s32 0, %v2974
          %v2976 = vrot.slane %v2971, %v2975
          %v2978 = vadd.f32 %v2969, %v2976
          %v2979 = vadd.f32 %v2970, %v2976
          %v2980 = vld [vmem:[#allocation15] sm:$0xf]
          %v2981 = vld [vmem:[#allocation15 + $0x4] sm:$0xf]
          %v2982 = vld [vmem:[#allocation15 + $0x8] sm:$0xf]
          %v2983 = vld [vmem:[#allocation15 + $0xc] sm:$0xf]
          %v2984 = vpack.c.bf16 %v2979, %v2978
          %v2985 = vld [vmem:[#allocation17] sm:$0x1]
          %v2987 = vlaneseq
          %v2988 = vshrl.u32 %v2987, 7
          %v2989 = vsub.s32 0, %v2988
          %v2990 = vrot.slane %v2985, %v2989
          %v2996 = vunpack.c.l.b16 %v2980
          %v2997 = vunpack.c.l.b16 %v2981
          %v2998 = vunpack.c.l.b16 %v2982
          %v2999 = vunpack.c.l.b16 %v2983
          %v3000 = vpack.c.b16 %v2997, %v2996
          %v3001 = vpack.c.b16 %v2999, %v2998
          %v3005 = vsel %vm705, %v2984, 0
          %3007 = vmatprep.subr.bf16.mxu0 0
          %3008 = vmatpush1.bf16.msra.mxu0 %v3000
          %3009 = vmatprep.subr.bf16.mxu0 0
          %3010 = vmatpush1.bf16.msra.mxu0 %v3001
          %3011 = vmatprep.subr.bf16.mxu0 0
          %3012 = vmatpush1.bf16.msra.mxu0 0
          %3013 = vmatprep.subr.bf16.mxu0 0
          %3014 = vmatpush1.bf16.msra.mxu0 0
          %3015 = vmatprep.subr.bf16.mxu0 0
          %3016 = vmatpush1.bf16.msra.mxu0 0
          %3017 = vmatprep.subr.bf16.mxu0 0
          %3018 = vmatpush1.bf16.msra.mxu0 0
          %3019 = vmatprep.subr.bf16.mxu0 0
          %3020 = vmatpush1.bf16.msra.mxu0 0
          %3021 = vmatprep.subr.bf16.mxu0 0
          %3022 = vmatpush1.bf16.msra.mxu0 0
          %3023 = vmatprep.subr.bf16.mxu0 0
          %3024 = vmatpush1.bf16.msra.mxu0 0
          %3025 = vmatprep.subr.bf16.mxu0 0
          %3026 = vmatpush1.bf16.msra.mxu0 0
          %3027 = vmatprep.subr.bf16.mxu0 0
          %3028 = vmatpush1.bf16.msra.mxu0 0
          %3029 = vmatprep.subr.bf16.mxu0 0
          %3030 = vmatpush1.bf16.msra.mxu0 0
          %3031 = vmatprep.subr.bf16.mxu0 0
          %3032 = vmatpush1.bf16.msra.mxu0 0
          %3033 = vmatprep.subr.bf16.mxu0 0
          %3034 = vmatpush1.bf16.msra.mxu0 0
          %3035 = vmatprep.subr.bf16.mxu0 0
          %3036 = vmatpush1.bf16.msra.mxu0 0
          %3037 = vmatprep.subr.bf16.mxu0 0
          %3038 = vmatpush1.bf16.msra.mxu0 0
          %3039 = vmatprep.mubr.bf16.mxu0 0
          %3040 = vmatmul.mubr.bf16.gmra.mrb[0].mxu0 %v3005
          %v3041 = vpop.f32.mrb[0].mxu0
          %v3042 = vadd.f32 %v2990, %v3041
          %v3043 = vpop.f32.mrb[0].mxu0
          %v3044 = vpop.f32.mrb[0].mxu0
          %v3045 = vadd.f32 %v2990, %v3044
          %v3046 = vpop.f32.mrb[0].mxu0
          %3047 = vdwg.mxu0
          %v3048 = vmax.f32 %v3042, 0.0
          %v3049 = vmax.f32 %v3045, 0.0
          %v3050 = vld [vmem:[#allocation18] sm:$0xf]
          %v3051 = vld [vmem:[#allocation18 + $0x4] sm:$0xf]
          %v3052 = vld [vmem:[#allocation18 + $0x8] sm:$0xf]
          %v3053 = vld [vmem:[#allocation18 + $0xc] sm:$0xf]
          %v3054 = vld [vmem:[#allocation18 + $0x10] sm:$0xf]
          %v3055 = vld [vmem:[#allocation18 + $0x14] sm:$0xf]
          %v3056 = vld [vmem:[#allocation18 + $0x18] sm:$0xf]
          %v3057 = vld [vmem:[#allocation18 + $0x1c] sm:$0xf]
          %v3058 = vpack.c.bf16 %v3049, %v3048
          %v3059 = vld [vmem:[#allocation20] sm:$0x1]
          %v3061 = vlaneseq
          %v3062 = vshrl.u32 %v3061, 7
          %v3063 = vsub.s32 0, %v3062
          %v3064 = vrot.slane %v3059, %v3063
          %v3074 = vunpack.c.l.b16 %v3050
          %v3075 = vunpack.c.l.b16 %v3051
          %v3076 = vunpack.c.l.b16 %v3052
          %v3077 = vunpack.c.l.b16 %v3053
          %v3078 = vunpack.c.l.b16 %v3054
          %v3079 = vunpack.c.l.b16 %v3055
          %v3080 = vunpack.c.l.b16 %v3056
          %v3081 = vunpack.c.l.b16 %v3057
          %v3082 = vpack.c.b16 %v3075, %v3074
          %v3083 = vpack.c.b16 %v3077, %v3076
          %v3084 = vpack.c.b16 %v3079, %v3078
          %v3085 = vpack.c.b16 %v3081, %v3080
          %v3091 = vsel %vm1667, %v3058, 0
          %3093 = vmatprep.subr.bf16.mxu0 0
          %3094 = vmatpush1.bf16.msra.mxu0 %v3082
          %3095 = vmatprep.subr.bf16.mxu0 0
          %3096 = vmatpush1.bf16.msra.mxu0 %v3083
          %3097 = vmatprep.subr.bf16.mxu0 0
          %3098 = vmatpush1.bf16.msra.mxu0 %v3084
          %3099 = vmatprep.subr.bf16.mxu0 0
          %3100 = vmatpush1.bf16.msra.mxu0 %v3085
          %3101 = vmatprep.subr.bf16.mxu0 0
          %3102 = vmatpush1.bf16.msra.mxu0 0
          %3103 = vmatprep.subr.bf16.mxu0 0
          %3104 = vmatpush1.bf16.msra.mxu0 0
          %3105 = vmatprep.subr.bf16.mxu0 0
          %3106 = vmatpush1.bf16.msra.mxu0 0
          %3107 = vmatprep.subr.bf16.mxu0 0
          %3108 = vmatpush1.bf16.msra.mxu0 0
          %3109 = vmatprep.subr.bf16.mxu0 0
          %3110 = vmatpush1.bf16.msra.mxu0 0
          %3111 = vmatprep.subr.bf16.mxu0 0
          %3112 = vmatpush1.bf16.msra.mxu0 0
          %3113 = vmatprep.subr.bf16.mxu0 0
          %3114 = vmatpush1.bf16.msra.mxu0 0
          %3115 = vmatprep.subr.bf16.mxu0 0
          %3116 = vmatpush1.bf16.msra.mxu0 0
          %3117 = vmatprep.subr.bf16.mxu0 0
          %3118 = vmatpush1.bf16.msra.mxu0 0
          %3119 = vmatprep.subr.bf16.mxu0 0
          %3120 = vmatpush1.bf16.msra.mxu0 0
          %3121 = vmatprep.subr.bf16.mxu0 0
          %3122 = vmatpush1.bf16.msra.mxu0 0
          %3123 = vmatprep.subr.bf16.mxu0 0
          %3124 = vmatpush1.bf16.msra.mxu0 0
          %3125 = vmatprep.mubr.bf16.mxu0 0
          %3126 = vmatmul.mubr.bf16.gmra.mrb[0].mxu0 %v3091
          %v3127 = vpop.f32.mrb[0].mxu0
          %v3128 = vadd.f32 %v3064, %v3127
          %v3129 = vpop.f32.mrb[0].mxu0
          %v3130 = vpop.f32.mrb[0].mxu0
          %v3131 = vadd.f32 %v3064, %v3130
          %v3132 = vpop.f32.mrb[0].mxu0
          %3133 = vdwg.mxu0
          %v3134 = vadd.f32 %v2978, %v3128
          %v3135 = vadd.f32 %v2979, %v3131
          %v3136 = vsel %vm705, %v3134, 0.0
          %3137 = vadd.xlane.f32.xlu0 %v3136
          %v3138 = vpop.xlane.xlu0 %3137
          %v3139 = vsel %vm705, %v3135, 0.0
          %3140 = vadd.xlane.f32.xlu0 %v3139
          %v3141 = vpop.xlane.xlu0 %3140
          %v3142 = vmul.f32 %v3134, %v3134
          %v3143 = vmul.f32 %v3135, %v3135
          %v3144 = vsel %vm705, %v3142, 0.0
          %3145 = vadd.xlane.f32.xlu0 %v3144
          %v3146 = vpop.xlane.xlu0 %3145
          %v3147 = vsel %vm705, %v3143, 0.0
          %3148 = vadd.xlane.f32.xlu0 %v3147
          %v3149 = vpop.xlane.xlu0 %3148
          %v3150 = vmul.f32 %v3138, 0.03125
          %v3151 = vmul.f32 %v3141, 0.03125
          %v3152 = vmul.f32 %v3146, 0.03125
          %v3153 = vmul.f32 %v3149, 0.03125
          %v3154 = vmul.f32 %v3150, %v3150
          %v3155 = vmul.f32 %v3151, %v3151
          %v3156 = vsub.f32 %v3152, %v3154
          %v3157 = vsub.f32 %v3153, %v3155
          %v3158 = vmax.f32 %v3156, 0.0
          %v3159 = vmax.f32 %v3157, 0.0
          %v3160 = vsub.f32 %v3134, %v3150
          %v3161 = vsub.f32 %v3135, %v3151
          %v3162 = vadd.f32 %v3158, 1e-05
          %v3163 = vadd.f32 %v3159, 1e-05
          %v3164 = vrsqrt.pop %v3162
          %v3165 = vrsqrt.pop %v3163
          %v3166 = vmul.f32 %v3160, %v3164
          %v3167 = vmul.f32 %v3161, %v3165
          %v3168 = vld [vmem:[%s1746] sm:$0x1]
          %v3170 = vlaneseq
          %v3171 = vshrl.u32 %v3170, 7
          %v3172 = vsub.s32 0, %v3171
          %v3173 = vrot.slane %v3168, %v3172
          %v3175 = vmul.f32 %v3166, %v3173
          %v3176 = vmul.f32 %v3167, %v3173
          %v3177 = vld [vmem:[%s1756] sm:$0x1]
          %v3179 = vlaneseq
          %v3180 = vshrl.u32 %v3179, 7
          %v3181 = vsub.s32 0, %v3180
          %v3182 = vrot.slane %v3177, %v3181
          %v3184 = vadd.f32 %v3175, %v3182
          %v3185 = vadd.f32 %v3176, %v3182
          %v3186 = vpack.c.bf16 %v3184, %v3184
          %v3187 = vpack.c.bf16 %v3185, %v3185
          %v3191 = vunpack.c.l.s4 1966171168
          %v3192 = vunpack.c.0.s8 %v3191
          %v3193 = vlaneseq
          %v3194 = vshrl.u32 %v3193, 7
          %v3195 = vsub.s32 %v3192, %v3194
          %v3196 = vrot.slane %v3186, %v3195
          %v3198 = vunpack.c.l.s4 1966171168
          %v3199 = vunpack.c.0.s8 %v3198
          %v3200 = vlaneseq
          %v3201 = vshrl.u32 %v3200, 7
          %v3202 = vsub.s32 %v3199, %v3201
          %v3203 = vrot.slane %v3196, %v3202
          %v3205 = vunpack.c.l.s4 1966171168
          %v3206 = vunpack.c.0.s8 %v3205
          %v3207 = vlaneseq
          %v3208 = vshrl.u32 %v3207, 7
          %v3209 = vsub.s32 %v3206, %v3208
          %v3210 = vrot.slane %v3187, %v3209
          %v3212 = vunpack.c.l.s4 1966171168
          %v3213 = vunpack.c.0.s8 %v3212
          %v3214 = vlaneseq
          %v3215 = vshrl.u32 %v3214, 7
          %v3216 = vsub.s32 %v3213, %v3215
          %v3217 = vrot.slane %v3210, %v3216
          %v3219 = vunpack.c.l.s4 1935823168
          %v3220 = vunpack.c.0.s8 %v3219
          %v3221 = vlaneseq
          %v3222 = vshrl.u32 %v3221, 7
          %v3223 = vsub.s32 %v3220, %v3222
          %v3224 = vrot.slane %v3203, %v3223
          %v3226 = vunpack.c.l.s4 1935823168
          %v3227 = vunpack.c.0.s8 %v3226
          %v3228 = vlaneseq
          %v3229 = vshrl.u32 %v3228, 7
          %v3230 = vsub.s32 %v3227, %v3229
          %v3231 = vrot.slane %v3224, %v3230
          %v3233 = vunpack.c.l.s4 1935823168
          %v3234 = vunpack.c.0.s8 %v3233
          %v3235 = vlaneseq
          %v3236 = vshrl.u32 %v3235, 7
          %v3237 = vsub.s32 %v3234, %v3236
          %v3238 = vrot.slane %v3217, %v3237
          %v3240 = vunpack.c.l.s4 1935823168
          %v3241 = vunpack.c.0.s8 %v3240
          %v3242 = vlaneseq
          %v3243 = vshrl.u32 %v3242, 7
          %v3244 = vsub.s32 %v3241, %v3243
          %v3245 = vrot.slane %v3238, %v3244
          %v3246 = vunpack.c.l.b16 %v3231
          %v3247 = vunpack.c.l.b16 %v3245
          %v3248 = vrot.slane %v3247, 7
          %v3249 = vsel %vm1829, %v3248, %v3246
          %v3250 = vpack.c.b16 %v3249, %v3249
          %v3252 = vunpack.c.l.s4 1966171168
          %v3253 = vunpack.c.0.s8 %v3252
          %v3254 = vlaneseq
          %v3255 = vshrl.u32 %v3254, 7
          %v3256 = vsub.s32 %v3253, %v3255
          %v3257 = vrot.slane %v3250, %v3256
          %v3259 = vunpack.c.l.s4 1966171168
          %v3260 = vunpack.c.0.s8 %v3259
          %v3261 = vlaneseq
          %v3262 = vshrl.u32 %v3261, 7
          %v3263 = vsub.s32 %v3260, %v3262
          %v3264 = vrot.slane %v3257, %v3263
          %s3266 = smul.u32 %s2109, 2
          %s3267 = scalar_lea.vmem %s655, %s3266 [#allocation24]
          %3268 = vst.msk [vmem:[%s3267] sm:$0x1] %vm1849, %v3264
          %v3269 = vrot.slane %v3246, 1
          %v3270 = vsel %vm1829, %v3247, %v3269
          %v3271 = vpack.c.b16 %v3270, %v3270
          %v3273 = vunpack.c.l.s4 1966171168
          %v3274 = vunpack.c.0.s8 %v3273
          %v3275 = vlaneseq
          %v3276 = vshrl.u32 %v3275, 7
          %v3277 = vsub.s32 %v3274, %v3276
          %v3278 = vrot.slane %v3271, %v3277
          %v3280 = vunpack.c.l.s4 1966171168
          %v3281 = vunpack.c.0.s8 %v3280
          %v3282 = vlaneseq
          %v3283 = vshrl.u32 %v3282, 7
          %v3284 = vsub.s32 %v3281, %v3283
          %v3285 = vrot.slane %v3278, %v3284
          %3286 = vrot.lane.b32.xlu0 %v3285, 32
          %v3287 = vpop.permute.xlu0 %3286
          %3289 = vst.msk [vmem:[%s3267] sm:$0x1] %vm1871, %v3287
          %v3290 = vcombine.high %v3196, %v3196
          %v3292 = vunpack.c.l.s4 1966171168
          %v3293 = vunpack.c.0.s8 %v3292
          %v3294 = vlaneseq
          %v3295 = vshrl.u32 %v3294, 7
          %v3296 = vsub.s32 %v3293, %v3295
          %v3297 = vrot.slane %v3290, %v3296
          %v3298 = vcombine.high %v3210, %v3210
          %v3300 = vunpack.c.l.s4 1966171168
          %v3301 = vunpack.c.0.s8 %v3300
          %v3302 = vlaneseq
          %v3303 = vshrl.u32 %v3302, 7
          %v3304 = vsub.s32 %v3301, %v3303
          %v3305 = vrot.slane %v3298, %v3304
          %v3307 = vunpack.c.l.s4 1935823168
          %v3308 = vunpack.c.0.s8 %v3307
          %v3309 = vlaneseq
          %v3310 = vshrl.u32 %v3309, 7
          %v3311 = vsub.s32 %v3308, %v3310
          %v3312 = vrot.slane %v3297, %v3311
          %v3314 = vunpack.c.l.s4 1935823168
          %v3315 = vunpack.c.0.s8 %v3314
          %v3316 = vlaneseq
          %v3317 = vshrl.u32 %v3316, 7
          %v3318 = vsub.s32 %v3315, %v3317
          %v3319 = vrot.slane %v3312, %v3318
          %v3321 = vunpack.c.l.s4 1935823168
          %v3322 = vunpack.c.0.s8 %v3321
          %v3323 = vlaneseq
          %v3324 = vshrl.u32 %v3323, 7
          %v3325 = vsub.s32 %v3322, %v3324
          %v3326 = vrot.slane %v3305, %v3325
          %v3328 = vunpack.c.l.s4 1935823168
          %v3329 = vunpack.c.0.s8 %v3328
          %v3330 = vlaneseq
          %v3331 = vshrl.u32 %v3330, 7
          %v3332 = vsub.s32 %v3329, %v3331
          %v3333 = vrot.slane %v3326, %v3332
          %v3334 = vunpack.c.l.b16 %v3319
          %v3335 = vunpack.c.l.b16 %v3333
          %v3336 = vrot.slane %v3335, 7
          %v3337 = vsel %vm1829, %v3336, %v3334
          %v3338 = vpack.c.b16 %v3337, %v3337
          %v3340 = vunpack.c.l.s4 1966171168
          %v3341 = vunpack.c.0.s8 %v3340
          %v3342 = vlaneseq
          %v3343 = vshrl.u32 %v3342, 7
          %v3344 = vsub.s32 %v3341, %v3343
          %v3345 = vrot.slane %v3338, %v3344
          %v3347 = vunpack.c.l.s4 1966171168
          %v3348 = vunpack.c.0.s8 %v3347
          %v3349 = vlaneseq
          %v3350 = vshrl.u32 %v3349, 7
          %v3351 = vsub.s32 %v3348, %v3350
          %v3352 = vrot.slane %v3345, %v3351
          %3353 = vrot.lane.b32.xlu0 %v3352, 64
          %v3354 = vpop.permute.xlu0 %3353
          %3356 = vst.msk [vmem:[%s3267] sm:$0x1] %vm1939, %v3354
          %v3357 = vrot.slane %v3334, 1
          %v3358 = vsel %vm1829, %v3335, %v3357
          %v3359 = vpack.c.b16 %v3358, %v3358
          %v3361 = vunpack.c.l.s4 1966171168
          %v3362 = vunpack.c.0.s8 %v3361
          %v3363 = vlaneseq
          %v3364 = vshrl.u32 %v3363, 7
          %v3365 = vsub.s32 %v3362, %v3364
          %v3366 = vrot.slane %v3359, %v3365
          %v3368 = vunpack.c.l.s4 1966171168
          %v3369 = vunpack.c.0.s8 %v3368
          %v3370 = vlaneseq
          %v3371 = vshrl.u32 %v3370, 7
          %v3372 = vsub.s32 %v3369, %v3371
          %v3373 = vrot.slane %v3366, %v3372
          %3374 = vrot.lane.b32.xlu0 %v3373, 96
          %v3375 = vpop.permute.xlu0 %3374
          %3377 = vst.msk [vmem:[%s3267] sm:$0x1] %vm1961, %v3375
          %v3378 = vcombine.high %v3203, %v3203
          %v3379 = vcombine.high %v3217, %v3217
          %v3381 = vunpack.c.l.s4 1935823168
          %v3382 = vunpack.c.0.s8 %v3381
          %v3383 = vlaneseq
          %v3384 = vshrl.u32 %v3383, 7
          %v3385 = vsub.s32 %v3382, %v3384
          %v3386 = vrot.slane %v3378, %v3385
          %v3388 = vunpack.c.l.s4 1935823168
          %v3389 = vunpack.c.0.s8 %v3388
          %v3390 = vlaneseq
          %v3391 = vshrl.u32 %v3390, 7
          %v3392 = vsub.s32 %v3389, %v3391
          %v3393 = vrot.slane %v3386, %v3392
          %v3395 = vunpack.c.l.s4 1935823168
          %v3396 = vunpack.c.0.s8 %v3395
          %v3397 = vlaneseq
          %v3398 = vshrl.u32 %v3397, 7
          %v3399 = vsub.s32 %v3396, %v3398
          %v3400 = vrot.slane %v3379, %v3399
          %v3402 = vunpack.c.l.s4 1935823168
          %v3403 = vunpack.c.0.s8 %v3402
          %v3404 = vlaneseq
          %v3405 = vshrl.u32 %v3404, 7
          %v3406 = vsub.s32 %v3403, %v3405
          %v3407 = vrot.slane %v3400, %v3406
          %v3408 = vunpack.c.l.b16 %v3393
          %v3409 = vunpack.c.l.b16 %v3407
          %v3410 = vrot.slane %v3409, 7
          %v3411 = vsel %vm1829, %v3410, %v3408
          %v3412 = vpack.c.b16 %v3411, %v3411
          %v3414 = vunpack.c.l.s4 1966171168
          %v3415 = vunpack.c.0.s8 %v3414
          %v3416 = vlaneseq
          %v3417 = vshrl.u32 %v3416, 7
          %v3418 = vsub.s32 %v3415, %v3417
          %v3419 = vrot.slane %v3412, %v3418
          %v3421 = vunpack.c.l.s4 1966171168
          %v3422 = vunpack.c.0.s8 %v3421
          %v3423 = vlaneseq
          %v3424 = vshrl.u32 %v3423, 7
          %v3425 = vsub.s32 %v3422, %v3424
          %v3426 = vrot.slane %v3419, %v3425
          %3428 = vst.msk [vmem:[%s3267 + $0x1] sm:$0x1] %vm1849, %v3426
          %v3429 = vrot.slane %v3408, 1
          %v3430 = vsel %vm1829, %v3409, %v3429
          %v3431 = vpack.c.b16 %v3430, %v3430
          %v3433 = vunpack.c.l.s4 1966171168
          %v3434 = vunpack.c.0.s8 %v3433
          %v3435 = vlaneseq
          %v3436 = vshrl.u32 %v3435, 7
          %v3437 = vsub.s32 %v3434, %v3436
          %v3438 = vrot.slane %v3431, %v3437
          %v3440 = vunpack.c.l.s4 1966171168
          %v3441 = vunpack.c.0.s8 %v3440
          %v3442 = vlaneseq
          %v3443 = vshrl.u32 %v3442, 7
          %v3444 = vsub.s32 %v3441, %v3443
          %v3445 = vrot.slane %v3438, %v3444
          %3446 = vrot.lane.b32.xlu0 %v3445, 32
          %v3447 = vpop.permute.xlu0 %3446
          %3449 = vst.msk [vmem:[%s3267 + $0x1] sm:$0x1] %vm1871, %v3447
          %v3450 = vcombine.high %v3297, %v3297
          %v3451 = vcombine.high %v3305, %v3305
          %v3453 = vunpack.c.l.s4 1935823168
          %v3454 = vunpack.c.0.s8 %v3453
          %v3455 = vlaneseq
          %v3456 = vshrl.u32 %v3455, 7
          %v3457 = vsub.s32 %v3454, %v3456
          %v3458 = vrot.slane %v3450, %v3457
          %v3460 = vunpack.c.l.s4 1935823168
          %v3461 = vunpack.c.0.s8 %v3460
          %v3462 = vlaneseq
          %v3463 = vshrl.u32 %v3462, 7
          %v3464 = vsub.s32 %v3461, %v3463
          %v3465 = vrot.slane %v3458, %v3464
          %v3467 = vunpack.c.l.s4 1935823168
          %v3468 = vunpack.c.0.s8 %v3467
          %v3469 = vlaneseq
          %v3470 = vshrl.u32 %v3469, 7
          %v3471 = vsub.s32 %v3468, %v3470
          %v3472 = vrot.slane %v3451, %v3471
          %v3474 = vunpack.c.l.s4 1935823168
          %v3475 = vunpack.c.0.s8 %v3474
          %v3476 = vlaneseq
          %v3477 = vshrl.u32 %v3476, 7
          %v3478 = vsub.s32 %v3475, %v3477
          %v3479 = vrot.slane %v3472, %v3478
          %v3480 = vunpack.c.l.b16 %v3465
          %v3481 = vunpack.c.l.b16 %v3479
          %v3482 = vrot.slane %v3481, 7
          %v3483 = vsel %vm1829, %v3482, %v3480
          %v3484 = vpack.c.b16 %v3483, %v3483
          %v3486 = vunpack.c.l.s4 1966171168
          %v3487 = vunpack.c.0.s8 %v3486
          %v3488 = vlaneseq
          %v3489 = vshrl.u32 %v3488, 7
          %v3490 = vsub.s32 %v3487, %v3489
          %v3491 = vrot.slane %v3484, %v3490
          %v3493 = vunpack.c.l.s4 1966171168
          %v3494 = vunpack.c.0.s8 %v3493
          %v3495 = vlaneseq
          %v3496 = vshrl.u32 %v3495, 7
          %v3497 = vsub.s32 %v3494, %v3496
          %v3498 = vrot.slane %v3491, %v3497
          %3499 = vrot.lane.b32.xlu0 %v3498, 64
          %v3500 = vpop.permute.xlu0 %3499
          %3502 = vst.msk [vmem:[%s3267 + $0x1] sm:$0x1] %vm1939, %v3500
          %v3503 = vrot.slane %v3480, 1
          %v3504 = vsel %vm1829, %v3481, %v3503
          %v3505 = vpack.c.b16 %v3504, %v3504
          %v3507 = vunpack.c.l.s4 1966171168
          %v3508 = vunpack.c.0.s8 %v3507
          %v3509 = vlaneseq
          %v3510 = vshrl.u32 %v3509, 7
          %v3511 = vsub.s32 %v3508, %v3510
          %v3512 = vrot.slane %v3505, %v3511
          %v3514 = vunpack.c.l.s4 1966171168
          %v3515 = vunpack.c.0.s8 %v3514
          %v3516 = vlaneseq
          %v3517 = vshrl.u32 %v3516, 7
          %v3518 = vsub.s32 %v3515, %v3517
          %v3519 = vrot.slane %v3512, %v3518
          %3520 = vrot.lane.b32.xlu0 %v3519, 96
          %v3521 = vpop.permute.xlu0 %3520
          %3523 = vst.msk [vmem:[%s3267 + $0x1] sm:$0x1] %vm1961, %v3521
        $region133: #{tpu_custom_call.1} parent=71 // loop_footer
          %s677 = sadd.s32 1, %s673
        $region134: #{tpu_custom_call.1} parent=71 // loop_footer_branch
          %672 = sbr.rel target = $region130
        $region135: #{tpu_custom_call.1} parent=71 // loop_exit
          _
        %vm3524 = vcmask 261120
        %3525 = vst.msk [vmem:[#allocation2] sm:$0xff] %vm3524, %v678
        %3526 = vst.msk [vmem:[#allocation2 + $0x8] sm:$0xff] %vm3524, %v679
        %s3527 = sand.u32 %s343, 1
        %s3528 = scalar_lea.sflag [#allocation5], %s3527
        %s3529 = sand.u32 %s343, 1
        %s3530 = smul.addr %s3529, 8
        %s3531 = scalar_lea.vmem [#allocation24], %s3530
        // Predicated region
        $region136: #{tpu_custom_call.1} parent=71 // pred_check
          %p3532 = pneg %p353
        $region137: #{tpu_custom_call.1} parent=71 // pred_check_branch
          %3534 = sbr.rel (%p3532) target = $region139
        $region138: #{tpu_custom_call.1} parent=71 // pred_region
          %s3535 = smul.u32 4, %s41
          %s3537 = ssub.s32 128, 128
          %3538 = vsyncadd %s3528, %s3537
          %s3539 = smul.addr %s40, 2
          %s3540 = smul.addr %s3535, 2
          %s3541 = sadd.s32 %s3539, %s3540
          %s3542 = smul.addr %s3541, 16
          %s3543 = scalar_lea.hbm %s13, %s3542
          %s3544 = sshll.u32 %s3531, 4
          %s3545 = int_to_ptr.vmem [resolvable:$true] %s3544
          %3550 = dma.vmem_to_hbm [thread:$0]  %s3545, 128, %s3543, %s3528, 32, 32, 2
        $region139: #{tpu_custom_call.1} parent=71 // pred_fallthru
          _
      $region72: #{tpu_custom_call.1} parent=5 // pred_fallthru
        _
      %p3551 = scmp.le.s32.totalorder 2, %s31
      // Predicated region
      $region140: #{tpu_custom_call.1} parent=5 // pred_check
        %p3552 = pneg %p3551
      $region141: #{tpu_custom_call.1} parent=5 // pred_check_branch
        %3554 = sbr.rel (%p3552) target = $region143
      $region142: #{tpu_custom_call.1} parent=5 // pred_region
        %s3555 = ssub.s32 %s31, 2
        // Predicated region
        $region144: #{tpu_custom_call.1} parent=142 // pred_check
          %p3556 = pneg %p359
        $region145: #{tpu_custom_call.1} parent=142 // pred_check_branch
          %3558 = sbr.rel (%p3556) target = $region147
        $region146: #{tpu_custom_call.1} parent=142 // pred_region
          %s3559 = sand.u32 %s344, 1
          %s3560 = scalar_lea.sflag [#allocation5], %s3559
          %s3561 = sand.u32 %s344, 1
          %s3562 = smul.addr %s3561, 8
          %s3563 = scalar_lea.vmem [#allocation24], %s3562
          %3564 = dma.done %s3560, 128
        $region147: #{tpu_custom_call.1} parent=142 // pred_fallthru
          _
      $region143: #{tpu_custom_call.1} parent=5 // pred_fallthru
        _
    $region6: #{tpu_custom_call.1} parent=1 // loop_footer
      %s35 = sadd.s32 1, %s31
    $region7: #{tpu_custom_call.1} parent=1 // loop_footer_branch
      %30 = sbr.rel target = $region3
    $region8: #{tpu_custom_call.1} parent=1 // loop_exit
      _
    %3565 = vsyncpa [#allocation4], 1
    %s3566 = scalar_lea.sflag [#allocation4], 1
    %3567 = vsyncpa %s3566, 1
    %3568 = vsyncpa [#allocation7], 1
    %3569 = vsyncpa [#allocation10], 1
    %3570 = vsyncpa [#allocation13], 1
    %3571 = vsyncpa [#allocation16], 1
    %3572 = vsyncpa [#allocation19], 1
    %3573 = vsyncpa [#allocation22], 1
    %3574 = vsyncpa [#allocation5], 1
    %s3575 = scalar_lea.sflag [#allocation5], 1
    %3576 = vsyncpa %s3575, 1

</llo_original>
